<compile_context>
chip_gen: v6e
topology: v6e:2x2x1
jax: 0.10.0
libtpu: 0.0.40
codegen_flags: <defaults>
</compile_context>

<pallas_src>
import jax
import jax.numpy as jnp
from jax.experimental import pallas as pl
from jax.experimental.pallas import tpu as pltpu

# ------------------------- small ELECTRA-like config -------------------------
VOCAB = 64          # (koelectra-base: ~35000)
HIDDEN = 128        # (koelectra-base: 768)
N_LAYERS = 2        # (koelectra-base: 12)
N_HEADS = 4         # (koelectra-base: 12)
HEAD_DIM = HIDDEN // N_HEADS
INTERMEDIATE = 256  # (koelectra-base: 3072)
MAX_POS = 16
FC1_OUT = 256       # nn.Linear(hidden, 256)
LN_EPS = 1e-12
LANE = 128          # lane-dense padding for the classifier output

# Packed per-layer vector rows (one (N_LAYERS, 16, HIDDEN) f32 block).
ROW_BQ, ROW_BK, ROW_BV, ROW_BO = 0, 1, 2, 3
ROW_LN1G, ROW_LN1B = 4, 5
ROW_BP, ROW_LN2G, ROW_LN2B = 6, 7, 8
VEC_ROWS = 16       # padded to a sublane multiple

VMEM_LIMIT_BYTES = 32 * 1024 * 1024   # explicit (v5e default is only 16 MiB)


def _layernorm(x, gamma, beta):
    mu = jnp.mean(x, axis=-1, keepdims=True)
    var = jnp.mean((x - mu) ** 2, axis=-1, keepdims=True)
    return (x - mu) * jax.lax.rsqrt(var + LN_EPS) * gamma + beta


def _softmax_lastdim(s):
    m = jnp.max(s, axis=-1, keepdims=True)
    e = jnp.exp(s - m)
    return e * pl.reciprocal(jnp.sum(e, axis=-1, keepdims=True), approx=True)


def _gelu_exact(x):
    # Exact (erf) GELU, matching torch.nn.GELU / HF ELECTRA "gelu".
    # lax.erf has no guaranteed Mosaic lowering, so use Abramowitz & Stegun
    # 7.1.26 (|err| < 1.5e-7, far below bf16 matmul error): exp/mul/div only.
    a1, a2, a3, a4, a5 = 0.254829592, -0.284496736, 1.421413741, -1.453152027, 1.061405429
    p = 0.3275911
    z = x * 0.7071067811865476            # x / sqrt(2)
    az = jnp.abs(z)
    t = 1.0 / (1.0 + p * az)
    poly = ((((a5 * t + a4) * t + a3) * t + a2) * t + a1) * t
    erf_abs = 1.0 - poly * jnp.exp(-az * az)
    erf = jnp.where(z >= 0.0, erf_abs, -erf_abs)
    return 0.5 * x * (1.0 + erf)


# --------------------------------- kernel ------------------------------------
def fused_forward_kernel(x0_hbm, bias_ref,
                         wqkv_ref, wo_ref, wi_ref, wp_ref, bi_ref, vecs_ref,
                         fc1w_ref, fc1b_ref, fc2w_ref, fc2b_ref,
                         o_ref, x_scr, copy_sem):
    B, _, S = bias_ref.shape
    R, H = x_scr.shape
    l = pl.program_id(0)
    n_layers = pl.num_programs(0)

    # ---- first grid step: pull the post-embedding-LN activation into VMEM ---
    # x0 lives in HBM (pl.ANY) so it never occupies an activation-sized VMEM
    # block for the remaining N_LAYERS-1 steps.
    @pl.when(l == 0)
    def _():
        cp = pltpu.make_async_copy(x0_hbm, x_scr, copy_sem)
        cp.start()
        cp.wait()

    x = x_scr[...]                              # (R, H) f32, resident
    x_bf = x.astype(jnp.bfloat16)
    bias = bias_ref[...]                        # (B, 1, S) f32, precomputed once

    vecs = vecs_ref[...]                        # (VEC_ROWS, H) f32, packed per-layer vectors
    bq = vecs[ROW_BQ:ROW_BQ + 1]
    bk = vecs[ROW_BK:ROW_BK + 1]
    bv = vecs[ROW_BV:ROW_BV + 1]
    bo = vecs[ROW_BO:ROW_BO + 1]
    ln1_g = vecs[ROW_LN1G:ROW_LN1G + 1]
    ln1_b = vecs[ROW_LN1B:ROW_LN1B + 1]
    bp = vecs[ROW_BP:ROW_BP + 1]
    ln2_g = vecs[ROW_LN2G:ROW_LN2G + 1]
    ln2_b = vecs[ROW_LN2B:ROW_LN2B + 1]

    # ---- self-attention: fused QKV matmul (N = 3H), f32 accumulation --------
    qkv = jnp.dot(x_bf, wqkv_ref[...], preferred_element_type=jnp.float32)   # (R, 3H)
    q3 = (qkv[:, 0 * H:1 * H] + bq).reshape(B, S, H).astype(jnp.bfloat16)
    k3 = (qkv[:, 1 * H:2 * H] + bk).reshape(B, S, H).astype(jnp.bfloat16)
    v3 = (qkv[:, 2 * H:3 * H] + bv).reshape(B, S, H).astype(jnp.bfloat16)

    scale = 1.0 / (HEAD_DIM ** 0.5)
    ctx_parts = []
    # TODO(synk): 4-D head-batched einsum not lowerable in Mosaic; static loop.
    for h in range(N_HEADS):
        sl = slice(h * HEAD_DIM, (h + 1) * HEAD_DIM)
        s = jnp.einsum('bqd,bkd->bqk', q3[:, :, sl], k3[:, :, sl],
                       preferred_element_type=jnp.float32) * scale + bias
        p = _softmax_lastdim(s)                 # f32 softmax
        ctx_parts.append(jnp.einsum('bqk,bkd->bqd', p.astype(jnp.bfloat16),
                                    v3[:, :, sl],
                                    preferred_element_type=jnp.float32))
    # heads are contiguous lane slices -> concat once, single K=128 projection
    ctx = jnp.concatenate(ctx_parts, axis=-1).reshape(R, H)
    attn_out = jnp.dot(ctx.astype(jnp.bfloat16), wo_ref[...],
                       preferred_element_type=jnp.float32) + bo

    x1 = _layernorm(x + attn_out, ln1_g, ln1_b)

    # ---- FFN -----------------------------------------------------------------
    h1 = jnp.dot(x1.astype(jnp.bfloat16), wi_ref[...],
                 preferred_element_type=jnp.float32) + bi_ref[...]
    h1 = _gelu_exact(h1)                        # exact GELU (torch.nn.GELU)
    h2 = jnp.dot(h1.astype(jnp.bfloat16), wp_ref[...],
                 preferred_element_type=jnp.float32) + bp

    x_new = _layernorm(x1 + h2, ln2_g, ln2_b)
    x_scr[...] = x_new                          # stays resident for next layer

    # ---- last grid step: classifier head on CLS token, lane-dense output ----
    @pl.when(l == n_layers - 1)
    def _():
        cls = x_new.reshape(B, S, H)[:, 0, :]   # last_hidden_state[:, 0, :]
        hc = jnp.dot(cls.astype(jnp.bfloat16), fc1w_ref[...],
                     preferred_element_type=jnp.float32) + fc1b_ref[...]
        hc = jnp.maximum(hc, 0.0)               # ReLU; dropout(eval) = identity
        # fc2 (256 -> 1) as a VPU reduction; store lane-dense (B, 128) padded.
        logit = jnp.sum(hc * fc2w_ref[...], axis=-1, keepdims=True) + fc2b_ref[...]
        o_ref[...] = jnp.broadcast_to(jax.nn.sigmoid(logit), (B, LANE))


# ------------------------------ parameter init --------------------------------
def init_params(key):
    ki = iter(jax.random.split(key, 32))

    def w(fan_in, fan_out):
        return (jax.random.normal(next(ki), (fan_in, fan_out), jnp.float32)
                * 0.02).astype(jnp.bfloat16)    # matmul weights stored bf16

    params = {
        'word_emb': jax.random.normal(next(ki), (VOCAB, HIDDEN), jnp.float32) * 0.02,
        'pos_emb': jax.random.normal(next(ki), (MAX_POS, HIDDEN), jnp.float32) * 0.02,
        'type_emb': jax.random.normal(next(ki), (2, HIDDEN), jnp.float32) * 0.02,
        'emb_ln_g': jnp.ones((HIDDEN,), jnp.float32),
        'emb_ln_b': jnp.zeros((HIDDEN,), jnp.float32),
    }

    wqkv, wo, wi, wp = [], [], [], []
    for _ in range(N_LAYERS):
        wqkv.append(jnp.concatenate(
            [w(HIDDEN, HIDDEN), w(HIDDEN, HIDDEN), w(HIDDEN, HIDDEN)], axis=1))
        wo.append(w(HIDDEN, HIDDEN))
        wi.append(w(HIDDEN, INTERMEDIATE))
        wp.append(w(INTERMEDIATE, HIDDEN))
    params['wqkv'] = jnp.stack(wqkv)            # (L, H, 3H) bf16
    params['wo'] = jnp.stack(wo)                # (L, H, H)  bf16
    params['wi'] = jnp.stack(wi)                # (L, H, I)  bf16
    params['wp'] = jnp.stack(wp)                # (L, I, H)  bf16
    params['bi'] = jnp.zeros((N_LAYERS, 1, INTERMEDIATE), jnp.float32)

    # All tiny per-layer (1, H) vectors packed into ONE block per layer.
    vecs = jnp.zeros((N_LAYERS, VEC_ROWS, HIDDEN), jnp.float32)
    vecs = vecs.at[:, ROW_LN1G].set(1.0)        # LayerNorm gammas = 1
    vecs = vecs.at[:, ROW_LN2G].set(1.0)
    params['vecs'] = vecs

    params['fc1_w'] = w(HIDDEN, FC1_OUT)
    params['fc1_b'] = jnp.zeros((1, FC1_OUT), jnp.float32)
    # fc2 stored as a (1, 256) row vector (VPU reduction form) + scalar bias.
    params['fc2_w'] = jax.random.normal(next(ki), (1, FC1_OUT), jnp.float32) * 0.02
    params['fc2_b'] = jnp.zeros((1, 1), jnp.float32)
    return params


# --------------------------------- forward ------------------------------------
def koelectra_mlp_classifier(params, input_ids, attention_mask):
    B, S = input_ids.shape
    H = HIDDEN

    # Embedding gather + sum + embedding LayerNorm are glue (plain JAX); the
    # result is handed to the kernel via HBM (pl.ANY) and copied to VMEM once.
    emb = (jnp.take(params['word_emb'], input_ids, axis=0)
           + params['pos_emb'][None, :S, :]
           + params['type_emb'][0][None, None, :]).astype(jnp.float32)
    mu = jnp.mean(emb, axis=-1, keepdims=True)
    var = jnp.mean((emb - mu) ** 2, axis=-1, keepdims=True)
    x0 = ((emb - mu) * jax.lax.rsqrt(var + LN_EPS)
          * params['emb_ln_g'] + params['emb_ln_b'])
    x0 = x0.reshape(B * S, H).astype(jnp.float32)

    # Additive attention-mask bias, computed once (not per layer), kept in f32.
    bias = (1.0 - attention_mask.astype(jnp.float32))[:, None, :] * (-1e9)

    def resident(a):                            # fetched once (constant index)
        nd = a.ndim
        return pl.BlockSpec(a.shape, lambda l, nd=nd: (0,) * nd)

    def per_layer(a):                           # streamed, double-buffered
        nd = a.ndim
        return pl.BlockSpec((None,) + a.shape[1:],
                            lambda l, nd=nd: (l,) + (0,) * (nd - 1))

    inputs = [x0, bias,
              params['wqkv'], params['wo'], params['wi'], params['wp'],
              params['bi'], params['vecs'],
              params['fc1_w'], params['fc1_b'], params['fc2_w'], params['fc2_b']]

    in_specs = [pl.BlockSpec(memory_space=pl.ANY),       # x0 stays in HBM
                resident(bias),
                per_layer(params['wqkv']), per_layer(params['wo']),
                per_layer(params['wi']), per_layer(params['wp']),
                per_layer(params['bi']), per_layer(params['vecs']),
                resident(params['fc1_w']), resident(params['fc1_b']),
                resident(params['fc2_w']), resident(params['fc2_b'])]

    out = pl.pallas_call(
        fused_forward_kernel,
        out_shape=jax.ShapeDtypeStruct((B, LANE), jnp.float32),
        grid_spec=pltpu.PrefetchScalarGridSpec(
            num_scalar_prefetch=0,
            grid=(N_LAYERS,),
            in_specs=in_specs,
            out_specs=pl.BlockSpec((B, LANE), lambda l: (0, 0)),
            scratch_shapes=[pltpu.VMEM((B * S, H), jnp.float32),
                            pltpu.SemaphoreType.DMA(())],
        ),
        compiler_params=pltpu.CompilerParams(
            dimension_semantics=("arbitrary",),        # layer axis is sequential
            vmem_limit_bytes=VMEM_LIMIT_BYTES),
    )(*inputs)

    return out[:, :1]                           # (B, 1) sigmoid probabilities


# ----------------------------------- main --------------------------------------
if __name__ == "__main__":
    key = jax.random.PRNGKey(0)
    k_param, k_ids = jax.random.split(key)

    params = init_params(k_param)

    # Toy shapes (R = B*S = 16): overhead-bound by design; for real workloads
    # batch more sequences so R >= 128/256 to fill the MXU rows.
    B, S = 2, 8
    input_ids = jax.random.randint(k_ids, (B, S), 0, VOCAB, dtype=jnp.int32)
    # second example has 2 padded positions at the end
    attention_mask = jnp.array([[1, 1, 1, 1, 1, 1, 1, 1],
                                [1, 1, 1, 1, 1, 1, 0, 0]], dtype=jnp.int32)

    probs = koelectra_mlp_classifier(params, input_ids, attention_mask)
    probs = jax.block_until_ready(probs)

    assert probs.shape == (B, 1)
    assert bool(jnp.all((probs > 0.0) & (probs < 1.0)))
    print("KERNEL_OK")
</pallas_src>

<mosaic_0001>
module attributes {stable_mosaic.version = 11 : i64} {
  func.func @fused_forward_kernel(%arg0: i32, %arg1: memref<16x128xf32, #tpu.memory_space<any>>, %arg2: memref<2x1x8xf32, #tpu.memory_space<vmem>>, %arg3: memref<1x128x384xbf16, #tpu.memory_space<vmem>>, %arg4: memref<1x128x128xbf16, #tpu.memory_space<vmem>>, %arg5: memref<1x128x256xbf16, #tpu.memory_space<vmem>>, %arg6: memref<1x256x128xbf16, #tpu.memory_space<vmem>>, %arg7: memref<1x1x256xf32, #tpu.memory_space<vmem>>, %arg8: memref<1x16x128xf32, #tpu.memory_space<vmem>>, %arg9: memref<128x256xbf16, #tpu.memory_space<vmem>>, %arg10: memref<1x256xf32, #tpu.memory_space<vmem>>, %arg11: memref<1x256xf32, #tpu.memory_space<vmem>>, %arg12: memref<1x1xf32, #tpu.memory_space<vmem>>, %arg13: memref<2x128xf32, #tpu.memory_space<vmem>>, %arg14: memref<16x128xf32, #tpu.memory_space<vmem>>, %arg15: memref<!tpu.dma_semaphore, #tpu.memory_space<semaphore_mem>>) attributes {dimension_semantics = [#tpu.dimension_semantics<arbitrary>], iteration_bounds = array<i64: 2>, scalar_prefetch = 0 : i64, scratch_operands = 2 : i64, tpu.core_type = #tpu.core_type<tc>, window_params = [{}, {pipeline_mode = #tpu.pipeline_mode<synchronous>, transform_indices = @transform_1, window_bounds = array<i64: 2, 1, 8>}, {transform_indices = @transform_2, window_bounds = array<i64: 1, 128, 384>}, {transform_indices = @transform_3, window_bounds = array<i64: 1, 128, 128>}, {transform_indices = @transform_4, window_bounds = array<i64: 1, 128, 256>}, {transform_indices = @transform_5, window_bounds = array<i64: 1, 256, 128>}, {transform_indices = @transform_6, window_bounds = array<i64: 1, 1, 256>}, {transform_indices = @transform_7, window_bounds = array<i64: 1, 16, 128>}, {pipeline_mode = #tpu.pipeline_mode<synchronous>, transform_indices = @transform_8, window_bounds = array<i64: 128, 256>}, {pipeline_mode = #tpu.pipeline_mode<synchronous>, transform_indices = @transform_9, window_bounds = array<i64: 1, 256>}, {pipeline_mode = #tpu.pipeline_mode<synchronous>, transform_indices = @transform_10, window_bounds = array<i64: 1, 256>}, {pipeline_mode = #tpu.pipeline_mode<synchronous>, transform_indices = @transform_11, window_bounds = array<i64: 1, 1>}, {pipeline_mode = #tpu.pipeline_mode<synchronous>, transform_indices = @transform_12, window_bounds = array<i64: 2, 128>}]} {
    %c0_i32 = arith.constant 0 : i32
    %0 = arith.cmpi eq, %arg0, %c0_i32 : i32
    %1 = arith.extui %0 : i1 to i32
    %c0_i32_0 = arith.constant 0 : i32
    %2 = arith.cmpi ne, %1, %c0_i32_0 : i32
    scf.if %2 {
      tpu.enqueue_dma source(%arg1 : memref<16x128xf32, #tpu.memory_space<any>>) target(%arg14 : memref<16x128xf32, #tpu.memory_space<vmem>>) target_semaphore(%arg15 : memref<!tpu.dma_semaphore, #tpu.memory_space<semaphore_mem>>)
      tpu.wait_dma2 semaphore(%arg15 : memref<!tpu.dma_semaphore, #tpu.memory_space<semaphore_mem>>) src(%arg1 : memref<16x128xf32, #tpu.memory_space<any>>) dst(%arg14 : memref<16x128xf32, #tpu.memory_space<vmem>>)
    } else {
    }
    %c0 = arith.constant 0 : index
    %c0_1 = arith.constant 0 : index
    %3 = vector.load %arg14[%c0, %c0_1] : memref<16x128xf32, #tpu.memory_space<vmem>>, vector<16x128xf32>
    %4 = arith.truncf %3 : vector<16x128xf32> to vector<16x128xbf16>
    %c0_2 = arith.constant 0 : index
    %c0_3 = arith.constant 0 : index
    %c0_4 = arith.constant 0 : index
    %5 = vector.load %arg2[%c0_2, %c0_3, %c0_4] : memref<2x1x8xf32, #tpu.memory_space<vmem>>, vector<2x1x8xf32>
    %c0_5 = arith.constant 0 : index
    %c0_6 = arith.constant 0 : index
    %c0_7 = arith.constant 0 : index
    %6 = vector.load %arg8[%c0_5, %c0_6, %c0_7] : memref<1x16x128xf32, #tpu.memory_space<vmem>>, vector<1x16x128xf32>
    %7 = vector.shape_cast %6 : vector<1x16x128xf32> to vector<16x128xf32>
    %8 = vector.extract_strided_slice %7 {offsets = [0, 0], sizes = [1, 128], strides = [1, 1]} : vector<16x128xf32> to vector<1x128xf32>
    %9 = vector.extract_strided_slice %7 {offsets = [1, 0], sizes = [1, 128], strides = [1, 1]} : vector<16x128xf32> to vector<1x128xf32>
    %10 = vector.extract_strided_slice %7 {offsets = [2, 0], sizes = [1, 128], strides = [1, 1]} : vector<16x128xf32> to vector<1x128xf32>
    %11 = vector.extract_strided_slice %7 {offsets = [3, 0], sizes = [1, 128], strides = [1, 1]} : vector<16x128xf32> to vector<1x128xf32>
    %12 = vector.extract_strided_slice %7 {offsets = [4, 0], sizes = [1, 128], strides = [1, 1]} : vector<16x128xf32> to vector<1x128xf32>
    %13 = vector.extract_strided_slice %7 {offsets = [5, 0], sizes = [1, 128], strides = [1, 1]} : vector<16x128xf32> to vector<1x128xf32>
    %14 = vector.extract_strided_slice %7 {offsets = [6, 0], sizes = [1, 128], strides = [1, 1]} : vector<16x128xf32> to vector<1x128xf32>
    %15 = vector.extract_strided_slice %7 {offsets = [7, 0], sizes = [1, 128], strides = [1, 1]} : vector<16x128xf32> to vector<1x128xf32>
    %16 = vector.extract_strided_slice %7 {offsets = [8, 0], sizes = [1, 128], strides = [1, 1]} : vector<16x128xf32> to vector<1x128xf32>
    %c0_8 = arith.constant 0 : index
    %c0_9 = arith.constant 0 : index
    %c0_10 = arith.constant 0 : index
    %17 = vector.load %arg3[%c0_8, %c0_9, %c0_10] : memref<1x128x384xbf16, #tpu.memory_space<vmem>>, vector<1x128x384xbf16>
    %18 = vector.shape_cast %17 : vector<1x128x384xbf16> to vector<128x384xbf16>
    %cst = arith.constant dense<0.000000e+00> : vector<16x384xf32>
    %19 = tpu.matmul %4, %18, %cst {dimension_numbers = #tpu.dot_dimension_numbers<[1], [0], [0], [1], [0, 0, 1, 1], [], []>} : vector<16x128xbf16>, vector<128x384xbf16>, vector<16x384xf32> -> vector<16x384xf32>
    %20 = vector.extract_strided_slice %19 {offsets = [0, 0], sizes = [16, 128], strides = [1, 1]} : vector<16x384xf32> to vector<16x128xf32>
    %21 = vector.broadcast %8 : vector<1x128xf32> to vector<16x128xf32>
    %22 = arith.addf %20, %21 : vector<16x128xf32>
    %23 = vector.shape_cast %22 : vector<16x128xf32> to vector<2x8x128xf32>
    %24 = arith.truncf %23 : vector<2x8x128xf32> to vector<2x8x128xbf16>
    %25 = vector.extract_strided_slice %19 {offsets = [0, 128], sizes = [16, 128], strides = [1, 1]} : vector<16x384xf32> to vector<16x128xf32>
    %26 = vector.broadcast %9 : vector<1x128xf32> to vector<16x128xf32>
    %27 = arith.addf %25, %26 : vector<16x128xf32>
    %28 = vector.shape_cast %27 : vector<16x128xf32> to vector<2x8x128xf32>
    %29 = arith.truncf %28 : vector<2x8x128xf32> to vector<2x8x128xbf16>
    %30 = vector.extract_strided_slice %19 {offsets = [0, 256], sizes = [16, 128], strides = [1, 1]} : vector<16x384xf32> to vector<16x128xf32>
    %31 = vector.broadcast %10 : vector<1x128xf32> to vector<16x128xf32>
    %32 = arith.addf %30, %31 : vector<16x128xf32>
    %33 = vector.shape_cast %32 : vector<16x128xf32> to vector<2x8x128xf32>
    %34 = arith.truncf %33 : vector<2x8x128xf32> to vector<2x8x128xbf16>
    %35 = vector.extract_strided_slice %24 {offsets = [0, 0, 0], sizes = [2, 8, 32], strides = [1, 1, 1]} : vector<2x8x128xbf16> to vector<2x8x32xbf16>
    %36 = vector.extract_strided_slice %29 {offsets = [0, 0, 0], sizes = [2, 8, 32], strides = [1, 1, 1]} : vector<2x8x128xbf16> to vector<2x8x32xbf16>
    "tpu.trace_start"() <{level = 10 : i32, message = "bqd,bkd->bqk"}> : () -> ()
    %cst_11 = arith.constant dense<0.000000e+00> : vector<2x8x8xf32>
    %37 = tpu.matmul %35, %36, %cst_11 {dimension_numbers = #tpu.dot_dimension_numbers<[2], [2], [1], [1], [0, 0, 0, 1, 1, 1], [0], [0]>} : vector<2x8x32xbf16>, vector<2x8x32xbf16>, vector<2x8x8xf32> -> vector<2x8x8xf32>
    "tpu.trace_stop"() : () -> ()
    %cst_12 = arith.constant 0.176776692 : f32
    %38 = vector.broadcast %cst_12 : f32 to vector<2x8x8xf32>
    %39 = arith.mulf %37, %38 : vector<2x8x8xf32>
    %40 = vector.broadcast %5 : vector<2x1x8xf32> to vector<2x8x8xf32>
    %41 = arith.addf %39, %40 : vector<2x8x8xf32>
    %cst_13 = arith.constant dense<0xFF800000> : vector<2x8xf32>
    %42 = vector.multi_reduction <maximumf>, %41, %cst_13 [2] : vector<2x8x8xf32> to vector<2x8xf32>
    %43 = vector.shape_cast %42 : vector<2x8xf32> to vector<2x8x1xf32>
    %44 = vector.broadcast %43 : vector<2x8x1xf32> to vector<2x8x8xf32>
    %45 = arith.subf %41, %44 : vector<2x8x8xf32>
    %46 = math.exp %45 : vector<2x8x8xf32>
    %cst_14 = arith.constant dense<0.000000e+00> : vector<2x8xf32>
    %47 = vector.multi_reduction <add>, %46, %cst_14 [2] : vector<2x8x8xf32> to vector<2x8xf32>
    %48 = vector.shape_cast %47 : vector<2x8xf32> to vector<2x8x1xf32>
    %49 = tpu.reciprocal %48 {approx = true} : vector<2x8x1xf32> -> vector<2x8x1xf32>
    %50 = vector.broadcast %49 : vector<2x8x1xf32> to vector<2x8x8xf32>
    %51 = arith.mulf %46, %50 : vector<2x8x8xf32>
    %52 = arith.truncf %51 : vector<2x8x8xf32> to vector<2x8x8xbf16>
    %53 = vector.extract_strided_slice %34 {offsets = [0, 0, 0], sizes = [2, 8, 32], strides = [1, 1, 1]} : vector<2x8x128xbf16> to vector<2x8x32xbf16>
    "tpu.trace_start"() <{level = 10 : i32, message = "bqk,bkd->bqd"}> : () -> ()
    %cst_15 = arith.constant dense<0.000000e+00> : vector<2x8x32xf32>
    %54 = tpu.matmul %52, %53, %cst_15 {dimension_numbers = #tpu.dot_dimension_numbers<[2], [1], [1], [2], [0, 0, 0, 1, 1, 2], [0], [0]>} : vector<2x8x8xbf16>, vector<2x8x32xbf16>, vector<2x8x32xf32> -> vector<2x8x32xf32>
    "tpu.trace_stop"() : () -> ()
    %55 = vector.extract_strided_slice %24 {offsets = [0, 0, 32], sizes = [2, 8, 32], strides = [1, 1, 1]} : vector<2x8x128xbf16> to vector<2x8x32xbf16>
    %56 = vector.extract_strided_slice %29 {offsets = [0, 0, 32], sizes = [2, 8, 32], strides = [1, 1, 1]} : vector<2x8x128xbf16> to vector<2x8x32xbf16>
    "tpu.trace_start"() <{level = 10 : i32, message = "bqd,bkd->bqk"}> : () -> ()
    %cst_16 = arith.constant dense<0.000000e+00> : vector<2x8x8xf32>
    %57 = tpu.matmul %55, %56, %cst_16 {dimension_numbers = #tpu.dot_dimension_numbers<[2], [2], [1], [1], [0, 0, 0, 1, 1, 1], [0], [0]>} : vector<2x8x32xbf16>, vector<2x8x32xbf16>, vector<2x8x8xf32> -> vector<2x8x8xf32>
    "tpu.trace_stop"() : () -> ()
    %cst_17 = arith.constant 0.176776692 : f32
    %58 = vector.broadcast %cst_17 : f32 to vector<2x8x8xf32>
    %59 = arith.mulf %57, %58 : vector<2x8x8xf32>
    %60 = vector.broadcast %5 : vector<2x1x8xf32> to vector<2x8x8xf32>
    %61 = arith.addf %59, %60 : vector<2x8x8xf32>
    %cst_18 = arith.constant dense<0xFF800000> : vector<2x8xf32>
    %62 = vector.multi_reduction <maximumf>, %61, %cst_18 [2] : vector<2x8x8xf32> to vector<2x8xf32>
    %63 = vector.shape_cast %62 : vector<2x8xf32> to vector<2x8x1xf32>
    %64 = vector.broadcast %63 : vector<2x8x1xf32> to vector<2x8x8xf32>
    %65 = arith.subf %61, %64 : vector<2x8x8xf32>
    %66 = math.exp %65 : vector<2x8x8xf32>
    %cst_19 = arith.constant dense<0.000000e+00> : vector<2x8xf32>
    %67 = vector.multi_reduction <add>, %66, %cst_19 [2] : vector<2x8x8xf32> to vector<2x8xf32>
    %68 = vector.shape_cast %67 : vector<2x8xf32> to vector<2x8x1xf32>
    %69 = tpu.reciprocal %68 {approx = true} : vector<2x8x1xf32> -> vector<2x8x1xf32>
    %70 = vector.broadcast %69 : vector<2x8x1xf32> to vector<2x8x8xf32>
    %71 = arith.mulf %66, %70 : vector<2x8x8xf32>
    %72 = arith.truncf %71 : vector<2x8x8xf32> to vector<2x8x8xbf16>
    %73 = vector.extract_strided_slice %34 {offsets = [0, 0, 32], sizes = [2, 8, 32], strides = [1, 1, 1]} : vector<2x8x128xbf16> to vector<2x8x32xbf16>
    "tpu.trace_start"() <{level = 10 : i32, message = "bqk,bkd->bqd"}> : () -> ()
    %cst_20 = arith.constant dense<0.000000e+00> : vector<2x8x32xf32>
    %74 = tpu.matmul %72, %73, %cst_20 {dimension_numbers = #tpu.dot_dimension_numbers<[2], [1], [1], [2], [0, 0, 0, 1, 1, 2], [0], [0]>} : vector<2x8x8xbf16>, vector<2x8x32xbf16>, vector<2x8x32xf32> -> vector<2x8x32xf32>
    "tpu.trace_stop"() : () -> ()
    %75 = vector.extract_strided_slice %24 {offsets = [0, 0, 64], sizes = [2, 8, 32], strides = [1, 1, 1]} : vector<2x8x128xbf16> to vector<2x8x32xbf16>
    %76 = vector.extract_strided_slice %29 {offsets = [0, 0, 64], sizes = [2, 8, 32], strides = [1, 1, 1]} : vector<2x8x128xbf16> to vector<2x8x32xbf16>
    "tpu.trace_start"() <{level = 10 : i32, message = "bqd,bkd->bqk"}> : () -> ()
    %cst_21 = arith.constant dense<0.000000e+00> : vector<2x8x8xf32>
    %77 = tpu.matmul %75, %76, %cst_21 {dimension_numbers = #tpu.dot_dimension_numbers<[2], [2], [1], [1], [0, 0, 0, 1, 1, 1], [0], [0]>} : vector<2x8x32xbf16>, vector<2x8x32xbf16>, vector<2x8x8xf32> -> vector<2x8x8xf32>
    "tpu.trace_stop"() : () -> ()
    %cst_22 = arith.constant 0.176776692 : f32
    %78 = vector.broadcast %cst_22 : f32 to vector<2x8x8xf32>
    %79 = arith.mulf %77, %78 : vector<2x8x8xf32>
    %80 = vector.broadcast %5 : vector<2x1x8xf32> to vector<2x8x8xf32>
    %81 = arith.addf %79, %80 : vector<2x8x8xf32>
    %cst_23 = arith.constant dense<0xFF800000> : vector<2x8xf32>
    %82 = vector.multi_reduction <maximumf>, %81, %cst_23 [2] : vector<2x8x8xf32> to vector<2x8xf32>
    %83 = vector.shape_cast %82 : vector<2x8xf32> to vector<2x8x1xf32>
    %84 = vector.broadcast %83 : vector<2x8x1xf32> to vector<2x8x8xf32>
    %85 = arith.subf %81, %84 : vector<2x8x8xf32>
    %86 = math.exp %85 : vector<2x8x8xf32>
    %cst_24 = arith.constant dense<0.000000e+00> : vector<2x8xf32>
    %87 = vector.multi_reduction <add>, %86, %cst_24 [2] : vector<2x8x8xf32> to vector<2x8xf32>
    %88 = vector.shape_cast %87 : vector<2x8xf32> to vector<2x8x1xf32>
    %89 = tpu.reciprocal %88 {approx = true} : vector<2x8x1xf32> -> vector<2x8x1xf32>
    %90 = vector.broadcast %89 : vector<2x8x1xf32> to vector<2x8x8xf32>
    %91 = arith.mulf %86, %90 : vector<2x8x8xf32>
    %92 = arith.truncf %91 : vector<2x8x8xf32> to vector<2x8x8xbf16>
    %93 = vector.extract_strided_slice %34 {offsets = [0, 0, 64], sizes = [2, 8, 32], strides = [1, 1, 1]} : vector<2x8x128xbf16> to vector<2x8x32xbf16>
    "tpu.trace_start"() <{level = 10 : i32, message = "bqk,bkd->bqd"}> : () -> ()
    %cst_25 = arith.constant dense<0.000000e+00> : vector<2x8x32xf32>
    %94 = tpu.matmul %92, %93, %cst_25 {dimension_numbers = #tpu.dot_dimension_numbers<[2], [1], [1], [2], [0, 0, 0, 1, 1, 2], [0], [0]>} : vector<2x8x8xbf16>, vector<2x8x32xbf16>, vector<2x8x32xf32> -> vector<2x8x32xf32>
    "tpu.trace_stop"() : () -> ()
    %95 = vector.extract_strided_slice %24 {offsets = [0, 0, 96], sizes = [2, 8, 32], strides = [1, 1, 1]} : vector<2x8x128xbf16> to vector<2x8x32xbf16>
    %96 = vector.extract_strided_slice %29 {offsets = [0, 0, 96], sizes = [2, 8, 32], strides = [1, 1, 1]} : vector<2x8x128xbf16> to vector<2x8x32xbf16>
    "tpu.trace_start"() <{level = 10 : i32, message = "bqd,bkd->bqk"}> : () -> ()
    %cst_26 = arith.constant dense<0.000000e+00> : vector<2x8x8xf32>
    %97 = tpu.matmul %95, %96, %cst_26 {dimension_numbers = #tpu.dot_dimension_numbers<[2], [2], [1], [1], [0, 0, 0, 1, 1, 1], [0], [0]>} : vector<2x8x32xbf16>, vector<2x8x32xbf16>, vector<2x8x8xf32> -> vector<2x8x8xf32>
    "tpu.trace_stop"() : () -> ()
    %cst_27 = arith.constant 0.176776692 : f32
    %98 = vector.broadcast %cst_27 : f32 to vector<2x8x8xf32>
    %99 = arith.mulf %97, %98 : vector<2x8x8xf32>
    %100 = vector.broadcast %5 : vector<2x1x8xf32> to vector<2x8x8xf32>
    %101 = arith.addf %99, %100 : vector<2x8x8xf32>
    %cst_28 = arith.constant dense<0xFF800000> : vector<2x8xf32>
    %102 = vector.multi_reduction <maximumf>, %101, %cst_28 [2] : vector<2x8x8xf32> to vector<2x8xf32>
    %103 = vector.shape_cast %102 : vector<2x8xf32> to vector<2x8x1xf32>
    %104 = vector.broadcast %103 : vector<2x8x1xf32> to vector<2x8x8xf32>
    %105 = arith.subf %101, %104 : vector<2x8x8xf32>
    %106 = math.exp %105 : vector<2x8x8xf32>
    %cst_29 = arith.constant dense<0.000000e+00> : vector<2x8xf32>
    %107 = vector.multi_reduction <add>, %106, %cst_29 [2] : vector<2x8x8xf32> to vector<2x8xf32>
    %108 = vector.shape_cast %107 : vector<2x8xf32> to vector<2x8x1xf32>
    %109 = tpu.reciprocal %108 {approx = true} : vector<2x8x1xf32> -> vector<2x8x1xf32>
    %110 = vector.broadcast %109 : vector<2x8x1xf32> to vector<2x8x8xf32>
    %111 = arith.mulf %106, %110 : vector<2x8x8xf32>
    %112 = arith.truncf %111 : vector<2x8x8xf32> to vector<2x8x8xbf16>
    %113 = vector.extract_strided_slice %34 {offsets = [0, 0, 96], sizes = [2, 8, 32], strides = [1, 1, 1]} : vector<2x8x128xbf16> to vector<2x8x32xbf16>
    "tpu.trace_start"() <{level = 10 : i32, message = "bqk,bkd->bqd"}> : () -> ()
    %cst_30 = arith.constant dense<0.000000e+00> : vector<2x8x32xf32>
    %114 = tpu.matmul %112, %113, %cst_30 {dimension_numbers = #tpu.dot_dimension_numbers<[2], [1], [1], [2], [0, 0, 0, 1, 1, 2], [0], [0]>} : vector<2x8x8xbf16>, vector<2x8x32xbf16>, vector<2x8x32xf32> -> vector<2x8x32xf32>
    "tpu.trace_stop"() : () -> ()
    %115 = tpu.concatenate %54, %74, %94, %114 in 2 : vector<2x8x32xf32>, vector<2x8x32xf32>, vector<2x8x32xf32>, vector<2x8x32xf32> -> vector<2x8x128xf32>
    %116 = vector.shape_cast %115 : vector<2x8x128xf32> to vector<16x128xf32>
    %117 = arith.truncf %116 : vector<16x128xf32> to vector<16x128xbf16>
    %c0_31 = arith.constant 0 : index
    %c0_32 = arith.constant 0 : index
    %c0_33 = arith.constant 0 : index
    %118 = vector.load %arg4[%c0_31, %c0_32, %c0_33] : memref<1x128x128xbf16, #tpu.memory_space<vmem>>, vector<1x128x128xbf16>
    %119 = vector.shape_cast %118 : vector<1x128x128xbf16> to vector<128x128xbf16>
    %cst_34 = arith.constant dense<0.000000e+00> : vector<16x128xf32>
    %120 = tpu.matmul %117, %119, %cst_34 {dimension_numbers = #tpu.dot_dimension_numbers<[1], [0], [0], [1], [0, 0, 1, 1], [], []>} : vector<16x128xbf16>, vector<128x128xbf16>, vector<16x128xf32> -> vector<16x128xf32>
    %121 = vector.broadcast %11 : vector<1x128xf32> to vector<16x128xf32>
    %122 = arith.addf %120, %121 : vector<16x128xf32>
    %123 = arith.addf %3, %122 : vector<16x128xf32>
    %cst_35 = arith.constant dense<0.000000e+00> : vector<16xf32>
    %124 = vector.multi_reduction <add>, %123, %cst_35 [1] : vector<16x128xf32> to vector<16xf32>
    %125 = vector.shape_cast %124 : vector<16xf32> to vector<16x1xf32>
    %cst_36 = arith.constant 1.280000e+02 : f32
    %126 = vector.broadcast %cst_36 : f32 to vector<16x1xf32>
    %127 = arith.divf %125, %126 : vector<16x1xf32>
    %128 = vector.broadcast %127 : vector<16x1xf32> to vector<16x128xf32>
    %129 = arith.subf %123, %128 : vector<16x128xf32>
    %130 = arith.mulf %129, %129 : vector<16x128xf32>
    %cst_37 = arith.constant dense<0.000000e+00> : vector<16xf32>
    %131 = vector.multi_reduction <add>, %130, %cst_37 [1] : vector<16x128xf32> to vector<16xf32>
    %132 = vector.shape_cast %131 : vector<16xf32> to vector<16x1xf32>
    %cst_38 = arith.constant 1.280000e+02 : f32
    %133 = vector.broadcast %cst_38 : f32 to vector<16x1xf32>
    %134 = arith.divf %132, %133 : vector<16x1xf32>
    %135 = vector.broadcast %127 : vector<16x1xf32> to vector<16x128xf32>
    %136 = arith.subf %123, %135 : vector<16x128xf32>
    %cst_39 = arith.constant 9.99999996E-13 : f32
    %137 = vector.broadcast %cst_39 : f32 to vector<16x1xf32>
    %138 = arith.addf %134, %137 : vector<16x1xf32>
    %139 = math.rsqrt %138 : vector<16x1xf32>
    %140 = vector.broadcast %139 : vector<16x1xf32> to vector<16x128xf32>
    %141 = arith.mulf %136, %140 : vector<16x128xf32>
    %142 = vector.broadcast %12 : vector<1x128xf32> to vector<16x128xf32>
    %143 = arith.mulf %141, %142 : vector<16x128xf32>
    %144 = vector.broadcast %13 : vector<1x128xf32> to vector<16x128xf32>
    %145 = arith.addf %143, %144 : vector<16x128xf32>
    %146 = arith.truncf %145 : vector<16x128xf32> to vector<16x128xbf16>
    %c0_40 = arith.constant 0 : index
    %c0_41 = arith.constant 0 : index
    %c0_42 = arith.constant 0 : index
    %147 = vector.load %arg5[%c0_40, %c0_41, %c0_42] : memref<1x128x256xbf16, #tpu.memory_space<vmem>>, vector<1x128x256xbf16>
    %148 = vector.shape_cast %147 : vector<1x128x256xbf16> to vector<128x256xbf16>
    %cst_43 = arith.constant dense<0.000000e+00> : vector<16x256xf32>
    %149 = tpu.matmul %146, %148, %cst_43 {dimension_numbers = #tpu.dot_dimension_numbers<[1], [0], [0], [1], [0, 0, 1, 1], [], []>} : vector<16x128xbf16>, vector<128x256xbf16>, vector<16x256xf32> -> vector<16x256xf32>
    %c0_44 = arith.constant 0 : index
    %c0_45 = arith.constant 0 : index
    %c0_46 = arith.constant 0 : index
    %150 = vector.load %arg7[%c0_44, %c0_45, %c0_46] : memref<1x1x256xf32, #tpu.memory_space<vmem>>, vector<1x1x256xf32>
    %151 = vector.shape_cast %150 : vector<1x1x256xf32> to vector<1x256xf32>
    %152 = vector.broadcast %151 : vector<1x256xf32> to vector<16x256xf32>
    %153 = arith.addf %149, %152 : vector<16x256xf32>
    %cst_47 = arith.constant 0.707106769 : f32
    %154 = vector.broadcast %cst_47 : f32 to vector<16x256xf32>
    %155 = arith.mulf %153, %154 : vector<16x256xf32>
    %156 = math.absf %155 : vector<16x256xf32>
    %cst_48 = arith.constant 0.327591091 : f32
    %157 = vector.broadcast %cst_48 : f32 to vector<16x256xf32>
    %158 = arith.mulf %157, %156 : vector<16x256xf32>
    %cst_49 = arith.constant 1.000000e+00 : f32
    %159 = vector.broadcast %cst_49 : f32 to vector<16x256xf32>
    %160 = arith.addf %159, %158 : vector<16x256xf32>
    %cst_50 = arith.constant 1.000000e+00 : f32
    %161 = vector.broadcast %cst_50 : f32 to vector<16x256xf32>
    %162 = arith.divf %161, %160 : vector<16x256xf32>
    %cst_51 = arith.constant 1.06140542 : f32
    %163 = vector.broadcast %cst_51 : f32 to vector<16x256xf32>
    %164 = arith.mulf %163, %162 : vector<16x256xf32>
    %cst_52 = arith.constant -1.45315206 : f32
    %165 = vector.broadcast %cst_52 : f32 to vector<16x256xf32>
    %166 = arith.addf %164, %165 : vector<16x256xf32>
    %167 = arith.mulf %166, %162 : vector<16x256xf32>
    %cst_53 = arith.constant 1.42141378 : f32
    %168 = vector.broadcast %cst_53 : f32 to vector<16x256xf32>
    %169 = arith.addf %167, %168 : vector<16x256xf32>
    %170 = arith.mulf %169, %162 : vector<16x256xf32>
    %cst_54 = arith.constant -0.284496725 : f32
    %171 = vector.broadcast %cst_54 : f32 to vector<16x256xf32>
    %172 = arith.addf %170, %171 : vector<16x256xf32>
    %173 = arith.mulf %172, %162 : vector<16x256xf32>
    %cst_55 = arith.constant 0.254829586 : f32
    %174 = vector.broadcast %cst_55 : f32 to vector<16x256xf32>
    %175 = arith.addf %173, %174 : vector<16x256xf32>
    %176 = arith.mulf %175, %162 : vector<16x256xf32>
    %cst_56 = arith.constant 0.000000e+00 : f32
    %177 = vector.broadcast %cst_56 : f32 to vector<16x256xf32>
    %178 = arith.subf %177, %156 : vector<16x256xf32>
    %179 = arith.mulf %178, %156 : vector<16x256xf32>
    %180 = math.exp %179 : vector<16x256xf32>
    %181 = arith.mulf %176, %180 : vector<16x256xf32>
    %cst_57 = arith.constant 1.000000e+00 : f32
    %182 = vector.broadcast %cst_57 : f32 to vector<16x256xf32>
    %183 = arith.subf %182, %181 : vector<16x256xf32>
    %cst_58 = arith.constant 0.000000e+00 : f32
    %184 = vector.broadcast %cst_58 : f32 to vector<16x256xf32>
    %185 = arith.cmpf oge, %155, %184 : vector<16x256xf32>
    %cst_59 = arith.constant 0.000000e+00 : f32
    %186 = vector.broadcast %cst_59 : f32 to vector<16x256xf32>
    %187 = arith.subf %186, %183 : vector<16x256xf32>
    %188 = arith.select %185, %183, %187 : vector<16x256xi1>, vector<16x256xf32>
    %cst_60 = arith.constant 5.000000e-01 : f32
    %189 = vector.broadcast %cst_60 : f32 to vector<16x256xf32>
    %190 = arith.mulf %189, %153 : vector<16x256xf32>
    %cst_61 = arith.constant 1.000000e+00 : f32
    %191 = vector.broadcast %cst_61 : f32 to vector<16x256xf32>
    %192 = arith.addf %191, %188 : vector<16x256xf32>
    %193 = arith.mulf %190, %192 : vector<16x256xf32>
    %194 = arith.truncf %193 : vector<16x256xf32> to vector<16x256xbf16>
    %c0_62 = arith.constant 0 : index
    %c0_63 = arith.constant 0 : index
    %c0_64 = arith.constant 0 : index
    %195 = vector.load %arg6[%c0_62, %c0_63, %c0_64] : memref<1x256x128xbf16, #tpu.memory_space<vmem>>, vector<1x256x128xbf16>
    %196 = vector.shape_cast %195 : vector<1x256x128xbf16> to vector<256x128xbf16>
    %cst_65 = arith.constant dense<0.000000e+00> : vector<16x128xf32>
    %197 = tpu.matmul %194, %196, %cst_65 {dimension_numbers = #tpu.dot_dimension_numbers<[1], [0], [0], [1], [0, 0, 1, 1], [], []>} : vector<16x256xbf16>, vector<256x128xbf16>, vector<16x128xf32> -> vector<16x128xf32>
    %198 = vector.broadcast %14 : vector<1x128xf32> to vector<16x128xf32>
    %199 = arith.addf %197, %198 : vector<16x128xf32>
    %200 = arith.addf %145, %199 : vector<16x128xf32>
    %cst_66 = arith.constant dense<0.000000e+00> : vector<16xf32>
    %201 = vector.multi_reduction <add>, %200, %cst_66 [1] : vector<16x128xf32> to vector<16xf32>
    %202 = vector.shape_cast %201 : vector<16xf32> to vector<16x1xf32>
    %cst_67 = arith.constant 1.280000e+02 : f32
    %203 = vector.broadcast %cst_67 : f32 to vector<16x1xf32>
    %204 = arith.divf %202, %203 : vector<16x1xf32>
    %205 = vector.broadcast %204 : vector<16x1xf32> to vector<16x128xf32>
    %206 = arith.subf %200, %205 : vector<16x128xf32>
    %207 = arith.mulf %206, %206 : vector<16x128xf32>
    %cst_68 = arith.constant dense<0.000000e+00> : vector<16xf32>
    %208 = vector.multi_reduction <add>, %207, %cst_68 [1] : vector<16x128xf32> to vector<16xf32>
    %209 = vector.shape_cast %208 : vector<16xf32> to vector<16x1xf32>
    %cst_69 = arith.constant 1.280000e+02 : f32
    %210 = vector.broadcast %cst_69 : f32 to vector<16x1xf32>
    %211 = arith.divf %209, %210 : vector<16x1xf32>
    %212 = vector.broadcast %204 : vector<16x1xf32> to vector<16x128xf32>
    %213 = arith.subf %200, %212 : vector<16x128xf32>
    %cst_70 = arith.constant 9.99999996E-13 : f32
    %214 = vector.broadcast %cst_70 : f32 to vector<16x1xf32>
    %215 = arith.addf %211, %214 : vector<16x1xf32>
    %216 = math.rsqrt %215 : vector<16x1xf32>
    %217 = vector.broadcast %216 : vector<16x1xf32> to vector<16x128xf32>
    %218 = arith.mulf %213, %217 : vector<16x128xf32>
    %219 = vector.broadcast %15 : vector<1x128xf32> to vector<16x128xf32>
    %220 = arith.mulf %218, %219 : vector<16x128xf32>
    %221 = vector.broadcast %16 : vector<1x128xf32> to vector<16x128xf32>
    %222 = arith.addf %220, %221 : vector<16x128xf32>
    %c0_71 = arith.constant 0 : index
    %c0_72 = arith.constant 0 : index
    %223 = vector.load %arg14[%c0_71, %c0_72] : memref<16x128xf32, #tpu.memory_space<vmem>>, vector<16x128xf32>
    tpu.vector_store %arg14[%c0_71, %c0_72], %222 {strides = array<i32>} : memref<16x128xf32, #tpu.memory_space<vmem>>, vector<16x128xf32>,
    %c1_i32 = arith.constant 1 : i32
    %224 = arith.cmpi eq, %arg0, %c1_i32 : i32
    %225 = arith.extui %224 : i1 to i32
    %c0_i32_73 = arith.constant 0 : i32
    %226 = arith.cmpi ne, %225, %c0_i32_73 : i32
    scf.if %226 {
      %227 = vector.shape_cast %222 : vector<16x128xf32> to vector<2x8x128xf32>
      %228 = vector.extract_strided_slice %227 {offsets = [0, 0, 0], sizes = [2, 1, 128], strides = [1, 1, 1]} : vector<2x8x128xf32> to vector<2x1x128xf32>
      %229 = vector.shape_cast %228 : vector<2x1x128xf32> to vector<2x128xf32>
      %230 = arith.truncf %229 : vector<2x128xf32> to vector<2x128xbf16>
      %c0_74 = arith.constant 0 : index
      %c0_75 = arith.constant 0 : index
      %231 = vector.load %arg9[%c0_74, %c0_75] : memref<128x256xbf16, #tpu.memory_space<vmem>>, vector<128x256xbf16>
      %cst_76 = arith.constant dense<0.000000e+00> : vector<2x256xf32>
      %232 = tpu.matmul %230, %231, %cst_76 {dimension_numbers = #tpu.dot_dimension_numbers<[1], [0], [0], [1], [0, 0, 1, 1], [], []>} : vector<2x128xbf16>, vector<128x256xbf16>, vector<2x256xf32> -> vector<2x256xf32>
      %c0_77 = arith.constant 0 : index
      %c0_78 = arith.constant 0 : index
      %233 = vector.load %arg10[%c0_77, %c0_78] : memref<1x256xf32, #tpu.memory_space<vmem>>, vector<1x256xf32>
      %234 = vector.broadcast %233 : vector<1x256xf32> to vector<2x256xf32>
      %235 = arith.addf %232, %234 : vector<2x256xf32>
      %cst_79 = arith.constant 0.000000e+00 : f32
      %236 = vector.broadcast %cst_79 : f32 to vector<2x256xf32>
      %237 = arith.maximumf %235, %236 : vector<2x256xf32>
      %c0_80 = arith.constant 0 : index
      %c0_81 = arith.constant 0 : index
      %238 = vector.load %arg11[%c0_80, %c0_81] : memref<1x256xf32, #tpu.memory_space<vmem>>, vector<1x256xf32>
      %239 = vector.broadcast %238 : vector<1x256xf32> to vector<2x256xf32>
      %240 = arith.mulf %237, %239 : vector<2x256xf32>
      %cst_82 = arith.constant dense<0.000000e+00> : vector<2xf32>
      %241 = vector.multi_reduction <add>, %240, %cst_82 [1] : vector<2x256xf32> to vector<2xf32>
      %242 = vector.shape_cast %241 : vector<2xf32> to vector<2x1xf32>
      %c0_83 = arith.constant 0 : index
      %c0_84 = arith.constant 0 : index
      %243 = vector.load %arg12[%c0_83, %c0_84] : memref<1x1xf32, #tpu.memory_space<vmem>>, vector<1x1xf32>
      %244 = vector.broadcast %243 : vector<1x1xf32> to vector<2x1xf32>
      %245 = arith.addf %242, %244 : vector<2x1xf32>
      %246 = arith.negf %245 : vector<2x1xf32>
      %247 = math.exp %246 : vector<2x1xf32>
      %cst_85 = arith.constant 1.000000e+00 : f32
      %248 = vector.broadcast %cst_85 : f32 to vector<2x1xf32>
      %249 = arith.addf %248, %247 : vector<2x1xf32>
      %250 = arith.divf %248, %249 : vector<2x1xf32>
      %251 = vector.shape_cast %250 : vector<2x1xf32> to vector<2x1xf32>
      %252 = vector.broadcast %251 : vector<2x1xf32> to vector<2x128xf32>
      %c0_86 = arith.constant 0 : index
      %c0_87 = arith.constant 0 : index
      %253 = vector.load %arg13[%c0_86, %c0_87] : memref<2x128xf32, #tpu.memory_space<vmem>>, vector<2x128xf32>
      tpu.vector_store %arg13[%c0_86, %c0_87], %252 {strides = array<i32>} : memref<2x128xf32, #tpu.memory_space<vmem>>, vector<2x128xf32>,
    } else {
    }
    return
  }
  func.func @transform_1(%arg0: i32) -> (i32, i32, i32) {
    %c0_i32 = arith.constant 0 : i32
    %c0_i32_0 = arith.constant 0 : i32
    %c0_i32_1 = arith.constant 0 : i32
    %c0_i32_2 = arith.constant 0 : i32
    return %c0_i32, %c0_i32_0, %c0_i32_1 : i32, i32, i32
  }
  func.func @transform_2(%arg0: i32) -> (i32, i32, i32) {
    %c0_i32 = arith.constant 0 : i32
    %c0_i32_0 = arith.constant 0 : i32
    %c0_i32_1 = arith.constant 0 : i32
    return %arg0, %c0_i32, %c0_i32_0 : i32, i32, i32
  }
  func.func @transform_3(%arg0: i32) -> (i32, i32, i32) {
    %c0_i32 = arith.constant 0 : i32
    %c0_i32_0 = arith.constant 0 : i32
    %c0_i32_1 = arith.constant 0 : i32
    return %arg0, %c0_i32, %c0_i32_0 : i32, i32, i32
  }
  func.func @transform_4(%arg0: i32) -> (i32, i32, i32) {
    %c0_i32 = arith.constant 0 : i32
    %c0_i32_0 = arith.constant 0 : i32
    %c0_i32_1 = arith.constant 0 : i32
    return %arg0, %c0_i32, %c0_i32_0 : i32, i32, i32
  }
  func.func @transform_5(%arg0: i32) -> (i32, i32, i32) {
    %c0_i32 = arith.constant 0 : i32
    %c0_i32_0 = arith.constant 0 : i32
    %c0_i32_1 = arith.constant 0 : i32
    return %arg0, %c0_i32, %c0_i32_0 : i32, i32, i32
  }
  func.func @transform_6(%arg0: i32) -> (i32, i32, i32) {
    %c0_i32 = arith.constant 0 : i32
    %c0_i32_0 = arith.constant 0 : i32
    %c0_i32_1 = arith.constant 0 : i32
    return %arg0, %c0_i32, %c0_i32_0 : i32, i32, i32
  }
  func.func @transform_7(%arg0: i32) -> (i32, i32, i32) {
    %c0_i32 = arith.constant 0 : i32
    %c0_i32_0 = arith.constant 0 : i32
    %c0_i32_1 = arith.constant 0 : i32
    return %arg0, %c0_i32, %c0_i32_0 : i32, i32, i32
  }
  func.func @transform_8(%arg0: i32) -> (i32, i32) {
    %c0_i32 = arith.constant 0 : i32
    %c0_i32_0 = arith.constant 0 : i32
    %c0_i32_1 = arith.constant 0 : i32
    return %c0_i32, %c0_i32_0 : i32, i32
  }
  func.func @transform_9(%arg0: i32) -> (i32, i32) {
    %c0_i32 = arith.constant 0 : i32
    %c0_i32_0 = arith.constant 0 : i32
    %c0_i32_1 = arith.constant 0 : i32
    return %c0_i32, %c0_i32_0 : i32, i32
  }
  func.func @transform_10(%arg0: i32) -> (i32, i32) {
    %c0_i32 = arith.constant 0 : i32
    %c0_i32_0 = arith.constant 0 : i32
    %c0_i32_1 = arith.constant 0 : i32
    return %c0_i32, %c0_i32_0 : i32, i32
  }
  func.func @transform_11(%arg0: i32) -> (i32, i32) {
    %c0_i32 = arith.constant 0 : i32
    %c0_i32_0 = arith.constant 0 : i32
    %c0_i32_1 = arith.constant 0 : i32
    return %c0_i32, %c0_i32_0 : i32, i32
  }
  func.func @transform_12(%arg0: i32) -> (i32, i32) {
    %c0_i32 = arith.constant 0 : i32
    %c0_i32_0 = arith.constant 0 : i32
    %c0_i32_1 = arith.constant 0 : i32
    return %c0_i32, %c0_i32_0 : i32, i32
  }
}

</mosaic_0001>

<llo_original>
// kernel: tpu_custom_call.1
$region0: #{tpu_custom_call.1}
  #allocation0 [shape = 'u32[]', space=smem, size = 0x4, offset = 0x4, fixed_abs, tag = 'smem constant byte address 0x4 - core index']
  #allocation1 [shape = 'u32[144,128]{1,0:T(1,128)}', space=vmem, size = 0x12000, scoped, tag = 'internal scratch']
  #allocation2 [shape = 'f32[16,128]{1,0:T(8,128)}', space=vmem, size = 0x2000, scoped, tag = 'scratch operand']
  #allocation3 [shape = 's32[1]{0}', space=sflag, size = 0x4, scoped, tag = 'scratch operand']
  #allocation4 [shape = 'f32[1,1]{1,0:T(1,128)S(1)}', space=vmem, size = 0x200, scoped, tag = 'scoped memory for tpu_custom_call.1']
  #allocation17 [shape = 's32[]', space=sflag, size = 0x4, offset = 0, fixed_abs, tag = 'sflag constant byte address 0x0 - dummy sync flag']
  #allocation18 [shape = 's32[]', space=sflag, size = 0x4, offset = 0, fixed_abs, tag = 'sflag constant byte address 0x0 - dummy sync flag']
  #allocation19 [shape = 'u32[]', space=smem, size = 0x4, offset = 0x44, fixed_abs, tag = 'smem constant byte address 0x44 - assertion arg 0']
  #allocation20 [shape = 'u32[]', space=smem, size = 0x4, offset = 0x48, fixed_abs, tag = 'smem constant byte address 0x48 - assertion arg 1']
  %s0 = inlined_call_operand.hbm [shape: f32[16,128], index: 0, kind: input, shape index: {}]
  %s1 = inlined_call_operand.vmem [shape: f32[2,1,8], index: 1, kind: input, shape index: {}]
  %s2 = inlined_call_operand.hbm [shape: bf16[2,128,384], index: 2, kind: input, shape index: {}]
  %s3 = inlined_call_operand.hbm [shape: bf16[2,128,128], index: 3, kind: input, shape index: {}]
  %s4 = inlined_call_operand.hbm [shape: bf16[2,128,256], index: 4, kind: input, shape index: {}]
  %s5 = inlined_call_operand.hbm [shape: bf16[2,256,128], index: 5, kind: input, shape index: {}]
  %s6 = inlined_call_operand.vmem [shape: f32[2,1,256], index: 6, kind: input, shape index: {}]
  %s7 = inlined_call_operand.hbm [shape: f32[2,16,128], index: 7, kind: input, shape index: {}]
  %s8 = inlined_call_operand.hbm [shape: bf16[128,256], index: 8, kind: input, shape index: {}]
  %s9 = inlined_call_operand.vmem [shape: f32[1,256], index: 9, kind: input, shape index: {}]
  %s10 = inlined_call_operand.vmem [shape: f32[1,256], index: 10, kind: input, shape index: {}]
  %s11 = inlined_call_operand.<no memory space> [shape: f32[1,1], index: 11, kind: input, shape index: {}]
  %s12 = inlined_call_operand.hbm [shape: f32[2,128], index: 12, kind: output, shape index: {}]
  %s13 = sld [smem:[#allocation0]]
  $region113: #{tpu_custom_call.1} parent=0
    _
  %s15 = ssub.s32 1, %s13
  %s16 = scalar_select 0, %s15, %s13
  %v17 = vstv %s11
  %18 = vst [vmem:[#allocation4] sm:$0x1] %v17
  $region1: #{tpu_custom_call.1} parent=0
    #allocation5 [shape = 'u8[196608]{0}', space=vmem, size = 0x30000, scoped, tag = 'input window, operand 2']
    #allocation6 [shape = 's32[2]{0}', space=sflag, size = 0x8, scoped, tag = 'scoped memory for tpu_custom_call.1']
    #allocation7 [shape = 's32[2]{0}', space=sflag, size = 0x8, scoped, tag = 'scoped memory for tpu_custom_call.1']
    #allocation8 [shape = 'u8[65536]{0}', space=vmem, size = 0x10000, scoped, tag = 'input window, operand 3']
    #allocation9 [shape = 's32[2]{0}', space=sflag, size = 0x8, scoped, tag = 'scoped memory for tpu_custom_call.1']
    #allocation10 [shape = 'u8[131072]{0}', space=vmem, size = 0x20000, scoped, tag = 'input window, operand 4']
    #allocation11 [shape = 'u8[131072]{0}', space=vmem, size = 0x20000, scoped, tag = 'input window, operand 5']
    #allocation12 [shape = 's32[2]{0}', space=sflag, size = 0x8, scoped, tag = 'scoped memory for tpu_custom_call.1']
    #allocation13 [shape = 'u8[16384]{0}', space=vmem, size = 0x4000, scoped, tag = 'input window, operand 7']
    #allocation14 [shape = 'u8[65536]{0}', space=vmem, size = 0x10000, scoped, tag = 'input window, operand 8, single buffered']
    #allocation15 [shape = 's32[1]{0}', space=sflag, size = 0x4, scoped, tag = 'scoped memory for tpu_custom_call.1']
    #allocation16 [shape = 'u8[1024]{0}', space=vmem, size = 0x400, scoped, tag = 'output window, operand 0, single buffered']
    %19 = vsyncpa [#allocation6], 0
    %s20 = scalar_lea.sflag [#allocation6], 1
    %21 = vsyncpa %s20, 0
    %22 = vsyncpa [#allocation9], 0
    %s23 = scalar_lea.sflag [#allocation9], 1
    %24 = vsyncpa %s23, 0
    %25 = vsyncpa [#allocation12], 0
    %s26 = scalar_lea.sflag [#allocation12], 1
    %27 = vsyncpa %s26, 0
    %28 = vsyncpa [#allocation15], 0
    %29 = vsyncpa [#allocation7], 0
    loop: start=0, step=1, limit=4
    $region2: #{tpu_custom_call.1} parent=1 // loop_pre_header
      _
    $region3: #{tpu_custom_call.1} parent=1 // loop_header
      %s31 = sphi 0, %s35
      %p32 = scmp.ge.s32.totalorder %s31, 4
      %s39 = sphi 0, %s39
      %s41 = sphi 0, %s39
      %s42 = sphi 0, %s41
      %s56 = sphi 0, %s42
      %s62 = sphi 0, %s64
      %s65 = sphi 0, %s62
      %s66 = sphi 0, %s65
      %s82 = sphi 0, %s66
      %s88 = sphi 0, %s90
      %s91 = sphi 0, %s88
      %s92 = sphi 0, %s91
      %s108 = sphi 0, %s92
      %s114 = sphi 0, %s116
      %s117 = sphi 0, %s114
      %s118 = sphi 0, %s117
      %s134 = sphi 0, %s118
      %s140 = sphi 0, %s142
      %s143 = sphi 0, %s140
      %s144 = sphi 0, %s143
      %s160 = sphi 0, %s144
      %s166 = sphi 0, %s168
      %s169 = sphi 0, %s166
      %s170 = sphi 0, %s169
      %s186 = sphi 0, %s170
      %s192 = sphi 0, %s194
      %s195 = sphi 0, %s192
      %s196 = sphi 0, %s195
      %s212 = sphi 0, %s196
      %s216 = sphi 0, %s216
      %s218 = sphi 0, %s216
      %s219 = sphi 0, %s218
      %s233 = sphi 0, %s219
      %s237 = sphi 0, %s237
      %s239 = sphi 0, %s237
      %s240 = sphi 0, %s239
      %s254 = sphi 0, %s240
      %s258 = sphi 0, %s258
      %s260 = sphi 0, %s258
      %s261 = sphi 0, %s260
      %s275 = sphi 0, %s261
      %s279 = sphi 0, %s279
      %s281 = sphi 0, %s279
      %s282 = sphi 0, %s281
      %s296 = sphi 0, %s282
      %s300 = sphi 0, %s300
      %s302 = sphi 0, %s300
      %s303 = sphi 0, %s302
      %s317 = sphi 0, %s303
    $region4: #{tpu_custom_call.1} parent=1 // loop_header_branch
      %34 = sbr.rel (%p32) target = $region8
    $region5: #{tpu_custom_call.1} parent=1 // loop_body
      %s36 = ssub.s32 %s31, 1
      %s37 = ssub.s32 %s31, 2
      %s38 = sadd.s32 %s31, 1
      %s40 = sadd.s32 %s39, 1
      %p43 = scmp.eq.s32.totalorder %s31, 1
      %p44 = scmp.ne.s32.totalorder %s39, %s41
      %p45 = scmp.eq.s32.totalorder %s31, 0
      %p46 = por %p44, %p45
      %p47 = scmp.ne.s32.totalorder %s39, %s41
      %p48 = scmp.eq.s32.totalorder %s36, 1
      %p49 = por %p47, %p48
      %p50 = scmp.ne.s32.totalorder %s41, %s42
      %p51 = scmp.eq.s32.totalorder %s36, 0
      %p52 = por %p50, %p51
      %p53 = scmp.ne.s32.totalorder %s41, %s42
      %p54 = scmp.eq.s32.totalorder %s37, 1
      %p55 = por %p53, %p54
      %p57 = scmp.ne.s32.totalorder %s42, %s56
      %p58 = scmp.eq.s32.totalorder %s37, 0
      %p59 = por %p57, %p58
      %s60 = ssub.s32 %s31, %s38
      %p61 = scmp.eq.s32.totalorder %s60, 0
      %s63 = sadd.s32 %s62, 1
      %s64 = scalar_select %p61, %s62, %s63
      %p67 = pneg %p61
      %p68 = scmp.eq.s32.totalorder %s31, 1
      %p69 = por %p67, %p68
      %p70 = scmp.ne.s32.totalorder %s62, %s65
      %p71 = scmp.eq.s32.totalorder %s31, 0
      %p72 = por %p70, %p71
      %p73 = scmp.ne.s32.totalorder %s62, %s65
      %p74 = scmp.eq.s32.totalorder %s36, 1
      %p75 = por %p73, %p74
      %p76 = scmp.ne.s32.totalorder %s65, %s66
      %p77 = scmp.eq.s32.totalorder %s36, 0
      %p78 = por %p76, %p77
      %p79 = scmp.ne.s32.totalorder %s65, %s66
      %p80 = scmp.eq.s32.totalorder %s37, 1
      %p81 = por %p79, %p80
      %p83 = scmp.ne.s32.totalorder %s66, %s82
      %p84 = scmp.eq.s32.totalorder %s37, 0
      %p85 = por %p83, %p84
      %s86 = ssub.s32 %s31, %s38
      %p87 = scmp.eq.s32.totalorder %s86, 0
      %s89 = sadd.s32 %s88, 1
      %s90 = scalar_select %p87, %s88, %s89
      %p93 = pneg %p87
      %p94 = scmp.eq.s32.totalorder %s31, 1
      %p95 = por %p93, %p94
      %p96 = scmp.ne.s32.totalorder %s88, %s91
      %p97 = scmp.eq.s32.totalorder %s31, 0
      %p98 = por %p96, %p97
      %p99 = scmp.ne.s32.totalorder %s88, %s91
      %p100 = scmp.eq.s32.totalorder %s36, 1
      %p101 = por %p99, %p100
      %p102 = scmp.ne.s32.totalorder %s91, %s92
      %p103 = scmp.eq.s32.totalorder %s36, 0
      %p104 = por %p102, %p103
      %p105 = scmp.ne.s32.totalorder %s91, %s92
      %p106 = scmp.eq.s32.totalorder %s37, 1
      %p107 = por %p105, %p106
      %p109 = scmp.ne.s32.totalorder %s92, %s108
      %p110 = scmp.eq.s32.totalorder %s37, 0
      %p111 = por %p109, %p110
      %s112 = ssub.s32 %s31, %s38
      %p113 = scmp.eq.s32.totalorder %s112, 0
      %s115 = sadd.s32 %s114, 1
      %s116 = scalar_select %p113, %s114, %s115
      %p119 = pneg %p113
      %p120 = scmp.eq.s32.totalorder %s31, 1
      %p121 = por %p119, %p120
      %p122 = scmp.ne.s32.totalorder %s114, %s117
      %p123 = scmp.eq.s32.totalorder %s31, 0
      %p124 = por %p122, %p123
      %p125 = scmp.ne.s32.totalorder %s114, %s117
      %p126 = scmp.eq.s32.totalorder %s36, 1
      %p127 = por %p125, %p126
      %p128 = scmp.ne.s32.totalorder %s117, %s118
      %p129 = scmp.eq.s32.totalorder %s36, 0
      %p130 = por %p128, %p129
      %p131 = scmp.ne.s32.totalorder %s117, %s118
      %p132 = scmp.eq.s32.totalorder %s37, 1
      %p133 = por %p131, %p132
      %p135 = scmp.ne.s32.totalorder %s118, %s134
      %p136 = scmp.eq.s32.totalorder %s37, 0
      %p137 = por %p135, %p136
      %s138 = ssub.s32 %s31, %s38
      %p139 = scmp.eq.s32.totalorder %s138, 0
      %s141 = sadd.s32 %s140, 1
      %s142 = scalar_select %p139, %s140, %s141
      %p145 = pneg %p139
      %p146 = scmp.eq.s32.totalorder %s31, 1
      %p147 = por %p145, %p146
      %p148 = scmp.ne.s32.totalorder %s140, %s143
      %p149 = scmp.eq.s32.totalorder %s31, 0
      %p150 = por %p148, %p149
      %p151 = scmp.ne.s32.totalorder %s140, %s143
      %p152 = scmp.eq.s32.totalorder %s36, 1
      %p153 = por %p151, %p152
      %p154 = scmp.ne.s32.totalorder %s143, %s144
      %p155 = scmp.eq.s32.totalorder %s36, 0
      %p156 = por %p154, %p155
      %p157 = scmp.ne.s32.totalorder %s143, %s144
      %p158 = scmp.eq.s32.totalorder %s37, 1
      %p159 = por %p157, %p158
      %p161 = scmp.ne.s32.totalorder %s144, %s160
      %p162 = scmp.eq.s32.totalorder %s37, 0
      %p163 = por %p161, %p162
      %s164 = ssub.s32 %s31, %s38
      %p165 = scmp.eq.s32.totalorder %s164, 0
      %s167 = sadd.s32 %s166, 1
      %s168 = scalar_select %p165, %s166, %s167
      %p171 = pneg %p165
      %p172 = scmp.eq.s32.totalorder %s31, 1
      %p173 = por %p171, %p172
      %p174 = scmp.ne.s32.totalorder %s166, %s169
      %p175 = scmp.eq.s32.totalorder %s31, 0
      %p176 = por %p174, %p175
      %p177 = scmp.ne.s32.totalorder %s166, %s169
      %p178 = scmp.eq.s32.totalorder %s36, 1
      %p179 = por %p177, %p178
      %p180 = scmp.ne.s32.totalorder %s169, %s170
      %p181 = scmp.eq.s32.totalorder %s36, 0
      %p182 = por %p180, %p181
      %p183 = scmp.ne.s32.totalorder %s169, %s170
      %p184 = scmp.eq.s32.totalorder %s37, 1
      %p185 = por %p183, %p184
      %p187 = scmp.ne.s32.totalorder %s170, %s186
      %p188 = scmp.eq.s32.totalorder %s37, 0
      %p189 = por %p187, %p188
      %s190 = ssub.s32 %s31, %s38
      %p191 = scmp.eq.s32.totalorder %s190, 0
      %s193 = sadd.s32 %s192, 1
      %s194 = scalar_select %p191, %s192, %s193
      %p197 = pneg %p191
      %p198 = scmp.eq.s32.totalorder %s31, 1
      %p199 = por %p197, %p198
      %p200 = scmp.ne.s32.totalorder %s192, %s195
      %p201 = scmp.eq.s32.totalorder %s31, 0
      %p202 = por %p200, %p201
      %p203 = scmp.ne.s32.totalorder %s192, %s195
      %p204 = scmp.eq.s32.totalorder %s36, 1
      %p205 = por %p203, %p204
      %p206 = scmp.ne.s32.totalorder %s195, %s196
      %p207 = scmp.eq.s32.totalorder %s36, 0
      %p208 = por %p206, %p207
      %p209 = scmp.ne.s32.totalorder %s195, %s196
      %p210 = scmp.eq.s32.totalorder %s37, 1
      %p211 = por %p209, %p210
      %p213 = scmp.ne.s32.totalorder %s196, %s212
      %p214 = scmp.eq.s32.totalorder %s37, 0
      %p215 = por %p213, %p214
      %s217 = sadd.s32 %s216, 1
      %p220 = scmp.eq.s32.totalorder %s31, 1
      %p221 = scmp.ne.s32.totalorder %s216, %s218
      %p222 = scmp.eq.s32.totalorder %s31, 0
      %p223 = por %p221, %p222
      %p224 = scmp.ne.s32.totalorder %s216, %s218
      %p225 = scmp.eq.s32.totalorder %s36, 1
      %p226 = por %p224, %p225
      %p227 = scmp.ne.s32.totalorder %s218, %s219
      %p228 = scmp.eq.s32.totalorder %s36, 0
      %p229 = por %p227, %p228
      %p230 = scmp.ne.s32.totalorder %s218, %s219
      %p231 = scmp.eq.s32.totalorder %s37, 1
      %p232 = por %p230, %p231
      %p234 = scmp.ne.s32.totalorder %s219, %s233
      %p235 = scmp.eq.s32.totalorder %s37, 0
      %p236 = por %p234, %p235
      %s238 = sadd.s32 %s237, 1
      %p241 = scmp.eq.s32.totalorder %s31, 1
      %p242 = scmp.ne.s32.totalorder %s237, %s239
      %p243 = scmp.eq.s32.totalorder %s31, 0
      %p244 = por %p242, %p243
      %p245 = scmp.ne.s32.totalorder %s237, %s239
      %p246 = scmp.eq.s32.totalorder %s36, 1
      %p247 = por %p245, %p246
      %p248 = scmp.ne.s32.totalorder %s239, %s240
      %p249 = scmp.eq.s32.totalorder %s36, 0
      %p250 = por %p248, %p249
      %p251 = scmp.ne.s32.totalorder %s239, %s240
      %p252 = scmp.eq.s32.totalorder %s37, 1
      %p253 = por %p251, %p252
      %p255 = scmp.ne.s32.totalorder %s240, %s254
      %p256 = scmp.eq.s32.totalorder %s37, 0
      %p257 = por %p255, %p256
      %s259 = sadd.s32 %s258, 1
      %p262 = scmp.eq.s32.totalorder %s31, 1
      %p263 = scmp.ne.s32.totalorder %s258, %s260
      %p264 = scmp.eq.s32.totalorder %s31, 0
      %p265 = por %p263, %p264
      %p266 = scmp.ne.s32.totalorder %s258, %s260
      %p267 = scmp.eq.s32.totalorder %s36, 1
      %p268 = por %p266, %p267
      %p269 = scmp.ne.s32.totalorder %s260, %s261
      %p270 = scmp.eq.s32.totalorder %s36, 0
      %p271 = por %p269, %p270
      %p272 = scmp.ne.s32.totalorder %s260, %s261
      %p273 = scmp.eq.s32.totalorder %s37, 1
      %p274 = por %p272, %p273
      %p276 = scmp.ne.s32.totalorder %s261, %s275
      %p277 = scmp.eq.s32.totalorder %s37, 0
      %p278 = por %p276, %p277
      %s280 = sadd.s32 %s279, 1
      %p283 = scmp.eq.s32.totalorder %s31, 1
      %p284 = scmp.ne.s32.totalorder %s279, %s281
      %p285 = scmp.eq.s32.totalorder %s31, 0
      %p286 = por %p284, %p285
      %p287 = scmp.ne.s32.totalorder %s279, %s281
      %p288 = scmp.eq.s32.totalorder %s36, 1
      %p289 = por %p287, %p288
      %p290 = scmp.ne.s32.totalorder %s281, %s282
      %p291 = scmp.eq.s32.totalorder %s36, 0
      %p292 = por %p290, %p291
      %p293 = scmp.ne.s32.totalorder %s281, %s282
      %p294 = scmp.eq.s32.totalorder %s37, 1
      %p295 = por %p293, %p294
      %p297 = scmp.ne.s32.totalorder %s282, %s296
      %p298 = scmp.eq.s32.totalorder %s37, 0
      %p299 = por %p297, %p298
      %s301 = sadd.s32 %s300, 1
      %p304 = scmp.eq.s32.totalorder %s31, 1
      %p305 = scmp.ne.s32.totalorder %s300, %s302
      %p306 = scmp.eq.s32.totalorder %s31, 0
      %p307 = por %p305, %p306
      %p308 = scmp.ne.s32.totalorder %s300, %s302
      %p309 = scmp.eq.s32.totalorder %s36, 1
      %p310 = por %p308, %p309
      %p311 = scmp.ne.s32.totalorder %s302, %s303
      %p312 = scmp.eq.s32.totalorder %s36, 0
      %p313 = por %p311, %p312
      %p314 = scmp.ne.s32.totalorder %s302, %s303
      %p315 = scmp.eq.s32.totalorder %s37, 1
      %p316 = por %p314, %p315
      %p318 = scmp.ne.s32.totalorder %s303, %s317
      %p319 = scmp.eq.s32.totalorder %s37, 0
      %p320 = por %p318, %p319
      %p321 = scmp.le.s32.totalorder 1, %s31
      %p322 = scmp.lt.s32.totalorder %s31, 3
      %p323 = pnand %p321, %p322
      %p324 = pneg %p323
      // Predicated region
      $region9: #{tpu_custom_call.1} parent=5 // pred_check
        _
      $region10: #{tpu_custom_call.1} parent=5 // pred_check_branch
        %326 = sbr.rel (%p323) target = $region12
      $region11: #{tpu_custom_call.1} parent=5 // pred_region
        %s327 = ssub.s32 %s31, 1
        // Predicated region
        $region13: #{tpu_custom_call.1} parent=11 // pred_check
          %p328 = pneg %p52
        $region14: #{tpu_custom_call.1} parent=11 // pred_check_branch
          %330 = sbr.rel (%p328) target = $region16
        $region15: #{tpu_custom_call.1} parent=11 // pred_region
          _
        $region16: #{tpu_custom_call.1} parent=11 // pred_fallthru
          _
        // Predicated region
        $region17: #{tpu_custom_call.1} parent=11 // pred_check
          %p331 = pneg %p229
        $region18: #{tpu_custom_call.1} parent=11 // pred_check_branch
          %333 = sbr.rel (%p331) target = $region20
        $region19: #{tpu_custom_call.1} parent=11 // pred_region
          %s335 = ssub.s32 2048, 2048
          %336 = vsyncadd [#allocation15], %s335
          %s337 = sshll.u32 [#allocation14], 4
          %s338 = int_to_ptr.vmem [resolvable:$true] %s337
          %343 = dma.hbm_to_vmem [thread:$0]  %s8, 2048, %s338, [#allocation15], 128, 128, 8
        $region20: #{tpu_custom_call.1} parent=11 // pred_fallthru
          _
        // Predicated region
        $region21: #{tpu_custom_call.1} parent=11 // pred_check
          %p344 = pneg %p250
        $region22: #{tpu_custom_call.1} parent=11 // pred_check_branch
          %346 = sbr.rel (%p344) target = $region24
        $region23: #{tpu_custom_call.1} parent=11 // pred_region
          _
        $region24: #{tpu_custom_call.1} parent=11 // pred_fallthru
          _
        // Predicated region
        $region25: #{tpu_custom_call.1} parent=11 // pred_check
          %p347 = pneg %p271
        $region26: #{tpu_custom_call.1} parent=11 // pred_check_branch
          %349 = sbr.rel (%p347) target = $region28
        $region27: #{tpu_custom_call.1} parent=11 // pred_region
          _
        $region28: #{tpu_custom_call.1} parent=11 // pred_fallthru
          _
        // Predicated region
        $region29: #{tpu_custom_call.1} parent=11 // pred_check
          %p350 = pneg %p292
        $region30: #{tpu_custom_call.1} parent=11 // pred_check_branch
          %352 = sbr.rel (%p350) target = $region32
        $region31: #{tpu_custom_call.1} parent=11 // pred_region
          _
        $region32: #{tpu_custom_call.1} parent=11 // pred_fallthru
          _
      $region12: #{tpu_custom_call.1} parent=5 // pred_fallthru
        _
      %p353 = scmp.lt.s32.totalorder %s31, 2
      // Predicated region
      $region33: #{tpu_custom_call.1} parent=5 // pred_check
        %p354 = pneg %p353
      $region34: #{tpu_custom_call.1} parent=5 // pred_check_branch
        %356 = sbr.rel (%p354) target = $region36
      $region35: #{tpu_custom_call.1} parent=5 // pred_region
        // Predicated region
        $region37: #{tpu_custom_call.1} parent=35 // pred_check
          %p357 = pneg %p72
        $region38: #{tpu_custom_call.1} parent=35 // pred_check_branch
          %359 = sbr.rel (%p357) target = $region40
        $region39: #{tpu_custom_call.1} parent=35 // pred_region
          %s360 = sand.u32 %s62, 1
          %s361 = scalar_lea.sflag [#allocation6], %s360
          %s362 = sand.u32 %s62, 1
          %s363 = smul.addr %s362, 192
          %s364 = scalar_lea.vmem [#allocation5], %s363
          %s366 = ssub.s32 3072, 3072
          %367 = vsyncadd %s361, %s366
          %s368 = smul.addr %s31, 48
          %s369 = smul.addr %s368, 64
          %s370 = scalar_lea.hbm %s2, %s369
          %s371 = sshll.u32 %s364, 4
          %s372 = int_to_ptr.vmem [resolvable:$true] %s371
          %377 = dma.hbm_to_vmem [thread:$0]  %s370, 3072, %s372, %s361, 192, 192, 12
        $region40: #{tpu_custom_call.1} parent=35 // pred_fallthru
          _
        // Predicated region
        $region41: #{tpu_custom_call.1} parent=35 // pred_check
          %p378 = pneg %p98
        $region42: #{tpu_custom_call.1} parent=35 // pred_check_branch
          %380 = sbr.rel (%p378) target = $region44
        $region43: #{tpu_custom_call.1} parent=35 // pred_region
          %s381 = sand.u32 %s31, 1
          %s382 = scalar_lea.sflag [#allocation9], %s381
          %s383 = sand.u32 %s88, 1
          %s384 = smul.addr %s383, 64
          %s385 = scalar_lea.vmem [#allocation8], %s384
          %s387 = ssub.s32 1024, 1024
          %388 = vsyncadd %s382, %s387
          %s389 = smul.addr %s31, 16
          %s390 = smul.addr %s389, 64
          %s391 = scalar_lea.hbm %s3, %s390
          %s392 = sshll.u32 %s385, 4
          %s393 = int_to_ptr.vmem [resolvable:$true] %s392
          %398 = dma.hbm_to_vmem [thread:$0]  %s391, 1024, %s393, %s382, 64, 64, 4
        $region44: #{tpu_custom_call.1} parent=35 // pred_fallthru
          _
        // Predicated region
        $region45: #{tpu_custom_call.1} parent=35 // pred_check
          %p399 = pneg %p124
        $region46: #{tpu_custom_call.1} parent=35 // pred_check_branch
          %401 = sbr.rel (%p399) target = $region48
        $region47: #{tpu_custom_call.1} parent=35 // pred_region
          %s402 = sand.u32 %s31, 1
          %s403 = scalar_lea.sflag [#allocation9], %s402
          %s404 = sand.u32 %s114, 1
          %s405 = smul.addr %s404, 128
          %s406 = scalar_lea.vmem [#allocation10], %s405
          %s408 = ssub.s32 2048, 2048
          %409 = vsyncadd %s403, %s408
          %s410 = smul.addr %s31, 32
          %s411 = smul.addr %s410, 64
          %s412 = scalar_lea.hbm %s4, %s411
          %s413 = sshll.u32 %s406, 4
          %s414 = int_to_ptr.vmem [resolvable:$true] %s413
          %419 = dma.hbm_to_vmem [thread:$0]  %s412, 2048, %s414, %s403, 128, 128, 8
        $region48: #{tpu_custom_call.1} parent=35 // pred_fallthru
          _
        // Predicated region
        $region49: #{tpu_custom_call.1} parent=35 // pred_check
          %p420 = pneg %p150
        $region50: #{tpu_custom_call.1} parent=35 // pred_check_branch
          %422 = sbr.rel (%p420) target = $region52
        $region51: #{tpu_custom_call.1} parent=35 // pred_region
          %s423 = sand.u32 %s31, 1
          %s424 = scalar_lea.sflag [#allocation12], %s423
          %s425 = sand.u32 %s140, 1
          %s426 = smul.addr %s425, 128
          %s427 = scalar_lea.vmem [#allocation11], %s426
          %s429 = ssub.s32 2048, 2048
          %430 = vsyncadd %s424, %s429
          %s431 = smul.addr %s31, 32
          %s432 = smul.addr %s431, 64
          %s433 = scalar_lea.hbm %s5, %s432
          %s434 = sshll.u32 %s427, 4
          %s435 = int_to_ptr.vmem [resolvable:$true] %s434
          %440 = dma.hbm_to_vmem [thread:$0]  %s433, 2048, %s435, %s424, 64, 64, 4
        $region52: #{tpu_custom_call.1} parent=35 // pred_fallthru
          _
        // Predicated region
        $region53: #{tpu_custom_call.1} parent=35 // pred_check
          %p441 = pneg %p176
        $region54: #{tpu_custom_call.1} parent=35 // pred_check_branch
          %443 = sbr.rel (%p441) target = $region56
        $region55: #{tpu_custom_call.1} parent=35 // pred_region
          %p444 = scmp.lt.s32.totalorder %s31, 1
          %s445 = scalar_select %p444, %s31, 1
          %s446 = smul.addr %s445, 2
          %s447 = scalar_lea.vmem %s6, %s446
        $region56: #{tpu_custom_call.1} parent=35 // pred_fallthru
          _
        // Predicated region
        $region57: #{tpu_custom_call.1} parent=35 // pred_check
          %p448 = pneg %p202
        $region58: #{tpu_custom_call.1} parent=35 // pred_check_branch
          %450 = sbr.rel (%p448) target = $region60
        $region59: #{tpu_custom_call.1} parent=35 // pred_region
          %s451 = sand.u32 %s31, 1
          %s452 = scalar_lea.sflag [#allocation12], %s451
          %s453 = sand.u32 %s192, 1
          %s454 = smul.addr %s453, 16
          %s455 = scalar_lea.vmem [#allocation13], %s454
          %s457 = ssub.s32 256, 256
          %458 = vsyncadd %s452, %s457
          %s459 = smul.addr %s31, 2
          %s460 = smul.addr %s459, 128
          %s461 = scalar_lea.hbm %s7, %s460
          %s462 = sshll.u32 %s455, 4
          %s463 = int_to_ptr.vmem [resolvable:$true] %s462
          %468 = dma.hbm_to_vmem [thread:$0]  %s461, 256, %s463, %s452, 128, 128, 8
        $region60: #{tpu_custom_call.1} parent=35 // pred_fallthru
          _
      $region36: #{tpu_custom_call.1} parent=5 // pred_fallthru
        _
      %p469 = scmp.le.s32.totalorder 1, %s31
      %p470 = scmp.lt.s32.totalorder %s31, 3
      %p471 = pnand %p469, %p470
      %p472 = pneg %p471
      // Predicated region
      $region61: #{tpu_custom_call.1} parent=5 // pred_check
        _
      $region62: #{tpu_custom_call.1} parent=5 // pred_check_branch
        %474 = sbr.rel (%p471) target = $region64
      $region63: #{tpu_custom_call.1} parent=5 // pred_region
        %s475 = ssub.s32 %s31, 1
        %s476 = sand.u32 %s65, 1
        %s477 = scalar_lea.sflag [#allocation6], %s476
        %s478 = sand.u32 %s65, 1
        %s479 = smul.addr %s478, 192
        %s480 = scalar_lea.vmem [#allocation5], %s479
        // Predicated region
        $region65: #{tpu_custom_call.1} parent=63 // pred_check
          %p481 = pneg %p78
        $region66: #{tpu_custom_call.1} parent=63 // pred_check_branch
          %483 = sbr.rel (%p481) target = $region68
        $region67: #{tpu_custom_call.1} parent=63 // pred_region
          %484 = dma.done %s477, 3072
        $region68: #{tpu_custom_call.1} parent=63 // pred_fallthru
          _
        %s485 = sand.u32 %s36, 1
        %s486 = scalar_lea.sflag [#allocation9], %s485
        %s487 = sand.u32 %s91, 1
        %s488 = smul.addr %s487, 64
        %s489 = scalar_lea.vmem [#allocation8], %s488
        // Predicated region
        $region69: #{tpu_custom_call.1} parent=63 // pred_check
          %p490 = pneg %p104
        $region70: #{tpu_custom_call.1} parent=63 // pred_check_branch
          %492 = sbr.rel (%p490) target = $region72
        $region71: #{tpu_custom_call.1} parent=63 // pred_region
          %493 = dma.done %s486, 1024
        $region72: #{tpu_custom_call.1} parent=63 // pred_fallthru
          _
        %s494 = sand.u32 %s36, 1
        %s495 = scalar_lea.sflag [#allocation9], %s494
        %s496 = sand.u32 %s117, 1
        %s497 = smul.addr %s496, 128
        %s498 = scalar_lea.vmem [#allocation10], %s497
        // Predicated region
        $region73: #{tpu_custom_call.1} parent=63 // pred_check
          %p499 = pneg %p130
        $region74: #{tpu_custom_call.1} parent=63 // pred_check_branch
          %501 = sbr.rel (%p499) target = $region76
        $region75: #{tpu_custom_call.1} parent=63 // pred_region
          %502 = dma.done %s495, 2048
        $region76: #{tpu_custom_call.1} parent=63 // pred_fallthru
          _
        %s503 = sand.u32 %s36, 1
        %s504 = scalar_lea.sflag [#allocation12], %s503
        %s505 = sand.u32 %s143, 1
        %s506 = smul.addr %s505, 128
        %s507 = scalar_lea.vmem [#allocation11], %s506
        // Predicated region
        $region77: #{tpu_custom_call.1} parent=63 // pred_check
          %p508 = pneg %p156
        $region78: #{tpu_custom_call.1} parent=63 // pred_check_branch
          %510 = sbr.rel (%p508) target = $region80
        $region79: #{tpu_custom_call.1} parent=63 // pred_region
          %511 = dma.done %s504, 2048
        $region80: #{tpu_custom_call.1} parent=63 // pred_fallthru
          _
        %s512 = sand.u32 %s36, 1
        %s513 = scalar_lea.sflag [#allocation12], %s512
        %s514 = sand.u32 %s195, 1
        %s515 = smul.addr %s514, 16
        %s516 = scalar_lea.vmem [#allocation13], %s515
        // Predicated region
        $region81: #{tpu_custom_call.1} parent=63 // pred_check
          %p517 = pneg %p208
        $region82: #{tpu_custom_call.1} parent=63 // pred_check_branch
          %519 = sbr.rel (%p517) target = $region84
        $region83: #{tpu_custom_call.1} parent=63 // pred_region
          %520 = dma.done %s513, 256
        $region84: #{tpu_custom_call.1} parent=63 // pred_fallthru
          _
        // Predicated region
        $region85: #{tpu_custom_call.1} parent=63 // pred_check
          %p521 = pneg %p229
        $region86: #{tpu_custom_call.1} parent=63 // pred_check_branch
          %523 = sbr.rel (%p521) target = $region88
        $region87: #{tpu_custom_call.1} parent=63 // pred_region
          %524 = dma.done [#allocation15], 2048
        $region88: #{tpu_custom_call.1} parent=63 // pred_fallthru
          _
        %p525 = pneg %p52
        %p526 = pneg %p49
        %s527 = sand.u32 %s65, 1
        %s528 = scalar_lea.sflag [#allocation6], %s527
        %s529 = sand.u32 %s65, 1
        %s530 = smul.addr %s529, 192
        %s531 = scalar_lea.vmem [#allocation5], %s530
        %p532 = pneg %p78
        %p533 = pneg %p75
        %s534 = sand.u32 %s36, 1
        %s535 = scalar_lea.sflag [#allocation9], %s534
        %s536 = sand.u32 %s91, 1
        %s537 = smul.addr %s536, 64
        %s538 = scalar_lea.vmem [#allocation8], %s537
        %p539 = pneg %p104
        %p540 = pneg %p101
        %s541 = sand.u32 %s36, 1
        %s542 = scalar_lea.sflag [#allocation9], %s541
        %s543 = sand.u32 %s117, 1
        %s544 = smul.addr %s543, 128
        %s545 = scalar_lea.vmem [#allocation10], %s544
        %p546 = pneg %p130
        %p547 = pneg %p127
        %s548 = sand.u32 %s36, 1
        %s549 = scalar_lea.sflag [#allocation12], %s548
        %s550 = sand.u32 %s143, 1
        %s551 = smul.addr %s550, 128
        %s552 = scalar_lea.vmem [#allocation11], %s551
        %p553 = pneg %p156
        %p554 = pneg %p153
        %p555 = scmp.lt.s32.totalorder %s36, 1
        %s556 = scalar_select %p555, %s36, 1
        %s557 = smul.addr %s556, 2
        %s558 = scalar_lea.vmem %s6, %s557
        %p559 = pneg %p182
        %p560 = pneg %p179
        %s561 = sand.u32 %s36, 1
        %s562 = scalar_lea.sflag [#allocation12], %s561
        %s563 = sand.u32 %s195, 1
        %s564 = smul.addr %s563, 16
        %s565 = scalar_lea.vmem [#allocation13], %s564
        %p566 = pneg %p208
        %p567 = pneg %p205
        %p568 = pneg %p229
        %p569 = pneg %p226
        %p570 = pneg %p250
        %p571 = pneg %p247
        %p572 = pneg %p271
        %p573 = pneg %p268
        %p574 = pneg %p292
        %p575 = pneg %p289
        %p576 = pneg %p313
        %p577 = pneg %p310
        %p578 = scmp.lt.s32.totalorder %s36, 1
        %s579 = scalar_select %p578, %s36, 1
        %s580 = smul.addr %s579, 2
        %s581 = scalar_lea.vmem %s6, %s580
        %p583 = scmp.eq.s32.totalorder %s36, 0
        // Predicated region
        $region89: #{tpu_custom_call.1} parent=63 // pred_check
          %p584 = pneg %p583
        $region90: #{tpu_custom_call.1} parent=63 // pred_check_branch
          %586 = sbr.rel (%p584) target = $region92
        $region91: #{tpu_custom_call.1} parent=63 // pred_region
          // Predicated region
          $region93: #{tpu_custom_call.1} parent=91 // pred_check
            _
          $region94: #{tpu_custom_call.1} parent=91 // pred_check_branch
            %588 = sbr.rel target = $region96
          $region95: #{tpu_custom_call.1} parent=91 // pred_region
            %589 = sst [smem:[#allocation19]] [#allocation18]
            %590 = sst [smem:[#allocation20]] [#allocation17]
          $region96: #{tpu_custom_call.1} parent=91 // pred_fallthru
            _
          %592 = shalt.err (0)
          %s594 = sshll.u32 [#allocation2], 4
          %s595 = int_to_ptr.vmem [resolvable:$true] %s594
          %597 = dma.hbm_to_vmem [thread:$0]  %s0, 256, %s595, [#allocation3]
          %s598 = smul.u32 16, 1
          %s599 = sshll.u32 %s598, 4
          %600 = dma.done [#allocation3], %s599
        $region92: #{tpu_custom_call.1} parent=63 // pred_fallthru
          _
        %v601 = vld [vmem:[#allocation2] sm:$0xff]
        %v602 = vld [vmem:[#allocation2 + $0x8] sm:$0xff]
        %v603 = vpack.c.bf16 %v602, %v601
        %v604 = vld [vmem:[%s1] sm:$0x1]
        %v605 = vld [vmem:[%s1 + $0x1] sm:$0x1]
        %v606 = vld [vmem:[%s516] sm:$0xff]
        %v607 = vld [vmem:[%s516 + $0x8] sm:$0xff]
        %v608 = vld [vmem:[%s480] sm:$0xff]
        %v609 = vld [vmem:[%s480 + $0x8] sm:$0xf]
        %v610 = vld [vmem:[%s480 + $0xc] sm:$0xff]
        %v611 = vld [vmem:[%s480 + $0x14] sm:$0xf]
        %v612 = vld [vmem:[%s480 + $0x18] sm:$0xff]
        %v613 = vld [vmem:[%s480 + $0x20] sm:$0xf]
        %v614 = vld [vmem:[%s480 + $0x24] sm:$0xff]
        %v615 = vld [vmem:[%s480 + $0x2c] sm:$0xf]
        %v616 = vld [vmem:[%s480 + $0x30] sm:$0xff]
        %v617 = vld [vmem:[%s480 + $0x38] sm:$0xf]
        %v618 = vld [vmem:[%s480 + $0x3c] sm:$0xff]
        %v619 = vld [vmem:[%s480 + $0x44] sm:$0xf]
        %v620 = vld [vmem:[%s480 + $0x48] sm:$0xff]
        %v621 = vld [vmem:[%s480 + $0x50] sm:$0xf]
        %v622 = vld [vmem:[%s480 + $0x54] sm:$0xff]
        %v623 = vld [vmem:[%s480 + $0x5c] sm:$0xf]
        %v624 = vld [vmem:[%s480 + $0x60] sm:$0xff]
        %v625 = vld [vmem:[%s480 + $0x68] sm:$0xf]
        %v626 = vld [vmem:[%s480 + $0x6c] sm:$0xff]
        %v627 = vld [vmem:[%s480 + $0x74] sm:$0xf]
        %v628 = vld [vmem:[%s480 + $0x78] sm:$0xff]
        %v629 = vld [vmem:[%s480 + $0x80] sm:$0xf]
        %v630 = vld [vmem:[%s480 + $0x84] sm:$0xff]
        %v631 = vld [vmem:[%s480 + $0x8c] sm:$0xf]
        %v632 = vld [vmem:[%s480 + $0x90] sm:$0xff]
        %v633 = vld [vmem:[%s480 + $0x98] sm:$0xf]
        %v634 = vld [vmem:[%s480 + $0x9c] sm:$0xff]
        %v635 = vld [vmem:[%s480 + $0xa4] sm:$0xf]
        %v636 = vld [vmem:[%s480 + $0xa8] sm:$0xff]
        %v637 = vld [vmem:[%s480 + $0xb0] sm:$0xf]
        %v638 = vld [vmem:[%s480 + $0xb4] sm:$0xff]
        %v639 = vld [vmem:[%s480 + $0xbc] sm:$0xf]
        %v672 = vunpack.c.l.b16 %v608
        %v673 = vunpack.c.h.b16 %v608
        %v674 = vunpack.c.l.b16 %v609
        %v675 = vunpack.c.l.b16 %v610
        %v676 = vunpack.c.h.b16 %v610
        %v677 = vunpack.c.l.b16 %v611
        %v678 = vunpack.c.l.b16 %v612
        %v679 = vunpack.c.h.b16 %v612
        %v680 = vunpack.c.l.b16 %v613
        %v681 = vunpack.c.l.b16 %v614
        %v682 = vunpack.c.h.b16 %v614
        %v683 = vunpack.c.l.b16 %v615
        %v684 = vunpack.c.l.b16 %v616
        %v685 = vunpack.c.h.b16 %v616
        %v686 = vunpack.c.l.b16 %v617
        %v687 = vunpack.c.l.b16 %v618
        %v688 = vunpack.c.h.b16 %v618
        %v689 = vunpack.c.l.b16 %v619
        %v690 = vunpack.c.l.b16 %v620
        %v691 = vunpack.c.h.b16 %v620
        %v692 = vunpack.c.l.b16 %v621
        %v693 = vunpack.c.l.b16 %v622
        %v694 = vunpack.c.h.b16 %v622
        %v695 = vunpack.c.l.b16 %v623
        %v696 = vunpack.c.l.b16 %v624
        %v697 = vunpack.c.h.b16 %v624
        %v698 = vunpack.c.l.b16 %v625
        %v699 = vunpack.c.l.b16 %v626
        %v700 = vunpack.c.h.b16 %v626
        %v701 = vunpack.c.l.b16 %v627
        %v702 = vunpack.c.l.b16 %v628
        %v703 = vunpack.c.h.b16 %v628
        %v704 = vunpack.c.l.b16 %v629
        %v705 = vunpack.c.l.b16 %v630
        %v706 = vunpack.c.h.b16 %v630
        %v707 = vunpack.c.l.b16 %v631
        %v708 = vunpack.c.l.b16 %v632
        %v709 = vunpack.c.h.b16 %v632
        %v710 = vunpack.c.l.b16 %v633
        %v711 = vunpack.c.l.b16 %v634
        %v712 = vunpack.c.h.b16 %v634
        %v713 = vunpack.c.l.b16 %v635
        %v714 = vunpack.c.l.b16 %v636
        %v715 = vunpack.c.h.b16 %v636
        %v716 = vunpack.c.l.b16 %v637
        %v717 = vunpack.c.l.b16 %v638
        %v718 = vunpack.c.h.b16 %v638
        %v719 = vunpack.c.l.b16 %v639
        %v720 = vpack.c.b16 %v675, %v672
        %v721 = vpack.c.b16 %v676, %v673
        %v722 = vpack.c.b16 %v677, %v674
        %v723 = vpack.c.b16 %v681, %v678
        %v724 = vpack.c.b16 %v682, %v679
        %v725 = vpack.c.b16 %v683, %v680
        %v726 = vpack.c.b16 %v687, %v684
        %v727 = vpack.c.b16 %v688, %v685
        %v728 = vpack.c.b16 %v689, %v686
        %v729 = vpack.c.b16 %v693, %v690
        %v730 = vpack.c.b16 %v694, %v691
        %v731 = vpack.c.b16 %v695, %v692
        %v732 = vpack.c.b16 %v699, %v696
        %v733 = vpack.c.b16 %v700, %v697
        %v734 = vpack.c.b16 %v701, %v698
        %v735 = vpack.c.b16 %v705, %v702
        %v736 = vpack.c.b16 %v706, %v703
        %v737 = vpack.c.b16 %v707, %v704
        %v738 = vpack.c.b16 %v711, %v708
        %v739 = vpack.c.b16 %v712, %v709
        %v740 = vpack.c.b16 %v713, %v710
        %v741 = vpack.c.b16 %v717, %v714
        %v742 = vpack.c.b16 %v718, %v715
        %v743 = vpack.c.b16 %v719, %v716
        %768 = vmatprep.subr.bf16.mxu0 %v742
        %769 = vmatpush1.bf16.msra.mxu0 %v741
        %770 = vmatprep.subr.bf16.mxu0 %v739
        %771 = vmatpush1.bf16.msra.mxu0 %v738
        %772 = vmatprep.subr.bf16.mxu0 %v736
        %773 = vmatpush1.bf16.msra.mxu0 %v735
        %774 = vmatprep.subr.bf16.mxu0 %v733
        %775 = vmatpush1.bf16.msra.mxu0 %v732
        %776 = vmatprep.subr.bf16.mxu0 %v730
        %777 = vmatpush1.bf16.msra.mxu0 %v729
        %778 = vmatprep.subr.bf16.mxu0 %v727
        %779 = vmatpush1.bf16.msra.mxu0 %v726
        %780 = vmatprep.subr.bf16.mxu0 %v724
        %781 = vmatpush1.bf16.msra.mxu0 %v723
        %782 = vmatprep.subr.bf16.mxu0 %v721
        %783 = vmatpush1.bf16.msra.mxu0 %v720
        %784 = vmatprep.subr.bf16.mxu0 0
        %785 = vmatpush2.bf16.msra.mxu0 0
        %786 = vmatprep.subr.bf16.mxu0 0
        %787 = vmatpush2.bf16.msra.mxu0 0
        %788 = vmatprep.subr.bf16.mxu0 0
        %789 = vmatpush2.bf16.msra.mxu0 0
        %790 = vmatprep.subr.bf16.mxu0 0
        %791 = vmatpush2.bf16.msra.mxu0 0
        %792 = vmatprep.subr.bf16.mxu0 0
        %793 = vmatpush2.bf16.msra.mxu0 0
        %794 = vmatprep.subr.bf16.mxu0 0
        %795 = vmatpush2.bf16.msra.mxu0 0
        %796 = vmatprep.subr.bf16.mxu0 0
        %797 = vmatpush2.bf16.msra.mxu0 0
        %798 = vmatprep.subr.bf16.mxu0 0
        %799 = vmatpush2.bf16.msra.mxu0 0
        %800 = vmatprep.mubr.bf16.mxu0 0
        %801 = vmatmul.mubr.bf16.gmra.mxu0 %v603
        %v802 = vpop.f32.mrf.mxu0
        %v803 = vadd.f32 0.0, %v802
        %v804 = vpop.f32.mrf.mxu0
        %v805 = vadd.f32 0.0, %v804
        %v806 = vpop.f32.mrf.mxu0
        %v807 = vadd.f32 0.0, %v806
        %v808 = vpop.f32.mrf.mxu0
        %v809 = vadd.f32 0.0, %v808
        %810 = vdwg.mxu0
        %811 = vmatprep.subr.bf16.mxu0 0
        %812 = vmatpush1.bf16.msra.mxu0 %v743
        %813 = vmatprep.subr.bf16.mxu0 0
        %814 = vmatpush1.bf16.msra.mxu0 %v740
        %815 = vmatprep.subr.bf16.mxu0 0
        %816 = vmatpush1.bf16.msra.mxu0 %v737
        %817 = vmatprep.subr.bf16.mxu0 0
        %818 = vmatpush1.bf16.msra.mxu0 %v734
        %819 = vmatprep.subr.bf16.mxu0 0
        %820 = vmatpush1.bf16.msra.mxu0 %v731
        %821 = vmatprep.subr.bf16.mxu0 0
        %822 = vmatpush1.bf16.msra.mxu0 %v728
        %823 = vmatprep.subr.bf16.mxu0 0
        %824 = vmatpush1.bf16.msra.mxu0 %v725
        %825 = vmatprep.subr.bf16.mxu0 0
        %826 = vmatpush1.bf16.msra.mxu0 %v722
        %827 = vmatprep.subr.bf16.mxu0 0
        %828 = vmatpush2.bf16.msra.mxu0 0
        %829 = vmatprep.subr.bf16.mxu0 0
        %830 = vmatpush2.bf16.msra.mxu0 0
        %831 = vmatprep.subr.bf16.mxu0 0
        %832 = vmatpush2.bf16.msra.mxu0 0
        %833 = vmatprep.subr.bf16.mxu0 0
        %834 = vmatpush2.bf16.msra.mxu0 0
        %835 = vmatprep.subr.bf16.mxu0 0
        %836 = vmatpush2.bf16.msra.mxu0 0
        %837 = vmatprep.subr.bf16.mxu0 0
        %838 = vmatpush2.bf16.msra.mxu0 0
        %839 = vmatprep.subr.bf16.mxu0 0
        %840 = vmatpush2.bf16.msra.mxu0 0
        %841 = vmatprep.subr.bf16.mxu0 0
        %842 = vmatpush2.bf16.msra.mxu0 0
        %843 = vmatprep.mubr.bf16.mxu0 0
        %844 = vmatmul.mubr.bf16.gmra.mxu0 %v603
        %v845 = vpop.f32.mrf.mxu0
        %v846 = vadd.f32 0.0, %v845
        %v847 = vpop.f32.mrf.mxu0
        %v848 = vpop.f32.mrf.mxu0
        %v849 = vadd.f32 0.0, %v848
        %v850 = vpop.f32.mrf.mxu0
        %851 = vdwg.mxu0
        %v852 = vlaneseq
        %v853 = vshrl.u32 %v852, 7
        %v854 = vsub.s32 0, %v853
        %v855 = vrot.slane %v606, %v854
        %v856 = vadd.f32 %v803, %v855
        %v857 = vadd.f32 %v807, %v855
        %v858 = vpack.c.bf16 %v856, %v856
        %v859 = vpack.c.bf16 %v857, %v857
        %v860 = vlaneseq
        %v861 = vshrl.u32 %v860, 7
        %v862 = vsub.s32 1, %v861
        %v863 = vrot.slane %v606, %v862
        %v864 = vadd.f32 %v805, %v863
        %v865 = vadd.f32 %v809, %v863
        %v866 = vpack.c.bf16 %v864, %v864
        %v867 = vpack.c.bf16 %v865, %v865
        %v868 = vlaneseq
        %v869 = vshrl.u32 %v868, 7
        %v870 = vsub.s32 2, %v869
        %v871 = vrot.slane %v606, %v870
        %v872 = vadd.f32 %v846, %v871
        %v873 = vadd.f32 %v849, %v871
        %v874 = vpack.c.bf16 %v872, %v872
        %v875 = vpack.c.bf16 %v873, %v873
        %vm876 = vcmask 261120
        %v878 = vsel %vm876, %v858, 0
        %v881 = vsel %vm876, %v866, 0
        %883 = vmatprep.subr.bf16.mxu0 0
        %884 = vmatpush1.bf16.xpose.msra.mxu0 0
        %885 = vmatprep.subr.bf16.mxu0 0
        %886 = vmatpush1.bf16.xpose.msra.mxu0 0
        %887 = vmatprep.subr.bf16.mxu0 0
        %888 = vmatpush1.bf16.xpose.msra.mxu0 0
        %889 = vmatprep.subr.bf16.mxu0 0
        %890 = vmatpush1.bf16.xpose.msra.mxu0 0
        %891 = vmatprep.subr.bf16.mxu0 0
        %892 = vmatpush1.bf16.xpose.msra.mxu0 0
        %893 = vmatprep.subr.bf16.mxu0 0
        %894 = vmatpush1.bf16.xpose.msra.mxu0 0
        %895 = vmatprep.subr.bf16.mxu0 0
        %896 = vmatpush1.bf16.xpose.msra.mxu0 0
        %897 = vmatprep.subr.bf16.mxu0 0
        %898 = vmatpush1.bf16.xpose.msra.mxu0 %v881
        %899 = vmatprep.subr.bf16.mxu0 0
        %900 = vmatpush2.bf16.xpose.msra.mxu0 0
        %901 = vmatprep.subr.bf16.mxu0 0
        %902 = vmatpush2.bf16.xpose.msra.mxu0 0
        %903 = vmatprep.subr.bf16.mxu0 0
        %904 = vmatpush2.bf16.xpose.msra.mxu0 0
        %905 = vmatprep.subr.bf16.mxu0 0
        %906 = vmatpush2.bf16.xpose.msra.mxu0 0
        %907 = vmatprep.subr.bf16.mxu0 0
        %908 = vmatpush2.bf16.xpose.msra.mxu0 0
        %909 = vmatprep.subr.bf16.mxu0 0
        %910 = vmatpush2.bf16.xpose.msra.mxu0 0
        %911 = vmatprep.subr.bf16.mxu0 0
        %912 = vmatpush2.bf16.xpose.msra.mxu0 0
        %913 = vmatprep.subr.bf16.mxu0 0
        %914 = vmatpush2.bf16.xpose.msra.mxu0 0
        %915 = vmatprep.mubr.bf16.mxu0 0
        %916 = vmatmul.mubr.bf16.gmra.mxu0 %v878
        %v917 = vpop.f32.mrf.mxu0
        %v918 = vadd.f32 0.0, %v917
        %v919 = vpop.f32.mrf.mxu0
        %v920 = vpop.f32.mrf.mxu0
        %v921 = vpop.f32.mrf.mxu0
        %922 = vdwg.mxu0
        %v924 = vsel %vm876, %v859, 0
        %v927 = vsel %vm876, %v867, 0
        %929 = vmatprep.subr.bf16.mxu0 0
        %930 = vmatpush1.bf16.xpose.msra.mxu0 0
        %931 = vmatprep.subr.bf16.mxu0 0
        %932 = vmatpush1.bf16.xpose.msra.mxu0 0
        %933 = vmatprep.subr.bf16.mxu0 0
        %934 = vmatpush1.bf16.xpose.msra.mxu0 0
        %935 = vmatprep.subr.bf16.mxu0 0
        %936 = vmatpush1.bf16.xpose.msra.mxu0 0
        %937 = vmatprep.subr.bf16.mxu0 0
        %938 = vmatpush1.bf16.xpose.msra.mxu0 0
        %939 = vmatprep.subr.bf16.mxu0 0
        %940 = vmatpush1.bf16.xpose.msra.mxu0 0
        %941 = vmatprep.subr.bf16.mxu0 0
        %942 = vmatpush1.bf16.xpose.msra.mxu0 0
        %943 = vmatprep.subr.bf16.mxu0 0
        %944 = vmatpush1.bf16.xpose.msra.mxu0 %v927
        %945 = vmatprep.subr.bf16.mxu0 0
        %946 = vmatpush2.bf16.xpose.msra.mxu0 0
        %947 = vmatprep.subr.bf16.mxu0 0
        %948 = vmatpush2.bf16.xpose.msra.mxu0 0
        %949 = vmatprep.subr.bf16.mxu0 0
        %950 = vmatpush2.bf16.xpose.msra.mxu0 0
        %951 = vmatprep.subr.bf16.mxu0 0
        %952 = vmatpush2.bf16.xpose.msra.mxu0 0
        %953 = vmatprep.subr.bf16.mxu0 0
        %954 = vmatpush2.bf16.xpose.msra.mxu0 0
        %955 = vmatprep.subr.bf16.mxu0 0
        %956 = vmatpush2.bf16.xpose.msra.mxu0 0
        %957 = vmatprep.subr.bf16.mxu0 0
        %958 = vmatpush2.bf16.xpose.msra.mxu0 0
        %959 = vmatprep.subr.bf16.mxu0 0
        %960 = vmatpush2.bf16.xpose.msra.mxu0 0
        %961 = vmatprep.mubr.bf16.mxu0 0
        %962 = vmatmul.mubr.bf16.gmra.mxu0 %v924
        %v963 = vpop.f32.mrf.mxu0
        %v964 = vadd.f32 0.0, %v963
        %v965 = vpop.f32.mrf.mxu0
        %v966 = vpop.f32.mrf.mxu0
        %v967 = vpop.f32.mrf.mxu0
        %968 = vdwg.mxu0
        %v969 = vmul.f32 %v918, 0.17677669
        %v970 = vmul.f32 %v964, 0.17677669
        %v973 = vlaneseq
        %v974 = vshrl.u32 %v973, 7
        %v975 = vsub.s32 0, %v974
        %v976 = vrot.slane %v604, %v975
        %v977 = vlaneseq
        %v978 = vshrl.u32 %v977, 7
        %v979 = vsub.s32 0, %v978
        %v980 = vrot.slane %v605, %v979
        %v983 = vadd.f32 %v969, %v976
        %v984 = vadd.f32 %v970, %v980
        %vm985 = vcmask 64512
        %v986 = vsel %vm985, %v983, -inf
        %987 = vmax.xlane.f32.xlu0 %v986
        %v988 = vpop.xlane.xlu0 %987
        %v989 = vsel %vm985, %v984, -inf
        %990 = vmax.xlane.f32.xlu0 %v989
        %v991 = vpop.xlane.xlu0 %990
        %v992 = vsub.f32 %v983, %v988
        %v993 = vsub.f32 %v984, %v991
        %v994 = vmul.f32 %v992, 1.442695
        %v995 = vpow.pop %v994
        %v996 = vmul.f32 %v993, 1.442695
        %v997 = vpow.pop %v996
        %v998 = vsel %vm985, %v995, 0.0
        %999 = vadd.xlane.f32.xlu0 %v998
        %v1000 = vpop.xlane.xlu0 %999
        %v1001 = vsel %vm985, %v997, 0.0
        %1002 = vadd.xlane.f32.xlu0 %v1001
        %v1003 = vpop.xlane.xlu0 %1002
        %v1004 = vrcp.pop %v1000
        %v1005 = vrcp.pop %v1003
        %v1006 = vmul.f32 %v995, %v1004
        %v1007 = vmul.f32 %v997, %v1005
        %v1008 = vpack.c.bf16 %v1006, %v1006
        %v1009 = vpack.c.bf16 %v1007, %v1007
        %v1011 = vsel %vm985, %v1008, 0
        %vm1013 = vcmask 1043456
        %v1015 = vsel %vm1013, %v874, 0
        %1017 = vmatprep.subr.bf16.mxu0 0
        %1018 = vmatpush1.bf16.msra.mxu0 0
        %1019 = vmatprep.subr.bf16.mxu0 0
        %1020 = vmatpush1.bf16.msra.mxu0 0
        %1021 = vmatprep.subr.bf16.mxu0 0
        %1022 = vmatpush1.bf16.msra.mxu0 0
        %1023 = vmatprep.subr.bf16.mxu0 0
        %1024 = vmatpush1.bf16.msra.mxu0 0
        %1025 = vmatprep.subr.bf16.mxu0 0
        %1026 = vmatpush1.bf16.msra.mxu0 0
        %1027 = vmatprep.subr.bf16.mxu0 0
        %1028 = vmatpush1.bf16.msra.mxu0 0
        %1029 = vmatprep.subr.bf16.mxu0 0
        %1030 = vmatpush1.bf16.msra.mxu0 0
        %1031 = vmatprep.subr.bf16.mxu0 0
        %1032 = vmatpush1.bf16.msra.mxu0 %v1015
        %1033 = vmatprep.subr.bf16.mxu0 0
        %1034 = vmatpush2.bf16.msra.mxu0 0
        %1035 = vmatprep.subr.bf16.mxu0 0
        %1036 = vmatpush2.bf16.msra.mxu0 0
        %1037 = vmatprep.subr.bf16.mxu0 0
        %1038 = vmatpush2.bf16.msra.mxu0 0
        %1039 = vmatprep.subr.bf16.mxu0 0
        %1040 = vmatpush2.bf16.msra.mxu0 0
        %1041 = vmatprep.subr.bf16.mxu0 0
        %1042 = vmatpush2.bf16.msra.mxu0 0
        %1043 = vmatprep.subr.bf16.mxu0 0
        %1044 = vmatpush2.bf16.msra.mxu0 0
        %1045 = vmatprep.subr.bf16.mxu0 0
        %1046 = vmatpush2.bf16.msra.mxu0 0
        %1047 = vmatprep.subr.bf16.mxu0 0
        %1048 = vmatpush2.bf16.msra.mxu0 0
        %1049 = vmatprep.mubr.bf16.mxu0 0
        %1050 = vmatmul.mubr.bf16.gmra.mxu0 %v1011
        %v1051 = vpop.f32.mrf.mxu0
        %v1052 = vadd.f32 0.0, %v1051
        %v1053 = vpop.f32.mrf.mxu0
        %v1054 = vpop.f32.mrf.mxu0
        %v1055 = vpop.f32.mrf.mxu0
        %1056 = vdwg.mxu0
        %v1058 = vsel %vm985, %v1009, 0
        %v1061 = vsel %vm1013, %v875, 0
        %1063 = vmatprep.subr.bf16.mxu0 0
        %1064 = vmatpush1.bf16.msra.mxu0 0
        %1065 = vmatprep.subr.bf16.mxu0 0
        %1066 = vmatpush1.bf16.msra.mxu0 0
        %1067 = vmatprep.subr.bf16.mxu0 0
        %1068 = vmatpush1.bf16.msra.mxu0 0
        %1069 = vmatprep.subr.bf16.mxu0 0
        %1070 = vmatpush1.bf16.msra.mxu0 0
        %1071 = vmatprep.subr.bf16.mxu0 0
        %1072 = vmatpush1.bf16.msra.mxu0 0
        %1073 = vmatprep.subr.bf16.mxu0 0
        %1074 = vmatpush1.bf16.msra.mxu0 0
        %1075 = vmatprep.subr.bf16.mxu0 0
        %1076 = vmatpush1.bf16.msra.mxu0 0
        %1077 = vmatprep.subr.bf16.mxu0 0
        %1078 = vmatpush1.bf16.msra.mxu0 %v1061
        %1079 = vmatprep.subr.bf16.mxu0 0
        %1080 = vmatpush2.bf16.msra.mxu0 0
        %1081 = vmatprep.subr.bf16.mxu0 0
        %1082 = vmatpush2.bf16.msra.mxu0 0
        %1083 = vmatprep.subr.bf16.mxu0 0
        %1084 = vmatpush2.bf16.msra.mxu0 0
        %1085 = vmatprep.subr.bf16.mxu0 0
        %1086 = vmatpush2.bf16.msra.mxu0 0
        %1087 = vmatprep.subr.bf16.mxu0 0
        %1088 = vmatpush2.bf16.msra.mxu0 0
        %1089 = vmatprep.subr.bf16.mxu0 0
        %1090 = vmatpush2.bf16.msra.mxu0 0
        %1091 = vmatprep.subr.bf16.mxu0 0
        %1092 = vmatpush2.bf16.msra.mxu0 0
        %1093 = vmatprep.subr.bf16.mxu0 0
        %1094 = vmatpush2.bf16.msra.mxu0 0
        %1095 = vmatprep.mubr.bf16.mxu0 0
        %1096 = vmatmul.mubr.bf16.gmra.mxu0 %v1058
        %v1097 = vpop.f32.mrf.mxu0
        %v1098 = vadd.f32 0.0, %v1097
        %v1099 = vpop.f32.mrf.mxu0
        %v1100 = vpop.f32.mrf.mxu0
        %v1101 = vpop.f32.mrf.mxu0
        %1102 = vdwg.mxu0
        %1104 = vrot.lane.b32.xlu0 %v858, 96
        %v1105 = vpop.permute.xlu0 %1104
        %1107 = vrot.lane.b32.xlu0 %v866, 96
        %v1108 = vpop.permute.xlu0 %1107
        %v1110 = vsel %vm876, %v1105, 0
        %v1113 = vsel %vm876, %v1108, 0
        %1115 = vmatprep.subr.bf16.mxu0 0
        %1116 = vmatpush1.bf16.xpose.msra.mxu0 0
        %1117 = vmatprep.subr.bf16.mxu0 0
        %1118 = vmatpush1.bf16.xpose.msra.mxu0 0
        %1119 = vmatprep.subr.bf16.mxu0 0
        %1120 = vmatpush1.bf16.xpose.msra.mxu0 0
        %1121 = vmatprep.subr.bf16.mxu0 0
        %1122 = vmatpush1.bf16.xpose.msra.mxu0 0
        %1123 = vmatprep.subr.bf16.mxu0 0
        %1124 = vmatpush1.bf16.xpose.msra.mxu0 0
        %1125 = vmatprep.subr.bf16.mxu0 0
        %1126 = vmatpush1.bf16.xpose.msra.mxu0 0
        %1127 = vmatprep.subr.bf16.mxu0 0
        %1128 = vmatpush1.bf16.xpose.msra.mxu0 0
        %1129 = vmatprep.subr.bf16.mxu0 0
        %1130 = vmatpush1.bf16.xpose.msra.mxu0 %v1113
        %1131 = vmatprep.subr.bf16.mxu0 0
        %1132 = vmatpush2.bf16.xpose.msra.mxu0 0
        %1133 = vmatprep.subr.bf16.mxu0 0
        %1134 = vmatpush2.bf16.xpose.msra.mxu0 0
        %1135 = vmatprep.subr.bf16.mxu0 0
        %1136 = vmatpush2.bf16.xpose.msra.mxu0 0
        %1137 = vmatprep.subr.bf16.mxu0 0
        %1138 = vmatpush2.bf16.xpose.msra.mxu0 0
        %1139 = vmatprep.subr.bf16.mxu0 0
        %1140 = vmatpush2.bf16.xpose.msra.mxu0 0
        %1141 = vmatprep.subr.bf16.mxu0 0
        %1142 = vmatpush2.bf16.xpose.msra.mxu0 0
        %1143 = vmatprep.subr.bf16.mxu0 0
        %1144 = vmatpush2.bf16.xpose.msra.mxu0 0
        %1145 = vmatprep.subr.bf16.mxu0 0
        %1146 = vmatpush2.bf16.xpose.msra.mxu0 0
        %1147 = vmatprep.mubr.bf16.mxu0 0
        %1148 = vmatmul.mubr.bf16.gmra.mxu0 %v1110
        %v1149 = vpop.f32.mrf.mxu0
        %v1150 = vadd.f32 0.0, %v1149
        %v1151 = vpop.f32.mrf.mxu0
        %v1152 = vpop.f32.mrf.mxu0
        %v1153 = vpop.f32.mrf.mxu0
        %1154 = vdwg.mxu0
        %1156 = vrot.lane.b32.xlu0 %v859, 96
        %v1157 = vpop.permute.xlu0 %1156
        %1159 = vrot.lane.b32.xlu0 %v867, 96
        %v1160 = vpop.permute.xlu0 %1159
        %v1162 = vsel %vm876, %v1157, 0
        %v1165 = vsel %vm876, %v1160, 0
        %1167 = vmatprep.subr.bf16.mxu0 0
        %1168 = vmatpush1.bf16.xpose.msra.mxu0 0
        %1169 = vmatprep.subr.bf16.mxu0 0
        %1170 = vmatpush1.bf16.xpose.msra.mxu0 0
        %1171 = vmatprep.subr.bf16.mxu0 0
        %1172 = vmatpush1.bf16.xpose.msra.mxu0 0
        %1173 = vmatprep.subr.bf16.mxu0 0
        %1174 = vmatpush1.bf16.xpose.msra.mxu0 0
        %1175 = vmatprep.subr.bf16.mxu0 0
        %1176 = vmatpush1.bf16.xpose.msra.mxu0 0
        %1177 = vmatprep.subr.bf16.mxu0 0
        %1178 = vmatpush1.bf16.xpose.msra.mxu0 0
        %1179 = vmatprep.subr.bf16.mxu0 0
        %1180 = vmatpush1.bf16.xpose.msra.mxu0 0
        %1181 = vmatprep.subr.bf16.mxu0 0
        %1182 = vmatpush1.bf16.xpose.msra.mxu0 %v1165
        %1183 = vmatprep.subr.bf16.mxu0 0
        %1184 = vmatpush2.bf16.xpose.msra.mxu0 0
        %1185 = vmatprep.subr.bf16.mxu0 0
        %1186 = vmatpush2.bf16.xpose.msra.mxu0 0
        %1187 = vmatprep.subr.bf16.mxu0 0
        %1188 = vmatpush2.bf16.xpose.msra.mxu0 0
        %1189 = vmatprep.subr.bf16.mxu0 0
        %1190 = vmatpush2.bf16.xpose.msra.mxu0 0
        %1191 = vmatprep.subr.bf16.mxu0 0
        %1192 = vmatpush2.bf16.xpose.msra.mxu0 0
        %1193 = vmatprep.subr.bf16.mxu0 0
        %1194 = vmatpush2.bf16.xpose.msra.mxu0 0
        %1195 = vmatprep.subr.bf16.mxu0 0
        %1196 = vmatpush2.bf16.xpose.msra.mxu0 0
        %1197 = vmatprep.subr.bf16.mxu0 0
        %1198 = vmatpush2.bf16.xpose.msra.mxu0 0
        %1199 = vmatprep.mubr.bf16.mxu0 0
        %1200 = vmatmul.mubr.bf16.gmra.mxu0 %v1162
        %v1201 = vpop.f32.mrf.mxu0
        %v1202 = vadd.f32 0.0, %v1201
        %v1203 = vpop.f32.mrf.mxu0
        %v1204 = vpop.f32.mrf.mxu0
        %v1205 = vpop.f32.mrf.mxu0
        %1206 = vdwg.mxu0
        %v1207 = vmul.f32 %v1150, 0.17677669
        %v1208 = vmul.f32 %v1202, 0.17677669
        %v1209 = vadd.f32 %v1207, %v976
        %v1210 = vadd.f32 %v1208, %v980
        %v1211 = vsel %vm985, %v1209, -inf
        %1212 = vmax.xlane.f32.xlu0 %v1211
        %v1213 = vpop.xlane.xlu0 %1212
        %v1214 = vsel %vm985, %v1210, -inf
        %1215 = vmax.xlane.f32.xlu0 %v1214
        %v1216 = vpop.xlane.xlu0 %1215
        %v1217 = vsub.f32 %v1209, %v1213
        %v1218 = vsub.f32 %v1210, %v1216
        %v1219 = vmul.f32 %v1217, 1.442695
        %v1220 = vpow.pop %v1219
        %v1221 = vmul.f32 %v1218, 1.442695
        %v1222 = vpow.pop %v1221
        %v1223 = vsel %vm985, %v1220, 0.0
        %1224 = vadd.xlane.f32.xlu0 %v1223
        %v1225 = vpop.xlane.xlu0 %1224
        %v1226 = vsel %vm985, %v1222, 0.0
        %1227 = vadd.xlane.f32.xlu0 %v1226
        %v1228 = vpop.xlane.xlu0 %1227
        %v1229 = vrcp.pop %v1225
        %v1230 = vrcp.pop %v1228
        %v1231 = vmul.f32 %v1220, %v1229
        %v1232 = vmul.f32 %v1222, %v1230
        %v1233 = vpack.c.bf16 %v1231, %v1231
        %v1234 = vpack.c.bf16 %v1232, %v1232
        %1236 = vrot.lane.b32.xlu0 %v874, 96
        %v1237 = vpop.permute.xlu0 %1236
        %v1239 = vsel %vm985, %v1233, 0
        %v1242 = vsel %vm1013, %v1237, 0
        %1244 = vmatprep.subr.bf16.mxu0 0
        %1245 = vmatpush1.bf16.msra.mxu0 0
        %1246 = vmatprep.subr.bf16.mxu0 0
        %1247 = vmatpush1.bf16.msra.mxu0 0
        %1248 = vmatprep.subr.bf16.mxu0 0
        %1249 = vmatpush1.bf16.msra.mxu0 0
        %1250 = vmatprep.subr.bf16.mxu0 0
        %1251 = vmatpush1.bf16.msra.mxu0 0
        %1252 = vmatprep.subr.bf16.mxu0 0
        %1253 = vmatpush1.bf16.msra.mxu0 0
        %1254 = vmatprep.subr.bf16.mxu0 0
        %1255 = vmatpush1.bf16.msra.mxu0 0
        %1256 = vmatprep.subr.bf16.mxu0 0
        %1257 = vmatpush1.bf16.msra.mxu0 0
        %1258 = vmatprep.subr.bf16.mxu0 0
        %1259 = vmatpush1.bf16.msra.mxu0 %v1242
        %1260 = vmatprep.subr.bf16.mxu0 0
        %1261 = vmatpush2.bf16.msra.mxu0 0
        %1262 = vmatprep.subr.bf16.mxu0 0
        %1263 = vmatpush2.bf16.msra.mxu0 0
        %1264 = vmatprep.subr.bf16.mxu0 0
        %1265 = vmatpush2.bf16.msra.mxu0 0
        %1266 = vmatprep.subr.bf16.mxu0 0
        %1267 = vmatpush2.bf16.msra.mxu0 0
        %1268 = vmatprep.subr.bf16.mxu0 0
        %1269 = vmatpush2.bf16.msra.mxu0 0
        %1270 = vmatprep.subr.bf16.mxu0 0
        %1271 = vmatpush2.bf16.msra.mxu0 0
        %1272 = vmatprep.subr.bf16.mxu0 0
        %1273 = vmatpush2.bf16.msra.mxu0 0
        %1274 = vmatprep.subr.bf16.mxu0 0
        %1275 = vmatpush2.bf16.msra.mxu0 0
        %1276 = vmatprep.mubr.bf16.mxu0 0
        %1277 = vmatmul.mubr.bf16.gmra.mxu0 %v1239
        %v1278 = vpop.f32.mrf.mxu0
        %v1279 = vadd.f32 0.0, %v1278
        %v1280 = vpop.f32.mrf.mxu0
        %v1281 = vpop.f32.mrf.mxu0
        %v1282 = vpop.f32.mrf.mxu0
        %1283 = vdwg.mxu0
        %1285 = vrot.lane.b32.xlu0 %v875, 96
        %v1286 = vpop.permute.xlu0 %1285
        %v1288 = vsel %vm985, %v1234, 0
        %v1291 = vsel %vm1013, %v1286, 0
        %1293 = vmatprep.subr.bf16.mxu0 0
        %1294 = vmatpush1.bf16.msra.mxu0 0
        %1295 = vmatprep.subr.bf16.mxu0 0
        %1296 = vmatpush1.bf16.msra.mxu0 0
        %1297 = vmatprep.subr.bf16.mxu0 0
        %1298 = vmatpush1.bf16.msra.mxu0 0
        %1299 = vmatprep.subr.bf16.mxu0 0
        %1300 = vmatpush1.bf16.msra.mxu0 0
        %1301 = vmatprep.subr.bf16.mxu0 0
        %1302 = vmatpush1.bf16.msra.mxu0 0
        %1303 = vmatprep.subr.bf16.mxu0 0
        %1304 = vmatpush1.bf16.msra.mxu0 0
        %1305 = vmatprep.subr.bf16.mxu0 0
        %1306 = vmatpush1.bf16.msra.mxu0 0
        %1307 = vmatprep.subr.bf16.mxu0 0
        %1308 = vmatpush1.bf16.msra.mxu0 %v1291
        %1309 = vmatprep.subr.bf16.mxu0 0
        %1310 = vmatpush2.bf16.msra.mxu0 0
        %1311 = vmatprep.subr.bf16.mxu0 0
        %1312 = vmatpush2.bf16.msra.mxu0 0
        %1313 = vmatprep.subr.bf16.mxu0 0
        %1314 = vmatpush2.bf16.msra.mxu0 0
        %1315 = vmatprep.subr.bf16.mxu0 0
        %1316 = vmatpush2.bf16.msra.mxu0 0
        %1317 = vmatprep.subr.bf16.mxu0 0
        %1318 = vmatpush2.bf16.msra.mxu0 0
        %1319 = vmatprep.subr.bf16.mxu0 0
        %1320 = vmatpush2.bf16.msra.mxu0 0
        %1321 = vmatprep.subr.bf16.mxu0 0
        %1322 = vmatpush2.bf16.msra.mxu0 0
        %1323 = vmatprep.subr.bf16.mxu0 0
        %1324 = vmatpush2.bf16.msra.mxu0 0
        %1325 = vmatprep.mubr.bf16.mxu0 0
        %1326 = vmatmul.mubr.bf16.gmra.mxu0 %v1288
        %v1327 = vpop.f32.mrf.mxu0
        %v1328 = vadd.f32 0.0, %v1327
        %v1329 = vpop.f32.mrf.mxu0
        %v1330 = vpop.f32.mrf.mxu0
        %v1331 = vpop.f32.mrf.mxu0
        %1332 = vdwg.mxu0
        %1333 = vrot.lane.b32.xlu0 %v858, 64
        %v1334 = vpop.permute.xlu0 %1333
        %1335 = vrot.lane.b32.xlu0 %v866, 64
        %v1336 = vpop.permute.xlu0 %1335
        %v1338 = vsel %vm876, %v1334, 0
        %v1341 = vsel %vm876, %v1336, 0
        %1343 = vmatprep.subr.bf16.mxu0 0
        %1344 = vmatpush1.bf16.xpose.msra.mxu0 0
        %1345 = vmatprep.subr.bf16.mxu0 0
        %1346 = vmatpush1.bf16.xpose.msra.mxu0 0
        %1347 = vmatprep.subr.bf16.mxu0 0
        %1348 = vmatpush1.bf16.xpose.msra.mxu0 0
        %1349 = vmatprep.subr.bf16.mxu0 0
        %1350 = vmatpush1.bf16.xpose.msra.mxu0 0
        %1351 = vmatprep.subr.bf16.mxu0 0
        %1352 = vmatpush1.bf16.xpose.msra.mxu0 0
        %1353 = vmatprep.subr.bf16.mxu0 0
        %1354 = vmatpush1.bf16.xpose.msra.mxu0 0
        %1355 = vmatprep.subr.bf16.mxu0 0
        %1356 = vmatpush1.bf16.xpose.msra.mxu0 0
        %1357 = vmatprep.subr.bf16.mxu0 0
        %1358 = vmatpush1.bf16.xpose.msra.mxu0 %v1341
        %1359 = vmatprep.subr.bf16.mxu0 0
        %1360 = vmatpush2.bf16.xpose.msra.mxu0 0
        %1361 = vmatprep.subr.bf16.mxu0 0
        %1362 = vmatpush2.bf16.xpose.msra.mxu0 0
        %1363 = vmatprep.subr.bf16.mxu0 0
        %1364 = vmatpush2.bf16.xpose.msra.mxu0 0
        %1365 = vmatprep.subr.bf16.mxu0 0
        %1366 = vmatpush2.bf16.xpose.msra.mxu0 0
        %1367 = vmatprep.subr.bf16.mxu0 0
        %1368 = vmatpush2.bf16.xpose.msra.mxu0 0
        %1369 = vmatprep.subr.bf16.mxu0 0
        %1370 = vmatpush2.bf16.xpose.msra.mxu0 0
        %1371 = vmatprep.subr.bf16.mxu0 0
        %1372 = vmatpush2.bf16.xpose.msra.mxu0 0
        %1373 = vmatprep.subr.bf16.mxu0 0
        %1374 = vmatpush2.bf16.xpose.msra.mxu0 0
        %1375 = vmatprep.mubr.bf16.mxu0 0
        %1376 = vmatmul.mubr.bf16.gmra.mxu0 %v1338
        %v1377 = vpop.f32.mrf.mxu0
        %v1378 = vadd.f32 0.0, %v1377
        %v1379 = vpop.f32.mrf.mxu0
        %v1380 = vpop.f32.mrf.mxu0
        %v1381 = vpop.f32.mrf.mxu0
        %1382 = vdwg.mxu0
        %1383 = vrot.lane.b32.xlu0 %v859, 64
        %v1384 = vpop.permute.xlu0 %1383
        %1385 = vrot.lane.b32.xlu0 %v867, 64
        %v1386 = vpop.permute.xlu0 %1385
        %v1388 = vsel %vm876, %v1384, 0
        %v1391 = vsel %vm876, %v1386, 0
        %1393 = vmatprep.subr.bf16.mxu0 0
        %1394 = vmatpush1.bf16.xpose.msra.mxu0 0
        %1395 = vmatprep.subr.bf16.mxu0 0
        %1396 = vmatpush1.bf16.xpose.msra.mxu0 0
        %1397 = vmatprep.subr.bf16.mxu0 0
        %1398 = vmatpush1.bf16.xpose.msra.mxu0 0
        %1399 = vmatprep.subr.bf16.mxu0 0
        %1400 = vmatpush1.bf16.xpose.msra.mxu0 0
        %1401 = vmatprep.subr.bf16.mxu0 0
        %1402 = vmatpush1.bf16.xpose.msra.mxu0 0
        %1403 = vmatprep.subr.bf16.mxu0 0
        %1404 = vmatpush1.bf16.xpose.msra.mxu0 0
        %1405 = vmatprep.subr.bf16.mxu0 0
        %1406 = vmatpush1.bf16.xpose.msra.mxu0 0
        %1407 = vmatprep.subr.bf16.mxu0 0
        %1408 = vmatpush1.bf16.xpose.msra.mxu0 %v1391
        %1409 = vmatprep.subr.bf16.mxu0 0
        %1410 = vmatpush2.bf16.xpose.msra.mxu0 0
        %1411 = vmatprep.subr.bf16.mxu0 0
        %1412 = vmatpush2.bf16.xpose.msra.mxu0 0
        %1413 = vmatprep.subr.bf16.mxu0 0
        %1414 = vmatpush2.bf16.xpose.msra.mxu0 0
        %1415 = vmatprep.subr.bf16.mxu0 0
        %1416 = vmatpush2.bf16.xpose.msra.mxu0 0
        %1417 = vmatprep.subr.bf16.mxu0 0
        %1418 = vmatpush2.bf16.xpose.msra.mxu0 0
        %1419 = vmatprep.subr.bf16.mxu0 0
        %1420 = vmatpush2.bf16.xpose.msra.mxu0 0
        %1421 = vmatprep.subr.bf16.mxu0 0
        %1422 = vmatpush2.bf16.xpose.msra.mxu0 0
        %1423 = vmatprep.subr.bf16.mxu0 0
        %1424 = vmatpush2.bf16.xpose.msra.mxu0 0
        %1425 = vmatprep.mubr.bf16.mxu0 0
        %1426 = vmatmul.mubr.bf16.gmra.mxu0 %v1388
        %v1427 = vpop.f32.mrf.mxu0
        %v1428 = vadd.f32 0.0, %v1427
        %v1429 = vpop.f32.mrf.mxu0
        %v1430 = vpop.f32.mrf.mxu0
        %v1431 = vpop.f32.mrf.mxu0
        %1432 = vdwg.mxu0
        %v1433 = vmul.f32 %v1378, 0.17677669
        %v1434 = vmul.f32 %v1428, 0.17677669
        %v1435 = vadd.f32 %v1433, %v976
        %v1436 = vadd.f32 %v1434, %v980
        %v1437 = vsel %vm985, %v1435, -inf
        %1438 = vmax.xlane.f32.xlu0 %v1437
        %v1439 = vpop.xlane.xlu0 %1438
        %v1440 = vsel %vm985, %v1436, -inf
        %1441 = vmax.xlane.f32.xlu0 %v1440
        %v1442 = vpop.xlane.xlu0 %1441
        %v1443 = vsub.f32 %v1435, %v1439
        %v1444 = vsub.f32 %v1436, %v1442
        %v1445 = vmul.f32 %v1443, 1.442695
        %v1446 = vpow.pop %v1445
        %v1447 = vmul.f32 %v1444, 1.442695
        %v1448 = vpow.pop %v1447
        %v1449 = vsel %vm985, %v1446, 0.0
        %1450 = vadd.xlane.f32.xlu0 %v1449
        %v1451 = vpop.xlane.xlu0 %1450
        %v1452 = vsel %vm985, %v1448, 0.0
        %1453 = vadd.xlane.f32.xlu0 %v1452
        %v1454 = vpop.xlane.xlu0 %1453
        %v1455 = vrcp.pop %v1451
        %v1456 = vrcp.pop %v1454
        %v1457 = vmul.f32 %v1446, %v1455
        %v1458 = vmul.f32 %v1448, %v1456
        %v1459 = vpack.c.bf16 %v1457, %v1457
        %v1460 = vpack.c.bf16 %v1458, %v1458
        %1461 = vrot.lane.b32.xlu0 %v874, 64
        %v1462 = vpop.permute.xlu0 %1461
        %v1464 = vsel %vm985, %v1459, 0
        %v1467 = vsel %vm1013, %v1462, 0
        %1469 = vmatprep.subr.bf16.mxu0 0
        %1470 = vmatpush1.bf16.msra.mxu0 0
        %1471 = vmatprep.subr.bf16.mxu0 0
        %1472 = vmatpush1.bf16.msra.mxu0 0
        %1473 = vmatprep.subr.bf16.mxu0 0
        %1474 = vmatpush1.bf16.msra.mxu0 0
        %1475 = vmatprep.subr.bf16.mxu0 0
        %1476 = vmatpush1.bf16.msra.mxu0 0
        %1477 = vmatprep.subr.bf16.mxu0 0
        %1478 = vmatpush1.bf16.msra.mxu0 0
        %1479 = vmatprep.subr.bf16.mxu0 0
        %1480 = vmatpush1.bf16.msra.mxu0 0
        %1481 = vmatprep.subr.bf16.mxu0 0
        %1482 = vmatpush1.bf16.msra.mxu0 0
        %1483 = vmatprep.subr.bf16.mxu0 0
        %1484 = vmatpush1.bf16.msra.mxu0 %v1467
        %1485 = vmatprep.subr.bf16.mxu0 0
        %1486 = vmatpush2.bf16.msra.mxu0 0
        %1487 = vmatprep.subr.bf16.mxu0 0
        %1488 = vmatpush2.bf16.msra.mxu0 0
        %1489 = vmatprep.subr.bf16.mxu0 0
        %1490 = vmatpush2.bf16.msra.mxu0 0
        %1491 = vmatprep.subr.bf16.mxu0 0
        %1492 = vmatpush2.bf16.msra.mxu0 0
        %1493 = vmatprep.subr.bf16.mxu0 0
        %1494 = vmatpush2.bf16.msra.mxu0 0
        %1495 = vmatprep.subr.bf16.mxu0 0
        %1496 = vmatpush2.bf16.msra.mxu0 0
        %1497 = vmatprep.subr.bf16.mxu0 0
        %1498 = vmatpush2.bf16.msra.mxu0 0
        %1499 = vmatprep.subr.bf16.mxu0 0
        %1500 = vmatpush2.bf16.msra.mxu0 0
        %1501 = vmatprep.mubr.bf16.mxu0 0
        %1502 = vmatmul.mubr.bf16.gmra.mxu0 %v1464
        %v1503 = vpop.f32.mrf.mxu0
        %v1504 = vadd.f32 0.0, %v1503
        %v1505 = vpop.f32.mrf.mxu0
        %v1506 = vpop.f32.mrf.mxu0
        %v1507 = vpop.f32.mrf.mxu0
        %1508 = vdwg.mxu0
        %1509 = vrot.lane.b32.xlu0 %v875, 64
        %v1510 = vpop.permute.xlu0 %1509
        %v1512 = vsel %vm985, %v1460, 0
        %v1515 = vsel %vm1013, %v1510, 0
        %1517 = vmatprep.subr.bf16.mxu0 0
        %1518 = vmatpush1.bf16.msra.mxu0 0
        %1519 = vmatprep.subr.bf16.mxu0 0
        %1520 = vmatpush1.bf16.msra.mxu0 0
        %1521 = vmatprep.subr.bf16.mxu0 0
        %1522 = vmatpush1.bf16.msra.mxu0 0
        %1523 = vmatprep.subr.bf16.mxu0 0
        %1524 = vmatpush1.bf16.msra.mxu0 0
        %1525 = vmatprep.subr.bf16.mxu0 0
        %1526 = vmatpush1.bf16.msra.mxu0 0
        %1527 = vmatprep.subr.bf16.mxu0 0
        %1528 = vmatpush1.bf16.msra.mxu0 0
        %1529 = vmatprep.subr.bf16.mxu0 0
        %1530 = vmatpush1.bf16.msra.mxu0 0
        %1531 = vmatprep.subr.bf16.mxu0 0
        %1532 = vmatpush1.bf16.msra.mxu0 %v1515
        %1533 = vmatprep.subr.bf16.mxu0 0
        %1534 = vmatpush2.bf16.msra.mxu0 0
        %1535 = vmatprep.subr.bf16.mxu0 0
        %1536 = vmatpush2.bf16.msra.mxu0 0
        %1537 = vmatprep.subr.bf16.mxu0 0
        %1538 = vmatpush2.bf16.msra.mxu0 0
        %1539 = vmatprep.subr.bf16.mxu0 0
        %1540 = vmatpush2.bf16.msra.mxu0 0
        %1541 = vmatprep.subr.bf16.mxu0 0
        %1542 = vmatpush2.bf16.msra.mxu0 0
        %1543 = vmatprep.subr.bf16.mxu0 0
        %1544 = vmatpush2.bf16.msra.mxu0 0
        %1545 = vmatprep.subr.bf16.mxu0 0
        %1546 = vmatpush2.bf16.msra.mxu0 0
        %1547 = vmatprep.subr.bf16.mxu0 0
        %1548 = vmatpush2.bf16.msra.mxu0 0
        %1549 = vmatprep.mubr.bf16.mxu0 0
        %1550 = vmatmul.mubr.bf16.gmra.mxu0 %v1512
        %v1551 = vpop.f32.mrf.mxu0
        %v1552 = vadd.f32 0.0, %v1551
        %v1553 = vpop.f32.mrf.mxu0
        %v1554 = vpop.f32.mrf.mxu0
        %v1555 = vpop.f32.mrf.mxu0
        %1556 = vdwg.mxu0
        %1557 = vrot.lane.b32.xlu0 %v858, 32
        %v1558 = vpop.permute.xlu0 %1557
        %1559 = vrot.lane.b32.xlu0 %v866, 32
        %v1560 = vpop.permute.xlu0 %1559
        %v1562 = vsel %vm876, %v1558, 0
        %v1565 = vsel %vm876, %v1560, 0
        %1567 = vmatprep.subr.bf16.mxu0 0
        %1568 = vmatpush1.bf16.xpose.msra.mxu0 0
        %1569 = vmatprep.subr.bf16.mxu0 0
        %1570 = vmatpush1.bf16.xpose.msra.mxu0 0
        %1571 = vmatprep.subr.bf16.mxu0 0
        %1572 = vmatpush1.bf16.xpose.msra.mxu0 0
        %1573 = vmatprep.subr.bf16.mxu0 0
        %1574 = vmatpush1.bf16.xpose.msra.mxu0 0
        %1575 = vmatprep.subr.bf16.mxu0 0
        %1576 = vmatpush1.bf16.xpose.msra.mxu0 0
        %1577 = vmatprep.subr.bf16.mxu0 0
        %1578 = vmatpush1.bf16.xpose.msra.mxu0 0
        %1579 = vmatprep.subr.bf16.mxu0 0
        %1580 = vmatpush1.bf16.xpose.msra.mxu0 0
        %1581 = vmatprep.subr.bf16.mxu0 0
        %1582 = vmatpush1.bf16.xpose.msra.mxu0 %v1565
        %1583 = vmatprep.subr.bf16.mxu0 0
        %1584 = vmatpush2.bf16.xpose.msra.mxu0 0
        %1585 = vmatprep.subr.bf16.mxu0 0
        %1586 = vmatpush2.bf16.xpose.msra.mxu0 0
        %1587 = vmatprep.subr.bf16.mxu0 0
        %1588 = vmatpush2.bf16.xpose.msra.mxu0 0
        %1589 = vmatprep.subr.bf16.mxu0 0
        %1590 = vmatpush2.bf16.xpose.msra.mxu0 0
        %1591 = vmatprep.subr.bf16.mxu0 0
        %1592 = vmatpush2.bf16.xpose.msra.mxu0 0
        %1593 = vmatprep.subr.bf16.mxu0 0
        %1594 = vmatpush2.bf16.xpose.msra.mxu0 0
        %1595 = vmatprep.subr.bf16.mxu0 0
        %1596 = vmatpush2.bf16.xpose.msra.mxu0 0
        %1597 = vmatprep.subr.bf16.mxu0 0
        %1598 = vmatpush2.bf16.xpose.msra.mxu0 0
        %1599 = vmatprep.mubr.bf16.mxu0 0
        %1600 = vmatmul.mubr.bf16.gmra.mxu0 %v1562
        %v1601 = vpop.f32.mrf.mxu0
        %v1602 = vadd.f32 0.0, %v1601
        %v1603 = vpop.f32.mrf.mxu0
        %v1604 = vpop.f32.mrf.mxu0
        %v1605 = vpop.f32.mrf.mxu0
        %1606 = vdwg.mxu0
        %1607 = vrot.lane.b32.xlu0 %v859, 32
        %v1608 = vpop.permute.xlu0 %1607
        %1609 = vrot.lane.b32.xlu0 %v867, 32
        %v1610 = vpop.permute.xlu0 %1609
        %v1612 = vsel %vm876, %v1608, 0
        %v1615 = vsel %vm876, %v1610, 0
        %1617 = vmatprep.subr.bf16.mxu0 0
        %1618 = vmatpush1.bf16.xpose.msra.mxu0 0
        %1619 = vmatprep.subr.bf16.mxu0 0
        %1620 = vmatpush1.bf16.xpose.msra.mxu0 0
        %1621 = vmatprep.subr.bf16.mxu0 0
        %1622 = vmatpush1.bf16.xpose.msra.mxu0 0
        %1623 = vmatprep.subr.bf16.mxu0 0
        %1624 = vmatpush1.bf16.xpose.msra.mxu0 0
        %1625 = vmatprep.subr.bf16.mxu0 0
        %1626 = vmatpush1.bf16.xpose.msra.mxu0 0
        %1627 = vmatprep.subr.bf16.mxu0 0
        %1628 = vmatpush1.bf16.xpose.msra.mxu0 0
        %1629 = vmatprep.subr.bf16.mxu0 0
        %1630 = vmatpush1.bf16.xpose.msra.mxu0 0
        %1631 = vmatprep.subr.bf16.mxu0 0
        %1632 = vmatpush1.bf16.xpose.msra.mxu0 %v1615
        %1633 = vmatprep.subr.bf16.mxu0 0
        %1634 = vmatpush2.bf16.xpose.msra.mxu0 0
        %1635 = vmatprep.subr.bf16.mxu0 0
        %1636 = vmatpush2.bf16.xpose.msra.mxu0 0
        %1637 = vmatprep.subr.bf16.mxu0 0
        %1638 = vmatpush2.bf16.xpose.msra.mxu0 0
        %1639 = vmatprep.subr.bf16.mxu0 0
        %1640 = vmatpush2.bf16.xpose.msra.mxu0 0
        %1641 = vmatprep.subr.bf16.mxu0 0
        %1642 = vmatpush2.bf16.xpose.msra.mxu0 0
        %1643 = vmatprep.subr.bf16.mxu0 0
        %1644 = vmatpush2.bf16.xpose.msra.mxu0 0
        %1645 = vmatprep.subr.bf16.mxu0 0
        %1646 = vmatpush2.bf16.xpose.msra.mxu0 0
        %1647 = vmatprep.subr.bf16.mxu0 0
        %1648 = vmatpush2.bf16.xpose.msra.mxu0 0
        %1649 = vmatprep.mubr.bf16.mxu0 0
        %1650 = vmatmul.mubr.bf16.gmra.mxu0 %v1612
        %v1651 = vpop.f32.mrf.mxu0
        %v1652 = vadd.f32 0.0, %v1651
        %v1653 = vpop.f32.mrf.mxu0
        %v1654 = vpop.f32.mrf.mxu0
        %v1655 = vpop.f32.mrf.mxu0
        %1656 = vdwg.mxu0
        %v1657 = vmul.f32 %v1602, 0.17677669
        %v1658 = vmul.f32 %v1652, 0.17677669
        %v1659 = vadd.f32 %v1657, %v976
        %v1660 = vadd.f32 %v1658, %v980
        %v1661 = vsel %vm985, %v1659, -inf
        %1662 = vmax.xlane.f32.xlu0 %v1661
        %v1663 = vpop.xlane.xlu0 %1662
        %v1664 = vsel %vm985, %v1660, -inf
        %1665 = vmax.xlane.f32.xlu0 %v1664
        %v1666 = vpop.xlane.xlu0 %1665
        %v1667 = vsub.f32 %v1659, %v1663
        %v1668 = vsub.f32 %v1660, %v1666
        %v1669 = vmul.f32 %v1667, 1.442695
        %v1670 = vpow.pop %v1669
        %v1671 = vmul.f32 %v1668, 1.442695
        %v1672 = vpow.pop %v1671
        %v1673 = vsel %vm985, %v1670, 0.0
        %1674 = vadd.xlane.f32.xlu0 %v1673
        %v1675 = vpop.xlane.xlu0 %1674
        %v1676 = vsel %vm985, %v1672, 0.0
        %1677 = vadd.xlane.f32.xlu0 %v1676
        %v1678 = vpop.xlane.xlu0 %1677
        %v1679 = vrcp.pop %v1675
        %v1680 = vrcp.pop %v1678
        %v1681 = vmul.f32 %v1670, %v1679
        %v1682 = vmul.f32 %v1672, %v1680
        %v1683 = vpack.c.bf16 %v1681, %v1681
        %v1684 = vpack.c.bf16 %v1682, %v1682
        %1685 = vrot.lane.b32.xlu0 %v874, 32
        %v1686 = vpop.permute.xlu0 %1685
        %v1688 = vsel %vm985, %v1683, 0
        %v1691 = vsel %vm1013, %v1686, 0
        %1693 = vmatprep.subr.bf16.mxu0 0
        %1694 = vmatpush1.bf16.msra.mxu0 0
        %1695 = vmatprep.subr.bf16.mxu0 0
        %1696 = vmatpush1.bf16.msra.mxu0 0
        %1697 = vmatprep.subr.bf16.mxu0 0
        %1698 = vmatpush1.bf16.msra.mxu0 0
        %1699 = vmatprep.subr.bf16.mxu0 0
        %1700 = vmatpush1.bf16.msra.mxu0 0
        %1701 = vmatprep.subr.bf16.mxu0 0
        %1702 = vmatpush1.bf16.msra.mxu0 0
        %1703 = vmatprep.subr.bf16.mxu0 0
        %1704 = vmatpush1.bf16.msra.mxu0 0
        %1705 = vmatprep.subr.bf16.mxu0 0
        %1706 = vmatpush1.bf16.msra.mxu0 0
        %1707 = vmatprep.subr.bf16.mxu0 0
        %1708 = vmatpush1.bf16.msra.mxu0 %v1691
        %1709 = vmatprep.subr.bf16.mxu0 0
        %1710 = vmatpush2.bf16.msra.mxu0 0
        %1711 = vmatprep.subr.bf16.mxu0 0
        %1712 = vmatpush2.bf16.msra.mxu0 0
        %1713 = vmatprep.subr.bf16.mxu0 0
        %1714 = vmatpush2.bf16.msra.mxu0 0
        %1715 = vmatprep.subr.bf16.mxu0 0
        %1716 = vmatpush2.bf16.msra.mxu0 0
        %1717 = vmatprep.subr.bf16.mxu0 0
        %1718 = vmatpush2.bf16.msra.mxu0 0
        %1719 = vmatprep.subr.bf16.mxu0 0
        %1720 = vmatpush2.bf16.msra.mxu0 0
        %1721 = vmatprep.subr.bf16.mxu0 0
        %1722 = vmatpush2.bf16.msra.mxu0 0
        %1723 = vmatprep.subr.bf16.mxu0 0
        %1724 = vmatpush2.bf16.msra.mxu0 0
        %1725 = vmatprep.mubr.bf16.mxu0 0
        %1726 = vmatmul.mubr.bf16.gmra.mxu0 %v1688
        %v1727 = vpop.f32.mrf.mxu0
        %v1728 = vadd.f32 0.0, %v1727
        %v1729 = vpop.f32.mrf.mxu0
        %v1730 = vpop.f32.mrf.mxu0
        %v1731 = vpop.f32.mrf.mxu0
        %1732 = vdwg.mxu0
        %1733 = vrot.lane.b32.xlu0 %v875, 32
        %v1734 = vpop.permute.xlu0 %1733
        %v1736 = vsel %vm985, %v1684, 0
        %v1739 = vsel %vm1013, %v1734, 0
        %1741 = vmatprep.subr.bf16.mxu0 0
        %1742 = vmatpush1.bf16.msra.mxu0 0
        %1743 = vmatprep.subr.bf16.mxu0 0
        %1744 = vmatpush1.bf16.msra.mxu0 0
        %1745 = vmatprep.subr.bf16.mxu0 0
        %1746 = vmatpush1.bf16.msra.mxu0 0
        %1747 = vmatprep.subr.bf16.mxu0 0
        %1748 = vmatpush1.bf16.msra.mxu0 0
        %1749 = vmatprep.subr.bf16.mxu0 0
        %1750 = vmatpush1.bf16.msra.mxu0 0
        %1751 = vmatprep.subr.bf16.mxu0 0
        %1752 = vmatpush1.bf16.msra.mxu0 0
        %1753 = vmatprep.subr.bf16.mxu0 0
        %1754 = vmatpush1.bf16.msra.mxu0 0
        %1755 = vmatprep.subr.bf16.mxu0 0
        %1756 = vmatpush1.bf16.msra.mxu0 %v1739
        %1757 = vmatprep.subr.bf16.mxu0 0
        %1758 = vmatpush2.bf16.msra.mxu0 0
        %1759 = vmatprep.subr.bf16.mxu0 0
        %1760 = vmatpush2.bf16.msra.mxu0 0
        %1761 = vmatprep.subr.bf16.mxu0 0
        %1762 = vmatpush2.bf16.msra.mxu0 0
        %1763 = vmatprep.subr.bf16.mxu0 0
        %1764 = vmatpush2.bf16.msra.mxu0 0
        %1765 = vmatprep.subr.bf16.mxu0 0
        %1766 = vmatpush2.bf16.msra.mxu0 0
        %1767 = vmatprep.subr.bf16.mxu0 0
        %1768 = vmatpush2.bf16.msra.mxu0 0
        %1769 = vmatprep.subr.bf16.mxu0 0
        %1770 = vmatpush2.bf16.msra.mxu0 0
        %1771 = vmatprep.subr.bf16.mxu0 0
        %1772 = vmatpush2.bf16.msra.mxu0 0
        %1773 = vmatprep.mubr.bf16.mxu0 0
        %1774 = vmatmul.mubr.bf16.gmra.mxu0 %v1736
        %v1775 = vpop.f32.mrf.mxu0
        %v1776 = vadd.f32 0.0, %v1775
        %v1777 = vpop.f32.mrf.mxu0
        %v1778 = vpop.f32.mrf.mxu0
        %v1779 = vpop.f32.mrf.mxu0
        %1780 = vdwg.mxu0
        %1783 = vrot.lane.b32.xlu0 %v1279, 32
        %v1784 = vpop.permute.xlu0 %1783
        %1785 = vrot.lane.b32.xlu0 %v1328, 32
        %v1786 = vpop.permute.xlu0 %1785
        %1791 = vrot.lane.b32.xlu0 %v1504, 64
        %v1792 = vpop.permute.xlu0 %1791
        %1793 = vrot.lane.b32.xlu0 %v1552, 64
        %v1794 = vpop.permute.xlu0 %1793
        %1799 = vrot.lane.b32.xlu0 %v1728, 96
        %v1800 = vpop.permute.xlu0 %1799
        %1801 = vrot.lane.b32.xlu0 %v1776, 96
        %v1802 = vpop.permute.xlu0 %1801
        %v1805 = vsel %vm876, %v1052, %v1784
        %v1806 = vsel %vm876, %v1098, %v1786
        %vm1807 = vcmask 523264
        %v1808 = vsel %vm1807, %v1805, %v1792
        %v1809 = vsel %vm1807, %v1806, %v1794
        %vm1810 = vcmask 785408
        %v1811 = vsel %vm1810, %v1808, %v1800
        %v1812 = vsel %vm1810, %v1809, %v1802
        %v1813 = vpack.c.bf16 %v1812, %v1811
        %v1814 = vld [vmem:[%s489] sm:$0xf]
        %v1815 = vld [vmem:[%s489 + $0x4] sm:$0xf]
        %v1816 = vld [vmem:[%s489 + $0x8] sm:$0xf]
        %v1817 = vld [vmem:[%s489 + $0xc] sm:$0xf]
        %v1818 = vld [vmem:[%s489 + $0x10] sm:$0xf]
        %v1819 = vld [vmem:[%s489 + $0x14] sm:$0xf]
        %v1820 = vld [vmem:[%s489 + $0x18] sm:$0xf]
        %v1821 = vld [vmem:[%s489 + $0x1c] sm:$0xf]
        %v1822 = vld [vmem:[%s489 + $0x20] sm:$0xf]
        %v1823 = vld [vmem:[%s489 + $0x24] sm:$0xf]
        %v1824 = vld [vmem:[%s489 + $0x28] sm:$0xf]
        %v1825 = vld [vmem:[%s489 + $0x2c] sm:$0xf]
        %v1826 = vld [vmem:[%s489 + $0x30] sm:$0xf]
        %v1827 = vld [vmem:[%s489 + $0x34] sm:$0xf]
        %v1828 = vld [vmem:[%s489 + $0x38] sm:$0xf]
        %v1829 = vld [vmem:[%s489 + $0x3c] sm:$0xf]
        %v1830 = vlaneseq
        %v1831 = vshrl.u32 %v1830, 7
        %v1832 = vsub.s32 3, %v1831
        %v1833 = vrot.slane %v606, %v1832
        %v1850 = vunpack.c.l.b16 %v1814
        %v1851 = vunpack.c.l.b16 %v1815
        %v1852 = vunpack.c.l.b16 %v1816
        %v1853 = vunpack.c.l.b16 %v1817
        %v1854 = vunpack.c.l.b16 %v1818
        %v1855 = vunpack.c.l.b16 %v1819
        %v1856 = vunpack.c.l.b16 %v1820
        %v1857 = vunpack.c.l.b16 %v1821
        %v1858 = vunpack.c.l.b16 %v1822
        %v1859 = vunpack.c.l.b16 %v1823
        %v1860 = vunpack.c.l.b16 %v1824
        %v1861 = vunpack.c.l.b16 %v1825
        %v1862 = vunpack.c.l.b16 %v1826
        %v1863 = vunpack.c.l.b16 %v1827
        %v1864 = vunpack.c.l.b16 %v1828
        %v1865 = vunpack.c.l.b16 %v1829
        %v1866 = vpack.c.b16 %v1851, %v1850
        %v1867 = vpack.c.b16 %v1853, %v1852
        %v1868 = vpack.c.b16 %v1855, %v1854
        %v1869 = vpack.c.b16 %v1857, %v1856
        %v1870 = vpack.c.b16 %v1859, %v1858
        %v1871 = vpack.c.b16 %v1861, %v1860
        %v1872 = vpack.c.b16 %v1863, %v1862
        %v1873 = vpack.c.b16 %v1865, %v1864
        %1882 = vmatprep.subr.bf16.mxu0 0
        %1883 = vmatpush1.bf16.msra.mxu0 %v1873
        %1884 = vmatprep.subr.bf16.mxu0 0
        %1885 = vmatpush1.bf16.msra.mxu0 %v1872
        %1886 = vmatprep.subr.bf16.mxu0 0
        %1887 = vmatpush1.bf16.msra.mxu0 %v1871
        %1888 = vmatprep.subr.bf16.mxu0 0
        %1889 = vmatpush1.bf16.msra.mxu0 %v1870
        %1890 = vmatprep.subr.bf16.mxu0 0
        %1891 = vmatpush1.bf16.msra.mxu0 %v1869
        %1892 = vmatprep.subr.bf16.mxu0 0
        %1893 = vmatpush1.bf16.msra.mxu0 %v1868
        %1894 = vmatprep.subr.bf16.mxu0 0
        %1895 = vmatpush1.bf16.msra.mxu0 %v1867
        %1896 = vmatprep.subr.bf16.mxu0 0
        %1897 = vmatpush1.bf16.msra.mxu0 %v1866
        %1898 = vmatprep.subr.bf16.mxu0 0
        %1899 = vmatpush2.bf16.msra.mxu0 0
        %1900 = vmatprep.subr.bf16.mxu0 0
        %1901 = vmatpush2.bf16.msra.mxu0 0
        %1902 = vmatprep.subr.bf16.mxu0 0
        %1903 = vmatpush2.bf16.msra.mxu0 0
        %1904 = vmatprep.subr.bf16.mxu0 0
        %1905 = vmatpush2.bf16.msra.mxu0 0
        %1906 = vmatprep.subr.bf16.mxu0 0
        %1907 = vmatpush2.bf16.msra.mxu0 0
        %1908 = vmatprep.subr.bf16.mxu0 0
        %1909 = vmatpush2.bf16.msra.mxu0 0
        %1910 = vmatprep.subr.bf16.mxu0 0
        %1911 = vmatpush2.bf16.msra.mxu0 0
        %1912 = vmatprep.subr.bf16.mxu0 0
        %1913 = vmatpush2.bf16.msra.mxu0 0
        %1914 = vmatprep.mubr.bf16.mxu0 0
        %1915 = vmatmul.mubr.bf16.gmra.mxu0 %v1813
        %v1916 = vpop.f32.mrf.mxu0
        %v1917 = vadd.f32 %v1833, %v1916
        %v1918 = vpop.f32.mrf.mxu0
        %v1919 = vpop.f32.mrf.mxu0
        %v1920 = vadd.f32 %v1833, %v1919
        %v1921 = vpop.f32.mrf.mxu0
        %1922 = vdwg.mxu0
        %v1923 = vadd.f32 %v601, %v1917
        %v1924 = vadd.f32 %v602, %v1920
        %1925 = vadd.xlane.f32.xlu0 %v1923
        %v1926 = vpop.xlane.xlu0 %1925
        %1927 = vadd.xlane.f32.xlu0 %v1924
        %v1928 = vpop.xlane.xlu0 %1927
        %v1929 = vrcp.pop 128.0
        %v1930 = vmul.f32 %v1926, %v1929
        %v1931 = vmul.f32 %v1928, %v1929
        %v1932 = vsub.f32 %v1923, %v1930
        %v1933 = vsub.f32 %v1924, %v1931
        %v1934 = vmul.f32 %v1932, %v1932
        %v1935 = vmul.f32 %v1933, %v1933
        %1936 = vadd.xlane.f32.xlu0 %v1934
        %v1937 = vpop.xlane.xlu0 %1936
        %1938 = vadd.xlane.f32.xlu0 %v1935
        %v1939 = vpop.xlane.xlu0 %1938
        %v1940 = vmul.f32 %v1937, %v1929
        %v1941 = vmul.f32 %v1939, %v1929
        %v1942 = vadd.f32 %v1940, 1e-12
        %v1943 = vadd.f32 %v1941, 1e-12
        %v1944 = vrsqrt.pop %v1942
        %v1945 = vrsqrt.pop %v1943
        %v1946 = vmul.f32 %v1932, %v1944
        %v1947 = vmul.f32 %v1933, %v1945
        %v1948 = vlaneseq
        %v1949 = vshrl.u32 %v1948, 7
        %v1950 = vsub.s32 4, %v1949
        %v1951 = vrot.slane %v606, %v1950
        %v1952 = vmul.f32 %v1946, %v1951
        %v1953 = vmul.f32 %v1947, %v1951
        %v1954 = vlaneseq
        %v1955 = vshrl.u32 %v1954, 7
        %v1956 = vsub.s32 5, %v1955
        %v1957 = vrot.slane %v606, %v1956
        %v1958 = vadd.f32 %v1952, %v1957
        %v1959 = vadd.f32 %v1953, %v1957
        %v1960 = vpack.c.bf16 %v1959, %v1958
        %v1961 = vld [vmem:[%s498] sm:$0xff]
        %v1962 = vld [vmem:[%s498 + $0x8] sm:$0xff]
        %v1963 = vld [vmem:[%s498 + $0x10] sm:$0xff]
        %v1964 = vld [vmem:[%s498 + $0x18] sm:$0xff]
        %v1965 = vld [vmem:[%s498 + $0x20] sm:$0xff]
        %v1966 = vld [vmem:[%s498 + $0x28] sm:$0xff]
        %v1967 = vld [vmem:[%s498 + $0x30] sm:$0xff]
        %v1968 = vld [vmem:[%s498 + $0x38] sm:$0xff]
        %v1969 = vld [vmem:[%s498 + $0x40] sm:$0xff]
        %v1970 = vld [vmem:[%s498 + $0x48] sm:$0xff]
        %v1971 = vld [vmem:[%s498 + $0x50] sm:$0xff]
        %v1972 = vld [vmem:[%s498 + $0x58] sm:$0xff]
        %v1973 = vld [vmem:[%s498 + $0x60] sm:$0xff]
        %v1974 = vld [vmem:[%s498 + $0x68] sm:$0xff]
        %v1975 = vld [vmem:[%s498 + $0x70] sm:$0xff]
        %v1976 = vld [vmem:[%s498 + $0x78] sm:$0xff]
        %v1977 = vld [vmem:[%s581] sm:$0x3]
        %v1979 = vlaneseq
        %v1980 = vshrl.u32 %v1979, 7
        %v1981 = vsub.s32 0, %v1980
        %v1982 = vrot.slane %v1977, %v1981
        %v1983 = vlaneseq
        %v1984 = vshrl.u32 %v1983, 7
        %v1985 = vsub.s32 1, %v1984
        %v1986 = vrot.slane %v1977, %v1985
        %v2005 = vunpack.c.l.b16 %v1961
        %v2006 = vunpack.c.h.b16 %v1961
        %v2007 = vunpack.c.l.b16 %v1962
        %v2008 = vunpack.c.h.b16 %v1962
        %v2009 = vunpack.c.l.b16 %v1963
        %v2010 = vunpack.c.h.b16 %v1963
        %v2011 = vunpack.c.l.b16 %v1964
        %v2012 = vunpack.c.h.b16 %v1964
        %v2013 = vunpack.c.l.b16 %v1965
        %v2014 = vunpack.c.h.b16 %v1965
        %v2015 = vunpack.c.l.b16 %v1966
        %v2016 = vunpack.c.h.b16 %v1966
        %v2017 = vunpack.c.l.b16 %v1967
        %v2018 = vunpack.c.h.b16 %v1967
        %v2019 = vunpack.c.l.b16 %v1968
        %v2020 = vunpack.c.h.b16 %v1968
        %v2021 = vunpack.c.l.b16 %v1969
        %v2022 = vunpack.c.h.b16 %v1969
        %v2023 = vunpack.c.l.b16 %v1970
        %v2024 = vunpack.c.h.b16 %v1970
        %v2025 = vunpack.c.l.b16 %v1971
        %v2026 = vunpack.c.h.b16 %v1971
        %v2027 = vunpack.c.l.b16 %v1972
        %v2028 = vunpack.c.h.b16 %v1972
        %v2029 = vunpack.c.l.b16 %v1973
        %v2030 = vunpack.c.h.b16 %v1973
        %v2031 = vunpack.c.l.b16 %v1974
        %v2032 = vunpack.c.h.b16 %v1974
        %v2033 = vunpack.c.l.b16 %v1975
        %v2034 = vunpack.c.h.b16 %v1975
        %v2035 = vunpack.c.l.b16 %v1976
        %v2036 = vunpack.c.h.b16 %v1976
        %v2037 = vpack.c.b16 %v2007, %v2005
        %v2038 = vpack.c.b16 %v2008, %v2006
        %v2039 = vpack.c.b16 %v2011, %v2009
        %v2040 = vpack.c.b16 %v2012, %v2010
        %v2041 = vpack.c.b16 %v2015, %v2013
        %v2042 = vpack.c.b16 %v2016, %v2014
        %v2043 = vpack.c.b16 %v2019, %v2017
        %v2044 = vpack.c.b16 %v2020, %v2018
        %v2045 = vpack.c.b16 %v2023, %v2021
        %v2046 = vpack.c.b16 %v2024, %v2022
        %v2047 = vpack.c.b16 %v2027, %v2025
        %v2048 = vpack.c.b16 %v2028, %v2026
        %v2049 = vpack.c.b16 %v2031, %v2029
        %v2050 = vpack.c.b16 %v2032, %v2030
        %v2051 = vpack.c.b16 %v2035, %v2033
        %v2052 = vpack.c.b16 %v2036, %v2034
        %2069 = vmatprep.subr.bf16.mxu0 %v2052
        %2070 = vmatpush1.bf16.msra.mxu0 %v2051
        %2071 = vmatprep.subr.bf16.mxu0 %v2050
        %2072 = vmatpush1.bf16.msra.mxu0 %v2049
        %2073 = vmatprep.subr.bf16.mxu0 %v2048
        %2074 = vmatpush1.bf16.msra.mxu0 %v2047
        %2075 = vmatprep.subr.bf16.mxu0 %v2046
        %2076 = vmatpush1.bf16.msra.mxu0 %v2045
        %2077 = vmatprep.subr.bf16.mxu0 %v2044
        %2078 = vmatpush1.bf16.msra.mxu0 %v2043
        %2079 = vmatprep.subr.bf16.mxu0 %v2042
        %2080 = vmatpush1.bf16.msra.mxu0 %v2041
        %2081 = vmatprep.subr.bf16.mxu0 %v2040
        %2082 = vmatpush1.bf16.msra.mxu0 %v2039
        %2083 = vmatprep.subr.bf16.mxu0 %v2038
        %2084 = vmatpush1.bf16.msra.mxu0 %v2037
        %2085 = vmatprep.subr.bf16.mxu0 0
        %2086 = vmatpush2.bf16.msra.mxu0 0
        %2087 = vmatprep.subr.bf16.mxu0 0
        %2088 = vmatpush2.bf16.msra.mxu0 0
        %2089 = vmatprep.subr.bf16.mxu0 0
        %2090 = vmatpush2.bf16.msra.mxu0 0
        %2091 = vmatprep.subr.bf16.mxu0 0
        %2092 = vmatpush2.bf16.msra.mxu0 0
        %2093 = vmatprep.subr.bf16.mxu0 0
        %2094 = vmatpush2.bf16.msra.mxu0 0
        %2095 = vmatprep.subr.bf16.mxu0 0
        %2096 = vmatpush2.bf16.msra.mxu0 0
        %2097 = vmatprep.subr.bf16.mxu0 0
        %2098 = vmatpush2.bf16.msra.mxu0 0
        %2099 = vmatprep.subr.bf16.mxu0 0
        %2100 = vmatpush2.bf16.msra.mxu0 0
        %2101 = vmatprep.mubr.bf16.mxu0 0
        %2102 = vmatmul.mubr.bf16.gmra.mxu0 %v1960
        %v2103 = vpop.f32.mrf.mxu0
        %v2104 = vadd.f32 %v1982, %v2103
        %v2105 = vpop.f32.mrf.mxu0
        %v2106 = vadd.f32 %v1986, %v2105
        %v2107 = vpop.f32.mrf.mxu0
        %v2108 = vadd.f32 %v1982, %v2107
        %v2109 = vpop.f32.mrf.mxu0
        %v2110 = vadd.f32 %v1986, %v2109
        %2111 = vdwg.mxu0
        %v2112 = vmul.f32 %v2104, 0.70710677
        %v2113 = vmul.f32 %v2106, 0.70710677
        %v2114 = vmul.f32 %v2108, 0.70710677
        %v2115 = vmul.f32 %v2110, 0.70710677
        %v2116 = vand.u32 2147483647, %v2112
        %v2117 = vand.u32 2147483647, %v2113
        %v2118 = vand.u32 2147483647, %v2114
        %v2119 = vand.u32 2147483647, %v2115
        %v2120 = vmul.f32 %v2116, 0.3275911
        %v2121 = vmul.f32 %v2117, 0.3275911
        %v2122 = vmul.f32 %v2118, 0.3275911
        %v2123 = vmul.f32 %v2119, 0.3275911
        %v2124 = vadd.f32 %v2120, 1.0
        %v2125 = vadd.f32 %v2121, 1.0
        %v2126 = vadd.f32 %v2122, 1.0
        %v2127 = vadd.f32 %v2123, 1.0
        %v2128 = vrcp.pop %v2124
        %v2129 = vmul.f32 1.0, %v2128
        %v2130 = vrcp.pop %v2125
        %v2131 = vmul.f32 1.0, %v2130
        %v2132 = vrcp.pop %v2126
        %v2133 = vmul.f32 1.0, %v2132
        %v2134 = vrcp.pop %v2127
        %v2135 = vmul.f32 1.0, %v2134
        %v2136 = vmul.f32 %v2129, 1.0614054
        %v2137 = vmul.f32 %v2131, 1.0614054
        %v2138 = vmul.f32 %v2133, 1.0614054
        %v2139 = vmul.f32 %v2135, 1.0614054
        %v2140 = vadd.f32 %v2136, -1.4531521
        %v2141 = vadd.f32 %v2137, -1.4531521
        %v2142 = vadd.f32 %v2138, -1.4531521
        %v2143 = vadd.f32 %v2139, -1.4531521
        %v2144 = vmul.f32 %v2140, %v2129
        %v2145 = vmul.f32 %v2141, %v2131
        %v2146 = vmul.f32 %v2142, %v2133
        %v2147 = vmul.f32 %v2143, %v2135
        %v2148 = vadd.f32 %v2144, 1.4214138
        %v2149 = vadd.f32 %v2145, 1.4214138
        %v2150 = vadd.f32 %v2146, 1.4214138
        %v2151 = vadd.f32 %v2147, 1.4214138
        %v2152 = vmul.f32 %v2148, %v2129
        %v2153 = vmul.f32 %v2149, %v2131
        %v2154 = vmul.f32 %v2150, %v2133
        %v2155 = vmul.f32 %v2151, %v2135
        %v2156 = vadd.f32 %v2152, -0.28449672
        %v2157 = vadd.f32 %v2153, -0.28449672
        %v2158 = vadd.f32 %v2154, -0.28449672
        %v2159 = vadd.f32 %v2155, -0.28449672
        %v2160 = vmul.f32 %v2156, %v2129
        %v2161 = vmul.f32 %v2157, %v2131
        %v2162 = vmul.f32 %v2158, %v2133
        %v2163 = vmul.f32 %v2159, %v2135
        %v2164 = vadd.f32 %v2160, 0.2548296
        %v2165 = vadd.f32 %v2161, 0.2548296
        %v2166 = vadd.f32 %v2162, 0.2548296
        %v2167 = vadd.f32 %v2163, 0.2548296
        %v2168 = vmul.f32 %v2164, %v2129
        %v2169 = vmul.f32 %v2165, %v2131
        %v2170 = vmul.f32 %v2166, %v2133
        %v2171 = vmul.f32 %v2167, %v2135
        %v2172 = vsub.f32 0.0, %v2116
        %v2173 = vsub.f32 0.0, %v2117
        %v2174 = vsub.f32 0.0, %v2118
        %v2175 = vsub.f32 0.0, %v2119
        %v2176 = vmul.f32 %v2172, %v2116
        %v2177 = vmul.f32 %v2173, %v2117
        %v2178 = vmul.f32 %v2174, %v2118
        %v2179 = vmul.f32 %v2175, %v2119
        %v2180 = vmul.f32 %v2176, 1.442695
        %v2181 = vpow.pop %v2180
        %v2182 = vmul.f32 %v2177, 1.442695
        %v2183 = vpow.pop %v2182
        %v2184 = vmul.f32 %v2178, 1.442695
        %v2185 = vpow.pop %v2184
        %v2186 = vmul.f32 %v2179, 1.442695
        %v2187 = vpow.pop %v2186
        %v2188 = vmul.f32 %v2168, %v2181
        %v2189 = vmul.f32 %v2169, %v2183
        %v2190 = vmul.f32 %v2170, %v2185
        %v2191 = vmul.f32 %v2171, %v2187
        %v2192 = vsub.f32 1.0, %v2188
        %v2193 = vsub.f32 1.0, %v2189
        %v2194 = vsub.f32 1.0, %v2190
        %v2195 = vsub.f32 1.0, %v2191
        %vm2196 = vcmp.ge.f32.partialorder %v2112, 0.0
        %vm2197 = vcmp.ge.f32.partialorder %v2113, 0.0
        %vm2198 = vcmp.ge.f32.partialorder %v2114, 0.0
        %vm2199 = vcmp.ge.f32.partialorder %v2115, 0.0
        %v2200 = vsub.f32 0.0, %v2192
        %v2201 = vsub.f32 0.0, %v2193
        %v2202 = vsub.f32 0.0, %v2194
        %v2203 = vsub.f32 0.0, %v2195
        %v2204 = vsel %vm2196, %v2192, %v2200
        %v2205 = vsel %vm2197, %v2193, %v2201
        %v2206 = vsel %vm2198, %v2194, %v2202
        %v2207 = vsel %vm2199, %v2195, %v2203
        %v2208 = vmul.f32 %v2104, 0.5
        %v2209 = vmul.f32 %v2106, 0.5
        %v2210 = vmul.f32 %v2108, 0.5
        %v2211 = vmul.f32 %v2110, 0.5
        %v2212 = vadd.f32 %v2204, 1.0
        %v2213 = vadd.f32 %v2205, 1.0
        %v2214 = vadd.f32 %v2206, 1.0
        %v2215 = vadd.f32 %v2207, 1.0
        %v2216 = vmul.f32 %v2208, %v2212
        %v2217 = vmul.f32 %v2209, %v2213
        %v2218 = vmul.f32 %v2210, %v2214
        %v2219 = vmul.f32 %v2211, %v2215
        %v2220 = vpack.c.bf16 %v2218, %v2216
        %v2221 = vpack.c.bf16 %v2219, %v2217
        %v2222 = vld [vmem:[%s507] sm:$0xf]
        %v2223 = vld [vmem:[%s507 + $0x4] sm:$0xf]
        %v2224 = vld [vmem:[%s507 + $0x8] sm:$0xf]
        %v2225 = vld [vmem:[%s507 + $0xc] sm:$0xf]
        %v2226 = vld [vmem:[%s507 + $0x10] sm:$0xf]
        %v2227 = vld [vmem:[%s507 + $0x14] sm:$0xf]
        %v2228 = vld [vmem:[%s507 + $0x18] sm:$0xf]
        %v2229 = vld [vmem:[%s507 + $0x1c] sm:$0xf]
        %v2230 = vld [vmem:[%s507 + $0x20] sm:$0xf]
        %v2231 = vld [vmem:[%s507 + $0x24] sm:$0xf]
        %v2232 = vld [vmem:[%s507 + $0x28] sm:$0xf]
        %v2233 = vld [vmem:[%s507 + $0x2c] sm:$0xf]
        %v2234 = vld [vmem:[%s507 + $0x30] sm:$0xf]
        %v2235 = vld [vmem:[%s507 + $0x34] sm:$0xf]
        %v2236 = vld [vmem:[%s507 + $0x38] sm:$0xf]
        %v2237 = vld [vmem:[%s507 + $0x3c] sm:$0xf]
        %v2238 = vld [vmem:[%s507 + $0x40] sm:$0xf]
        %v2239 = vld [vmem:[%s507 + $0x44] sm:$0xf]
        %v2240 = vld [vmem:[%s507 + $0x48] sm:$0xf]
        %v2241 = vld [vmem:[%s507 + $0x4c] sm:$0xf]
        %v2242 = vld [vmem:[%s507 + $0x50] sm:$0xf]
        %v2243 = vld [vmem:[%s507 + $0x54] sm:$0xf]
        %v2244 = vld [vmem:[%s507 + $0x58] sm:$0xf]
        %v2245 = vld [vmem:[%s507 + $0x5c] sm:$0xf]
        %v2246 = vld [vmem:[%s507 + $0x60] sm:$0xf]
        %v2247 = vld [vmem:[%s507 + $0x64] sm:$0xf]
        %v2248 = vld [vmem:[%s507 + $0x68] sm:$0xf]
        %v2249 = vld [vmem:[%s507 + $0x6c] sm:$0xf]
        %v2250 = vld [vmem:[%s507 + $0x70] sm:$0xf]
        %v2251 = vld [vmem:[%s507 + $0x74] sm:$0xf]
        %v2252 = vld [vmem:[%s507 + $0x78] sm:$0xf]
        %v2253 = vld [vmem:[%s507 + $0x7c] sm:$0xf]
        %v2254 = vlaneseq
        %v2255 = vshrl.u32 %v2254, 7
        %v2256 = vsub.s32 6, %v2255
        %v2257 = vrot.slane %v606, %v2256
        %v2290 = vunpack.c.l.b16 %v2222
        %v2291 = vunpack.c.l.b16 %v2223
        %v2292 = vunpack.c.l.b16 %v2224
        %v2293 = vunpack.c.l.b16 %v2225
        %v2294 = vunpack.c.l.b16 %v2226
        %v2295 = vunpack.c.l.b16 %v2227
        %v2296 = vunpack.c.l.b16 %v2228
        %v2297 = vunpack.c.l.b16 %v2229
        %v2298 = vunpack.c.l.b16 %v2230
        %v2299 = vunpack.c.l.b16 %v2231
        %v2300 = vunpack.c.l.b16 %v2232
        %v2301 = vunpack.c.l.b16 %v2233
        %v2302 = vunpack.c.l.b16 %v2234
        %v2303 = vunpack.c.l.b16 %v2235
        %v2304 = vunpack.c.l.b16 %v2236
        %v2305 = vunpack.c.l.b16 %v2237
        %v2306 = vunpack.c.l.b16 %v2238
        %v2307 = vunpack.c.l.b16 %v2239
        %v2308 = vunpack.c.l.b16 %v2240
        %v2309 = vunpack.c.l.b16 %v2241
        %v2310 = vunpack.c.l.b16 %v2242
        %v2311 = vunpack.c.l.b16 %v2243
        %v2312 = vunpack.c.l.b16 %v2244
        %v2313 = vunpack.c.l.b16 %v2245
        %v2314 = vunpack.c.l.b16 %v2246
        %v2315 = vunpack.c.l.b16 %v2247
        %v2316 = vunpack.c.l.b16 %v2248
        %v2317 = vunpack.c.l.b16 %v2249
        %v2318 = vunpack.c.l.b16 %v2250
        %v2319 = vunpack.c.l.b16 %v2251
        %v2320 = vunpack.c.l.b16 %v2252
        %v2321 = vunpack.c.l.b16 %v2253
        %v2322 = vpack.c.b16 %v2291, %v2290
        %v2323 = vpack.c.b16 %v2293, %v2292
        %v2324 = vpack.c.b16 %v2295, %v2294
        %v2325 = vpack.c.b16 %v2297, %v2296
        %v2326 = vpack.c.b16 %v2299, %v2298
        %v2327 = vpack.c.b16 %v2301, %v2300
        %v2328 = vpack.c.b16 %v2303, %v2302
        %v2329 = vpack.c.b16 %v2305, %v2304
        %v2330 = vpack.c.b16 %v2307, %v2306
        %v2331 = vpack.c.b16 %v2309, %v2308
        %v2332 = vpack.c.b16 %v2311, %v2310
        %v2333 = vpack.c.b16 %v2313, %v2312
        %v2334 = vpack.c.b16 %v2315, %v2314
        %v2335 = vpack.c.b16 %v2317, %v2316
        %v2336 = vpack.c.b16 %v2319, %v2318
        %v2337 = vpack.c.b16 %v2321, %v2320
        %2354 = vmatprep.subr.bf16.mxu0 0
        %2355 = vmatpush1.bf16.msra.mxu0 %v2329
        %2356 = vmatprep.subr.bf16.mxu0 0
        %2357 = vmatpush1.bf16.msra.mxu0 %v2328
        %2358 = vmatprep.subr.bf16.mxu0 0
        %2359 = vmatpush1.bf16.msra.mxu0 %v2327
        %2360 = vmatprep.subr.bf16.mxu0 0
        %2361 = vmatpush1.bf16.msra.mxu0 %v2326
        %2362 = vmatprep.subr.bf16.mxu0 0
        %2363 = vmatpush1.bf16.msra.mxu0 %v2325
        %2364 = vmatprep.subr.bf16.mxu0 0
        %2365 = vmatpush1.bf16.msra.mxu0 %v2324
        %2366 = vmatprep.subr.bf16.mxu0 0
        %2367 = vmatpush1.bf16.msra.mxu0 %v2323
        %2368 = vmatprep.subr.bf16.mxu0 0
        %2369 = vmatpush1.bf16.msra.mxu0 %v2322
        %2370 = vmatprep.subr.bf16.mxu0 0
        %2371 = vmatpush2.bf16.msra.mxu0 %v2337
        %2372 = vmatprep.subr.bf16.mxu0 0
        %2373 = vmatpush2.bf16.msra.mxu0 %v2336
        %2374 = vmatprep.subr.bf16.mxu0 0
        %2375 = vmatpush2.bf16.msra.mxu0 %v2335
        %2376 = vmatprep.subr.bf16.mxu0 0
        %2377 = vmatpush2.bf16.msra.mxu0 %v2334
        %2378 = vmatprep.subr.bf16.mxu0 0
        %2379 = vmatpush2.bf16.msra.mxu0 %v2333
        %2380 = vmatprep.subr.bf16.mxu0 0
        %2381 = vmatpush2.bf16.msra.mxu0 %v2332
        %2382 = vmatprep.subr.bf16.mxu0 0
        %2383 = vmatpush2.bf16.msra.mxu0 %v2331
        %2384 = vmatprep.subr.bf16.mxu0 0
        %2385 = vmatpush2.bf16.msra.mxu0 %v2330
        %2386 = vmatprep.mubr.bf16.mxu0 %v2221
        %2387 = vmatmul.mubr.bf16.gmra.mxu0 %v2220
        %v2388 = vpop.f32.mrf.mxu0
        %v2389 = vadd.f32 %v2257, %v2388
        %v2390 = vpop.f32.mrf.mxu0
        %v2391 = vpop.f32.mrf.mxu0
        %v2392 = vadd.f32 %v2257, %v2391
        %v2393 = vpop.f32.mrf.mxu0
        %2394 = vdwg.mxu0
        %v2395 = vadd.f32 %v1958, %v2389
        %v2396 = vadd.f32 %v1959, %v2392
        %2397 = vadd.xlane.f32.xlu0 %v2395
        %v2398 = vpop.xlane.xlu0 %2397
        %2399 = vadd.xlane.f32.xlu0 %v2396
        %v2400 = vpop.xlane.xlu0 %2399
        %v2401 = vmul.f32 %v2398, %v1929
        %v2402 = vmul.f32 %v2400, %v1929
        %v2403 = vsub.f32 %v2395, %v2401
        %v2404 = vsub.f32 %v2396, %v2402
        %v2405 = vmul.f32 %v2403, %v2403
        %v2406 = vmul.f32 %v2404, %v2404
        %2407 = vadd.xlane.f32.xlu0 %v2405
        %v2408 = vpop.xlane.xlu0 %2407
        %2409 = vadd.xlane.f32.xlu0 %v2406
        %v2410 = vpop.xlane.xlu0 %2409
        %v2411 = vmul.f32 %v2408, %v1929
        %v2412 = vmul.f32 %v2410, %v1929
        %v2413 = vadd.f32 %v2411, 1e-12
        %v2414 = vadd.f32 %v2412, 1e-12
        %v2415 = vrsqrt.pop %v2413
        %v2416 = vrsqrt.pop %v2414
        %v2417 = vmul.f32 %v2403, %v2415
        %v2418 = vmul.f32 %v2404, %v2416
        %v2419 = vlaneseq
        %v2420 = vshrl.u32 %v2419, 7
        %v2421 = vsub.s32 7, %v2420
        %v2422 = vrot.slane %v606, %v2421
        %v2423 = vmul.f32 %v2417, %v2422
        %v2424 = vmul.f32 %v2418, %v2422
        %v2425 = vlaneseq
        %v2426 = vshrl.u32 %v2425, 7
        %v2427 = vsub.s32 0, %v2426
        %v2428 = vrot.slane %v607, %v2427
        %v2429 = vadd.f32 %v2423, %v2428
        %v2430 = vadd.f32 %v2424, %v2428
        %2431 = vst [vmem:[#allocation2] sm:$0xff] %v2429
        %2432 = vst [vmem:[#allocation2 + $0x8] sm:$0xff] %v2430
        %p2433 = scmp.eq.s32.totalorder %s36, 1
        // Predicated region
        $region97: #{tpu_custom_call.1} parent=63 // pred_check
          %p2434 = pneg %p2433
        $region98: #{tpu_custom_call.1} parent=63 // pred_check_branch
          %2436 = sbr.rel (%p2434) target = $region100
        $region99: #{tpu_custom_call.1} parent=63 // pred_region
          %v2437 = vpack.c.bf16 %v2429, %v2429
          %v2438 = vpack.c.bf16 %v2430, %v2430
          %v2439 = vld [vmem:[#allocation14] sm:$0xff]
          %v2440 = vld [vmem:[#allocation14 + $0x8] sm:$0xff]
          %v2441 = vld [vmem:[#allocation14 + $0x10] sm:$0xff]
          %v2442 = vld [vmem:[#allocation14 + $0x18] sm:$0xff]
          %v2443 = vld [vmem:[#allocation14 + $0x20] sm:$0xff]
          %v2444 = vld [vmem:[#allocation14 + $0x28] sm:$0xff]
          %v2445 = vld [vmem:[#allocation14 + $0x30] sm:$0xff]
          %v2446 = vld [vmem:[#allocation14 + $0x38] sm:$0xff]
          %v2447 = vld [vmem:[#allocation14 + $0x40] sm:$0xff]
          %v2448 = vld [vmem:[#allocation14 + $0x48] sm:$0xff]
          %v2449 = vld [vmem:[#allocation14 + $0x50] sm:$0xff]
          %v2450 = vld [vmem:[#allocation14 + $0x58] sm:$0xff]
          %v2451 = vld [vmem:[#allocation14 + $0x60] sm:$0xff]
          %v2452 = vld [vmem:[#allocation14 + $0x68] sm:$0xff]
          %v2453 = vld [vmem:[#allocation14 + $0x70] sm:$0xff]
          %v2454 = vld [vmem:[#allocation14 + $0x78] sm:$0xff]
          %v2455 = vld [vmem:[%s9] sm:$0x3]
          %v2457 = vlaneseq
          %v2458 = vshrl.u32 %v2457, 7
          %v2459 = vsub.s32 0, %v2458
          %v2460 = vrot.slane %v2455, %v2459
          %v2461 = vlaneseq
          %v2462 = vshrl.u32 %v2461, 7
          %v2463 = vsub.s32 1, %v2462
          %v2464 = vrot.slane %v2455, %v2463
          %v2469 = vunpack.c.l.b16 %v2437
          %v2470 = vunpack.c.l.b16 %v2438
          %v2471 = vrot.slane %v2470, 7
          %vm2472 = vcmask 1041409
          %v2473 = vsel %vm2472, %v2471, %v2469
          %v2474 = vpack.c.b16 %v2473, %v2473
          %v2492 = vunpack.c.l.b16 %v2439
          %v2493 = vunpack.c.h.b16 %v2439
          %v2494 = vunpack.c.l.b16 %v2440
          %v2495 = vunpack.c.h.b16 %v2440
          %v2496 = vunpack.c.l.b16 %v2441
          %v2497 = vunpack.c.h.b16 %v2441
          %v2498 = vunpack.c.l.b16 %v2442
          %v2499 = vunpack.c.h.b16 %v2442
          %v2500 = vunpack.c.l.b16 %v2443
          %v2501 = vunpack.c.h.b16 %v2443
          %v2502 = vunpack.c.l.b16 %v2444
          %v2503 = vunpack.c.h.b16 %v2444
          %v2504 = vunpack.c.l.b16 %v2445
          %v2505 = vunpack.c.h.b16 %v2445
          %v2506 = vunpack.c.l.b16 %v2446
          %v2507 = vunpack.c.h.b16 %v2446
          %v2508 = vunpack.c.l.b16 %v2447
          %v2509 = vunpack.c.h.b16 %v2447
          %v2510 = vunpack.c.l.b16 %v2448
          %v2511 = vunpack.c.h.b16 %v2448
          %v2512 = vunpack.c.l.b16 %v2449
          %v2513 = vunpack.c.h.b16 %v2449
          %v2514 = vunpack.c.l.b16 %v2450
          %v2515 = vunpack.c.h.b16 %v2450
          %v2516 = vunpack.c.l.b16 %v2451
          %v2517 = vunpack.c.h.b16 %v2451
          %v2518 = vunpack.c.l.b16 %v2452
          %v2519 = vunpack.c.h.b16 %v2452
          %v2520 = vunpack.c.l.b16 %v2453
          %v2521 = vunpack.c.h.b16 %v2453
          %v2522 = vunpack.c.l.b16 %v2454
          %v2523 = vunpack.c.h.b16 %v2454
          %v2524 = vpack.c.b16 %v2494, %v2492
          %v2525 = vpack.c.b16 %v2495, %v2493
          %v2526 = vpack.c.b16 %v2498, %v2496
          %v2527 = vpack.c.b16 %v2499, %v2497
          %v2528 = vpack.c.b16 %v2502, %v2500
          %v2529 = vpack.c.b16 %v2503, %v2501
          %v2530 = vpack.c.b16 %v2506, %v2504
          %v2531 = vpack.c.b16 %v2507, %v2505
          %v2532 = vpack.c.b16 %v2510, %v2508
          %v2533 = vpack.c.b16 %v2511, %v2509
          %v2534 = vpack.c.b16 %v2514, %v2512
          %v2535 = vpack.c.b16 %v2515, %v2513
          %v2536 = vpack.c.b16 %v2518, %v2516
          %v2537 = vpack.c.b16 %v2519, %v2517
          %v2538 = vpack.c.b16 %v2522, %v2520
          %v2539 = vpack.c.b16 %v2523, %v2521
          %2556 = vmatprep.subr.bf16.mxu0 %v2539
          %2557 = vmatpush1.bf16.msra.mxu0 %v2538
          %2558 = vmatprep.subr.bf16.mxu0 %v2537
          %2559 = vmatpush1.bf16.msra.mxu0 %v2536
          %2560 = vmatprep.subr.bf16.mxu0 %v2535
          %2561 = vmatpush1.bf16.msra.mxu0 %v2534
          %2562 = vmatprep.subr.bf16.mxu0 %v2533
          %2563 = vmatpush1.bf16.msra.mxu0 %v2532
          %2564 = vmatprep.subr.bf16.mxu0 %v2531
          %2565 = vmatpush1.bf16.msra.mxu0 %v2530
          %2566 = vmatprep.subr.bf16.mxu0 %v2529
          %2567 = vmatpush1.bf16.msra.mxu0 %v2528
          %2568 = vmatprep.subr.bf16.mxu0 %v2527
          %2569 = vmatpush1.bf16.msra.mxu0 %v2526
          %2570 = vmatprep.subr.bf16.mxu0 %v2525
          %2571 = vmatpush1.bf16.msra.mxu0 %v2524
          %2572 = vmatprep.subr.bf16.mxu0 0
          %2573 = vmatpush2.bf16.msra.mxu0 0
          %2574 = vmatprep.subr.bf16.mxu0 0
          %2575 = vmatpush2.bf16.msra.mxu0 0
          %2576 = vmatprep.subr.bf16.mxu0 0
          %2577 = vmatpush2.bf16.msra.mxu0 0
          %2578 = vmatprep.subr.bf16.mxu0 0
          %2579 = vmatpush2.bf16.msra.mxu0 0
          %2580 = vmatprep.subr.bf16.mxu0 0
          %2581 = vmatpush2.bf16.msra.mxu0 0
          %2582 = vmatprep.subr.bf16.mxu0 0
          %2583 = vmatpush2.bf16.msra.mxu0 0
          %2584 = vmatprep.subr.bf16.mxu0 0
          %2585 = vmatpush2.bf16.msra.mxu0 0
          %2586 = vmatprep.subr.bf16.mxu0 0
          %2587 = vmatpush2.bf16.msra.mxu0 0
          %2588 = vmatprep.mubr.bf16.mxu0 0
          %2589 = vmatmul.mubr.bf16.gmra.mxu0 %v2474
          %v2590 = vpop.f32.mrf.mxu0
          %v2591 = vadd.f32 %v2460, %v2590
          %v2592 = vpop.f32.mrf.mxu0
          %v2593 = vadd.f32 %v2464, %v2592
          %v2594 = vpop.f32.mrf.mxu0
          %v2595 = vpop.f32.mrf.mxu0
          %2596 = vdwg.mxu0
          %v2597 = vmax.f32 %v2591, 0.0
          %v2598 = vmax.f32 %v2593, 0.0
          %v2599 = vld [vmem:[%s10] sm:$0x3]
          %v2601 = vlaneseq
          %v2602 = vshrl.u32 %v2601, 7
          %v2603 = vsub.s32 0, %v2602
          %v2604 = vrot.slane %v2599, %v2603
          %v2605 = vlaneseq
          %v2606 = vshrl.u32 %v2605, 7
          %v2607 = vsub.s32 1, %v2606
          %v2608 = vrot.slane %v2599, %v2607
          %v2611 = vmul.f32 %v2597, %v2604
          %v2612 = vmul.f32 %v2598, %v2608
          %vm2613 = vcmask 1041408
          %v2614 = vsel %vm2613, %v2611, 0.0
          %v2615 = vsel %vm2613, %v2612, 0.0
          %v2616 = vadd.f32 %v2614, %v2615
          %2617 = vadd.xlane.f32.xlu0 %v2616
          %v2618 = vpop.xlane.xlu0 %2617
          %v2619 = vld [vmem:[#allocation4] sm:$0x1]
          %v2621 = vlaneseq
          %v2622 = vshrl.u32 %v2621, 7
          %v2623 = vsub.s32 0, %v2622
          %v2624 = vrot.slane %v2619, %v2623
          %v2626 = vadd.f32 %v2618, %v2624
          %v2627 = vxor.u32 %v2626, 2147483648
          %v2628 = vmul.f32 %v2627, 1.442695
          %v2629 = vpow.pop %v2628
          %v2630 = vadd.f32 %v2629, 1.0
          %v2631 = vrcp.pop %v2630
          %v2632 = vmul.f32 1.0, %v2631
          %2634 = vset.pattern.permute.xlu0 0
          %2635 = vperm.xlu0 %2634, %v2632
          %v2636 = vpop.permute.xlu0 %2635
          %2638 = vst [vmem:[#allocation16] sm:$0x3] %v2636
        $region100: #{tpu_custom_call.1} parent=63 // pred_fallthru
          _
        // Predicated region
        $region101: #{tpu_custom_call.1} parent=63 // pred_check
          %p2639 = pneg %p310
        $region102: #{tpu_custom_call.1} parent=63 // pred_check_branch
          %2641 = sbr.rel (%p2639) target = $region104
        $region103: #{tpu_custom_call.1} parent=63 // pred_region
          %s2643 = ssub.s32 32, 32
          %2644 = vsyncadd [#allocation7], %s2643
          %s2646 = sshll.u32 [#allocation16], 4
          %s2647 = int_to_ptr.vmem [resolvable:$true] %s2646
          %2649 = dma.vmem_to_hbm [thread:$0]  %s2647, 32, %s12, [#allocation7]
        $region104: #{tpu_custom_call.1} parent=63 // pred_fallthru
          _
        // Predicated region
        $region105: #{tpu_custom_call.1} parent=63 // pred_check
          %p2650 = pneg %p310
        $region106: #{tpu_custom_call.1} parent=63 // pred_check_branch
          %2652 = sbr.rel (%p2650) target = $region108
        $region107: #{tpu_custom_call.1} parent=63 // pred_region
          %2653 = dma.done [#allocation7], 32
        $region108: #{tpu_custom_call.1} parent=63 // pred_fallthru
          _
      $region64: #{tpu_custom_call.1} parent=5 // pred_fallthru
        _
      %p2654 = scmp.le.s32.totalorder 2, %s31
      // Predicated region
      $region109: #{tpu_custom_call.1} parent=5 // pred_check
        %p2655 = pneg %p2654
      $region110: #{tpu_custom_call.1} parent=5 // pred_check_branch
        %2657 = sbr.rel (%p2655) target = $region112
      $region111: #{tpu_custom_call.1} parent=5 // pred_region
        %s2658 = ssub.s32 %s31, 2
      $region112: #{tpu_custom_call.1} parent=5 // pred_fallthru
        _
    $region6: #{tpu_custom_call.1} parent=1 // loop_footer
      %s35 = sadd.s32 1, %s31
    $region7: #{tpu_custom_call.1} parent=1 // loop_footer_branch
      %30 = sbr.rel target = $region3
    $region8: #{tpu_custom_call.1} parent=1 // loop_exit
      _
    %2659 = vsyncpa [#allocation6], 1
    %s2660 = scalar_lea.sflag [#allocation6], 1
    %2661 = vsyncpa %s2660, 1
    %2662 = vsyncpa [#allocation9], 1
    %s2663 = scalar_lea.sflag [#allocation9], 1
    %2664 = vsyncpa %s2663, 1
    %2665 = vsyncpa [#allocation12], 1
    %s2666 = scalar_lea.sflag [#allocation12], 1
    %2667 = vsyncpa %s2666, 1
    %2668 = vsyncpa [#allocation15], 1
    %2669 = vsyncpa [#allocation7], 1
    %s2670 = scalar_lea.sflag [#allocation7], 1
    %2671 = vsyncpa %s2670, 1
  %2672 = vsyncmov [#allocation3]
  %s2673 = vpop.sfrf %2672
  %p2674 = scmp.eq.s32.totalorder %s2673, 0
  %p2675 = pneg %p2674
  %2677 = shalt.err (%p2675)

</llo_original>
